<compile_context>
chip_gen: v5e
topology: v5e:2x2
jax: 0.10.0
libtpu: 0.0.40
codegen_flags: <defaults>
</compile_context>

<pallas_src>
import functools

import jax
import jax.numpy as jnp
from jax.experimental import pallas as pl
from jax.experimental.pallas import tpu as pltpu


# ------------------------------ Pallas kernel --------------------------------

def fused_ensemble_kernel(xp_ref, wconv_ref, bconv_ref, whead_ref, bhead_ref,
                          out_ref, *, H, W, Cin, ncls, M, inv_hw, inv_m):
    # xp_ref    : (1, H+2, W+2, Cin)  bf16  zero-padded NHWC input (one sample)
    # wconv_ref : (9, Cin, NPAD)      bf16  per-tap conv weights, all M models on lanes
    # bconv_ref : (1, NPAD)           f32   conv bias (zero in padded lanes)
    # whead_ref : (NPAD, 128)         f32   cols [0:ncls)=averaged cls head,
    #                                        cols [ncls:ncls+M)=per-model conf head, rest 0
    # bhead_ref : (1, 128)            f32
    # out_ref   : (1, 1, 128)         f32   lanes [0:ncls)=avg logits, lane ncls=avg conf
    npad = wconv_ref.shape[-1]

    # 3x3 conv (stride 1, pad 1) as 9 accumulated per-tap matmuls for all M
    # models at once: bf16 MXU, f32 accumulate.  M edge = H*W rows.
    acc = jnp.zeros((H * W, npad), jnp.float32)
    for t in range(9):                                   # static, unrolled
        di, dj = t // 3, t % 3
        tap = xp_ref[0, di:di + H, dj:dj + W, :]          # (H, W, Cin) bf16 window
        tap2 = tap.reshape(H * W, Cin)                    # layout-trivial collapse
        acc = acc + jnp.dot(tap2, wconv_ref[t],
                            preferred_element_type=jnp.float32)

    feat = jnp.maximum(acc + bconv_ref[...], 0.0)        # (HW, NPAD) ReLU features
    pooled = jnp.sum(feat, axis=0, keepdims=True) * inv_hw   # (1, NPAD) global avg pool

    # Both heads of all M models in a single tiny matmul (ensemble-averaged
    # classifier weights already folded in; conf columns per model).
    head = jnp.dot(pooled, whead_ref[...],
                   preferred_element_type=jnp.float32) + bhead_ref[...]   # (1, 128)

    lane = jax.lax.broadcasted_iota(jnp.int32, head.shape, 1)
    sig = jax.nn.sigmoid(head)                            # one EUP sigmoid over a full vreg
    conf = jnp.sum(jnp.where((lane >= ncls) & (lane < ncls + M), sig, 0.0),
                   axis=-1, keepdims=True) * inv_m        # (1, 1) avg confidence

    # Lane-dense merged output: logits in lanes [0:ncls), confidence in lane ncls.
    out = jnp.where(lane < ncls, head, 0.0) + jnp.where(lane == ncls, conf, 0.0)
    out_ref[...] = out.reshape(out_ref.shape)


# -------------------------------- Wrapper -------------------------------------

def ensemble_forward(x_nchw, params):
    """Returns (avg_logits, avg_confidence), matching the PyTorch forward."""
    x_nchw = x_nchw.astype(jnp.float32)
    B, Cin, H, W = x_nchw.shape
    HW = H * W

    conv_w = params["conv_w"]     # (M, 9*Cin, Cfeat)  im2col (tap-major) layout
    conv_b = params["conv_b"]     # (M, 1, Cfeat)
    cls_w = params["cls_w"]       # (M, Cfeat, ncls)
    cls_b = params["cls_b"]       # (M, 1, ncls)
    conf_w = params["conf_w"]     # (M, Cfeat, 1)
    conf_b = params["conf_b"]     # (M, 1, 1)
    M, CKK, Cfeat = conv_w.shape
    ncls = cls_w.shape[-1]
    assert CKK == 9 * Cin

    # ---- pack weights (trace-time glue) --------------------------------------
    NMC = M * Cfeat
    NPAD = ((NMC + 127) // 128) * 128      # lane-dense fused feature width
    OUT_PAD = 128                          # lane-dense merged output width
    assert ncls + M <= OUT_PAD
    inv_m = 1.0 / M

    # conv weights: (M, 9*Cin, Cfeat) -> (9, Cin, M*Cfeat) -> pad lanes -> bf16
    w_conv_all = jnp.transpose(conv_w, (1, 0, 2)).reshape(9, Cin, NMC)
    w_conv_all = jnp.pad(w_conv_all,
                         ((0, 0), (0, 0), (0, NPAD - NMC))).astype(jnp.bfloat16)
    b_conv_all = jnp.pad(conv_b.reshape(1, NMC),
                         ((0, 0), (0, NPAD - NMC))).astype(jnp.float32)
    # NOTE: the padded lanes of b_conv_all / w_head rows must stay exactly zero
    # so the NPAD padding cannot leak into logits/confidence.

    # Head packing: logits average folded in (linear), conf heads kept per model.
    w_head = jnp.zeros((NPAD, OUT_PAD), jnp.float32)
    b_head = jnp.zeros((1, OUT_PAD), jnp.float32)
    for mi in range(M):
        r0 = mi * Cfeat
        w_head = w_head.at[r0:r0 + Cfeat, 0:ncls].set(cls_w[mi] * inv_m)
        w_head = w_head.at[r0:r0 + Cfeat, ncls + mi].set(conf_w[mi, :, 0])
        b_head = b_head.at[0, ncls + mi].set(conf_b[mi, 0, 0])
    b_head = b_head.at[0, 0:ncls].set(jnp.mean(cls_b[:, 0, :], axis=0))

    # ---- input: zero-padded NHWC, bf16 (no im2col blowup) ---------------------
    x_nhwc = jnp.transpose(x_nchw, (0, 2, 3, 1))
    x_pad = jnp.pad(x_nhwc, ((0, 0), (1, 1), (1, 1), (0, 0))).astype(jnp.bfloat16)

    # ---- fused Pallas call -----------------------------------------------------
    kern = functools.partial(fused_ensemble_kernel,
                             H=H, W=W, Cin=Cin, ncls=ncls, M=M,
                             inv_hw=1.0 / HW, inv_m=inv_m)
    out3 = pl.pallas_call(
        kern,
        out_shape=jax.ShapeDtypeStruct((B, 1, OUT_PAD), jnp.float32),
        grid_spec=pltpu.PrefetchScalarGridSpec(
            num_scalar_prefetch=0,
            grid=(B,),                     # one sample per step; parallel axis
            in_specs=[
                pl.BlockSpec((1, H + 2, W + 2, Cin), lambda b: (b, 0, 0, 0)),
                pl.BlockSpec((9, Cin, NPAD), lambda b: (0, 0, 0)),
                pl.BlockSpec((1, NPAD), lambda b: (0, 0)),
                pl.BlockSpec((NPAD, OUT_PAD), lambda b: (0, 0)),
                pl.BlockSpec((1, OUT_PAD), lambda b: (0, 0)),
            ],
            out_specs=pl.BlockSpec((1, 1, OUT_PAD), lambda b: (b, 0, 0)),
        ),
        compiler_params=pltpu.CompilerParams(
            dimension_semantics=("parallel",),
            vmem_limit_bytes=32 * 1024 * 1024),   # above v5e's 16 MiB default, safe on v7x
    )(x_pad, w_conv_all, b_conv_all, w_head, b_head)

    out2 = out3.reshape(B, OUT_PAD)
    return out2[:, :ncls], out2[:, ncls:ncls + 1]


# ---------------------------- Pure-JAX reference ------------------------------

def ensemble_forward_ref(x_nchw, params):
    x = jnp.transpose(x_nchw.astype(jnp.float32), (0, 2, 3, 1))
    B, H, W, Cin = x.shape
    xp = jnp.pad(x, ((0, 0), (1, 1), (1, 1), (0, 0)))
    patch_list = [xp[:, i:i + H, j:j + W, :] for i in range(3) for j in range(3)]
    patches = jnp.stack(patch_list, axis=3).reshape(B * H * W, 9 * Cin)

    logits_list, conf_list = [], []
    M = params["conv_w"].shape[0]
    for m in range(M):
        feat = jnp.maximum(patches @ params["conv_w"][m] + params["conv_b"][m], 0.0)
        pooled = feat.reshape(B, H * W, -1).mean(axis=1)
        logits_list.append(pooled @ params["cls_w"][m] + params["cls_b"][m])
        conf_list.append(jax.nn.sigmoid(pooled @ params["conf_w"][m] + params["conf_b"][m]))
    return (jnp.mean(jnp.stack(logits_list), axis=0),
            jnp.mean(jnp.stack(conf_list), axis=0))


# ----------------------------------- Main -------------------------------------

if __name__ == "__main__":
    # Small, deterministic shapes.
    B, Cin, H, W = 2, 4, 16, 16
    Cfeat, ncls, M = 32, 6, 3     # 3 base models in the ensemble, 6 plum classes

    key = jax.random.PRNGKey(0)
    kx, kw, kb, kcw, kcb, kfw, kfb = jax.random.split(key, 7)

    x = jax.random.normal(kx, (B, Cin, H, W), dtype=jnp.float32)

    params = {
        # conv weights stored directly in im2col (tap-major) layout (9*Cin, Cfeat)
        "conv_w": jax.random.normal(kw, (M, 9 * Cin, Cfeat), jnp.float32) * 0.1,
        "conv_b": jax.random.normal(kb, (M, 1, Cfeat), jnp.float32) * 0.1,
        "cls_w":  jax.random.normal(kcw, (M, Cfeat, ncls), jnp.float32) * 0.1,
        "cls_b":  jax.random.normal(kcb, (M, 1, ncls), jnp.float32) * 0.1,
        "conf_w": jax.random.normal(kfw, (M, Cfeat, 1), jnp.float32) * 0.1,
        "conf_b": jax.random.normal(kfb, (M, 1, 1), jnp.float32) * 0.1,
    }

    avg_logits, avg_conf = jax.block_until_ready(
        jax.jit(ensemble_forward)(x, params))

    ref_logits, ref_conf = ensemble_forward_ref(x, params)
    assert avg_logits.shape == (B, ncls) and avg_conf.shape == (B, 1)
    # bf16 MXU inputs vs fp32 reference -> bf16-level tolerance.
    assert jnp.allclose(avg_logits, ref_logits, rtol=2e-2, atol=2e-2)
    assert jnp.allclose(avg_conf, ref_conf, rtol=2e-2, atol=2e-2)

    print("KERNEL_OK")
</pallas_src>

<mosaic_0001>
module attributes {stable_mosaic.version = 11 : i64} {
  func.func @fused_ensemble_kernel(%arg0: i32, %arg1: memref<1x18x18x4xbf16, #tpu.memory_space<vmem>>, %arg2: memref<9x4x128xbf16, #tpu.memory_space<vmem>>, %arg3: memref<1x128xf32, #tpu.memory_space<vmem>>, %arg4: memref<128x128xf32, #tpu.memory_space<vmem>>, %arg5: memref<1x128xf32, #tpu.memory_space<vmem>>, %arg6: memref<1x1x128xf32, #tpu.memory_space<vmem>>) attributes {dimension_semantics = [#tpu.dimension_semantics<parallel>], iteration_bounds = array<i64: 2>, scalar_prefetch = 0 : i64, scratch_operands = 0 : i64, tpu.core_type = #tpu.core_type<tc>, window_params = [{transform_indices = @transform_0, window_bounds = array<i64: 1, 18, 18, 4>}, {pipeline_mode = #tpu.pipeline_mode<synchronous>, transform_indices = @transform_1, window_bounds = array<i64: 9, 4, 128>}, {pipeline_mode = #tpu.pipeline_mode<synchronous>, transform_indices = @transform_2, window_bounds = array<i64: 1, 128>}, {pipeline_mode = #tpu.pipeline_mode<synchronous>, transform_indices = @transform_3, window_bounds = array<i64: 128, 128>}, {pipeline_mode = #tpu.pipeline_mode<synchronous>, transform_indices = @transform_4, window_bounds = array<i64: 1, 128>}, {transform_indices = @transform_5, window_bounds = array<i64: 1, 1, 128>}]} {
    %cst = arith.constant 0.000000e+00 : f32
    %0 = vector.broadcast %cst : f32 to vector<256x128xf32>
    %c0 = arith.constant 0 : index
    %c0_0 = arith.constant 0 : index
    %c0_1 = arith.constant 0 : index
    %c0_2 = arith.constant 0 : index
    %1 = vector.load %arg1[%c0, %c0_0, %c0_1, %c0_2] : memref<1x18x18x4xbf16, #tpu.memory_space<vmem>>, vector<1x16x16x4xbf16>
    %2 = vector.shape_cast %1 : vector<1x16x16x4xbf16> to vector<16x16x4xbf16>
    %3 = vector.shape_cast %2 : vector<16x16x4xbf16> to vector<256x4xbf16>
    %c0_3 = arith.constant 0 : index
    %c0_4 = arith.constant 0 : index
    %c0_5 = arith.constant 0 : index
    %4 = vector.load %arg2[%c0_3, %c0_4, %c0_5] : memref<9x4x128xbf16, #tpu.memory_space<vmem>>, vector<1x4x128xbf16>
    %5 = vector.shape_cast %4 : vector<1x4x128xbf16> to vector<4x128xbf16>
    %cst_6 = arith.constant dense<0.000000e+00> : vector<256x128xf32>
    %6 = tpu.matmul %3, %5, %cst_6 {dimension_numbers = #tpu.dot_dimension_numbers<[1], [0], [0], [1], [0, 0, 1, 1], [], []>} : vector<256x4xbf16>, vector<4x128xbf16>, vector<256x128xf32> -> vector<256x128xf32>
    %7 = arith.addf %0, %6 : vector<256x128xf32>
    %c0_7 = arith.constant 0 : index
    %c0_8 = arith.constant 0 : index
    %c1 = arith.constant 1 : index
    %c0_9 = arith.constant 0 : index
    %8 = vector.load %arg1[%c0_7, %c0_8, %c1, %c0_9] : memref<1x18x18x4xbf16, #tpu.memory_space<vmem>>, vector<1x16x16x4xbf16>
    %9 = vector.shape_cast %8 : vector<1x16x16x4xbf16> to vector<16x16x4xbf16>
    %10 = vector.shape_cast %9 : vector<16x16x4xbf16> to vector<256x4xbf16>
    %c1_10 = arith.constant 1 : index
    %c0_11 = arith.constant 0 : index
    %c0_12 = arith.constant 0 : index
    %11 = vector.load %arg2[%c1_10, %c0_11, %c0_12] : memref<9x4x128xbf16, #tpu.memory_space<vmem>>, vector<1x4x128xbf16>
    %12 = vector.shape_cast %11 : vector<1x4x128xbf16> to vector<4x128xbf16>
    %cst_13 = arith.constant dense<0.000000e+00> : vector<256x128xf32>
    %13 = tpu.matmul %10, %12, %cst_13 {dimension_numbers = #tpu.dot_dimension_numbers<[1], [0], [0], [1], [0, 0, 1, 1], [], []>} : vector<256x4xbf16>, vector<4x128xbf16>, vector<256x128xf32> -> vector<256x128xf32>
    %14 = arith.addf %7, %13 : vector<256x128xf32>
    %c0_14 = arith.constant 0 : index
    %c0_15 = arith.constant 0 : index
    %c2 = arith.constant 2 : index
    %c0_16 = arith.constant 0 : index
    %15 = vector.load %arg1[%c0_14, %c0_15, %c2, %c0_16] : memref<1x18x18x4xbf16, #tpu.memory_space<vmem>>, vector<1x16x16x4xbf16>
    %16 = vector.shape_cast %15 : vector<1x16x16x4xbf16> to vector<16x16x4xbf16>
    %17 = vector.shape_cast %16 : vector<16x16x4xbf16> to vector<256x4xbf16>
    %c2_17 = arith.constant 2 : index
    %c0_18 = arith.constant 0 : index
    %c0_19 = arith.constant 0 : index
    %18 = vector.load %arg2[%c2_17, %c0_18, %c0_19] : memref<9x4x128xbf16, #tpu.memory_space<vmem>>, vector<1x4x128xbf16>
    %19 = vector.shape_cast %18 : vector<1x4x128xbf16> to vector<4x128xbf16>
    %cst_20 = arith.constant dense<0.000000e+00> : vector<256x128xf32>
    %20 = tpu.matmul %17, %19, %cst_20 {dimension_numbers = #tpu.dot_dimension_numbers<[1], [0], [0], [1], [0, 0, 1, 1], [], []>} : vector<256x4xbf16>, vector<4x128xbf16>, vector<256x128xf32> -> vector<256x128xf32>
    %21 = arith.addf %14, %20 : vector<256x128xf32>
    %c0_21 = arith.constant 0 : index
    %c1_22 = arith.constant 1 : index
    %c0_23 = arith.constant 0 : index
    %c0_24 = arith.constant 0 : index
    %22 = vector.load %arg1[%c0_21, %c1_22, %c0_23, %c0_24] : memref<1x18x18x4xbf16, #tpu.memory_space<vmem>>, vector<1x16x16x4xbf16>
    %23 = vector.shape_cast %22 : vector<1x16x16x4xbf16> to vector<16x16x4xbf16>
    %24 = vector.shape_cast %23 : vector<16x16x4xbf16> to vector<256x4xbf16>
    %c3 = arith.constant 3 : index
    %c0_25 = arith.constant 0 : index
    %c0_26 = arith.constant 0 : index
    %25 = vector.load %arg2[%c3, %c0_25, %c0_26] : memref<9x4x128xbf16, #tpu.memory_space<vmem>>, vector<1x4x128xbf16>
    %26 = vector.shape_cast %25 : vector<1x4x128xbf16> to vector<4x128xbf16>
    %cst_27 = arith.constant dense<0.000000e+00> : vector<256x128xf32>
    %27 = tpu.matmul %24, %26, %cst_27 {dimension_numbers = #tpu.dot_dimension_numbers<[1], [0], [0], [1], [0, 0, 1, 1], [], []>} : vector<256x4xbf16>, vector<4x128xbf16>, vector<256x128xf32> -> vector<256x128xf32>
    %28 = arith.addf %21, %27 : vector<256x128xf32>
    %c0_28 = arith.constant 0 : index
    %c1_29 = arith.constant 1 : index
    %c1_30 = arith.constant 1 : index
    %c0_31 = arith.constant 0 : index
    %29 = vector.load %arg1[%c0_28, %c1_29, %c1_30, %c0_31] : memref<1x18x18x4xbf16, #tpu.memory_space<vmem>>, vector<1x16x16x4xbf16>
    %30 = vector.shape_cast %29 : vector<1x16x16x4xbf16> to vector<16x16x4xbf16>
    %31 = vector.shape_cast %30 : vector<16x16x4xbf16> to vector<256x4xbf16>
    %c4 = arith.constant 4 : index
    %c0_32 = arith.constant 0 : index
    %c0_33 = arith.constant 0 : index
    %32 = vector.load %arg2[%c4, %c0_32, %c0_33] : memref<9x4x128xbf16, #tpu.memory_space<vmem>>, vector<1x4x128xbf16>
    %33 = vector.shape_cast %32 : vector<1x4x128xbf16> to vector<4x128xbf16>
    %cst_34 = arith.constant dense<0.000000e+00> : vector<256x128xf32>
    %34 = tpu.matmul %31, %33, %cst_34 {dimension_numbers = #tpu.dot_dimension_numbers<[1], [0], [0], [1], [0, 0, 1, 1], [], []>} : vector<256x4xbf16>, vector<4x128xbf16>, vector<256x128xf32> -> vector<256x128xf32>
    %35 = arith.addf %28, %34 : vector<256x128xf32>
    %c0_35 = arith.constant 0 : index
    %c1_36 = arith.constant 1 : index
    %c2_37 = arith.constant 2 : index
    %c0_38 = arith.constant 0 : index
    %36 = vector.load %arg1[%c0_35, %c1_36, %c2_37, %c0_38] : memref<1x18x18x4xbf16, #tpu.memory_space<vmem>>, vector<1x16x16x4xbf16>
    %37 = vector.shape_cast %36 : vector<1x16x16x4xbf16> to vector<16x16x4xbf16>
    %38 = vector.shape_cast %37 : vector<16x16x4xbf16> to vector<256x4xbf16>
    %c5 = arith.constant 5 : index
    %c0_39 = arith.constant 0 : index
    %c0_40 = arith.constant 0 : index
    %39 = vector.load %arg2[%c5, %c0_39, %c0_40] : memref<9x4x128xbf16, #tpu.memory_space<vmem>>, vector<1x4x128xbf16>
    %40 = vector.shape_cast %39 : vector<1x4x128xbf16> to vector<4x128xbf16>
    %cst_41 = arith.constant dense<0.000000e+00> : vector<256x128xf32>
    %41 = tpu.matmul %38, %40, %cst_41 {dimension_numbers = #tpu.dot_dimension_numbers<[1], [0], [0], [1], [0, 0, 1, 1], [], []>} : vector<256x4xbf16>, vector<4x128xbf16>, vector<256x128xf32> -> vector<256x128xf32>
    %42 = arith.addf %35, %41 : vector<256x128xf32>
    %c0_42 = arith.constant 0 : index
    %c2_43 = arith.constant 2 : index
    %c0_44 = arith.constant 0 : index
    %c0_45 = arith.constant 0 : index
    %43 = vector.load %arg1[%c0_42, %c2_43, %c0_44, %c0_45] : memref<1x18x18x4xbf16, #tpu.memory_space<vmem>>, vector<1x16x16x4xbf16>
    %44 = vector.shape_cast %43 : vector<1x16x16x4xbf16> to vector<16x16x4xbf16>
    %45 = vector.shape_cast %44 : vector<16x16x4xbf16> to vector<256x4xbf16>
    %c6 = arith.constant 6 : index
    %c0_46 = arith.constant 0 : index
    %c0_47 = arith.constant 0 : index
    %46 = vector.load %arg2[%c6, %c0_46, %c0_47] : memref<9x4x128xbf16, #tpu.memory_space<vmem>>, vector<1x4x128xbf16>
    %47 = vector.shape_cast %46 : vector<1x4x128xbf16> to vector<4x128xbf16>
    %cst_48 = arith.constant dense<0.000000e+00> : vector<256x128xf32>
    %48 = tpu.matmul %45, %47, %cst_48 {dimension_numbers = #tpu.dot_dimension_numbers<[1], [0], [0], [1], [0, 0, 1, 1], [], []>} : vector<256x4xbf16>, vector<4x128xbf16>, vector<256x128xf32> -> vector<256x128xf32>
    %49 = arith.addf %42, %48 : vector<256x128xf32>
    %c0_49 = arith.constant 0 : index
    %c2_50 = arith.constant 2 : index
    %c1_51 = arith.constant 1 : index
    %c0_52 = arith.constant 0 : index
    %50 = vector.load %arg1[%c0_49, %c2_50, %c1_51, %c0_52] : memref<1x18x18x4xbf16, #tpu.memory_space<vmem>>, vector<1x16x16x4xbf16>
    %51 = vector.shape_cast %50 : vector<1x16x16x4xbf16> to vector<16x16x4xbf16>
    %52 = vector.shape_cast %51 : vector<16x16x4xbf16> to vector<256x4xbf16>
    %c7 = arith.constant 7 : index
    %c0_53 = arith.constant 0 : index
    %c0_54 = arith.constant 0 : index
    %53 = vector.load %arg2[%c7, %c0_53, %c0_54] : memref<9x4x128xbf16, #tpu.memory_space<vmem>>, vector<1x4x128xbf16>
    %54 = vector.shape_cast %53 : vector<1x4x128xbf16> to vector<4x128xbf16>
    %cst_55 = arith.constant dense<0.000000e+00> : vector<256x128xf32>
    %55 = tpu.matmul %52, %54, %cst_55 {dimension_numbers = #tpu.dot_dimension_numbers<[1], [0], [0], [1], [0, 0, 1, 1], [], []>} : vector<256x4xbf16>, vector<4x128xbf16>, vector<256x128xf32> -> vector<256x128xf32>
    %56 = arith.addf %49, %55 : vector<256x128xf32>
    %c0_56 = arith.constant 0 : index
    %c2_57 = arith.constant 2 : index
    %c2_58 = arith.constant 2 : index
    %c0_59 = arith.constant 0 : index
    %57 = vector.load %arg1[%c0_56, %c2_57, %c2_58, %c0_59] : memref<1x18x18x4xbf16, #tpu.memory_space<vmem>>, vector<1x16x16x4xbf16>
    %58 = vector.shape_cast %57 : vector<1x16x16x4xbf16> to vector<16x16x4xbf16>
    %59 = vector.shape_cast %58 : vector<16x16x4xbf16> to vector<256x4xbf16>
    %c8 = arith.constant 8 : index
    %c0_60 = arith.constant 0 : index
    %c0_61 = arith.constant 0 : index
    %60 = vector.load %arg2[%c8, %c0_60, %c0_61] : memref<9x4x128xbf16, #tpu.memory_space<vmem>>, vector<1x4x128xbf16>
    %61 = vector.shape_cast %60 : vector<1x4x128xbf16> to vector<4x128xbf16>
    %cst_62 = arith.constant dense<0.000000e+00> : vector<256x128xf32>
    %62 = tpu.matmul %59, %61, %cst_62 {dimension_numbers = #tpu.dot_dimension_numbers<[1], [0], [0], [1], [0, 0, 1, 1], [], []>} : vector<256x4xbf16>, vector<4x128xbf16>, vector<256x128xf32> -> vector<256x128xf32>
    %63 = arith.addf %56, %62 : vector<256x128xf32>
    %c0_63 = arith.constant 0 : index
    %c0_64 = arith.constant 0 : index
    %64 = vector.load %arg3[%c0_63, %c0_64] : memref<1x128xf32, #tpu.memory_space<vmem>>, vector<1x128xf32>
    %65 = vector.broadcast %64 : vector<1x128xf32> to vector<256x128xf32>
    %66 = arith.addf %63, %65 : vector<256x128xf32>
    %cst_65 = arith.constant 0.000000e+00 : f32
    %67 = vector.broadcast %cst_65 : f32 to vector<256x128xf32>
    %68 = arith.maximumf %66, %67 : vector<256x128xf32>
    %cst_66 = arith.constant dense<0.000000e+00> : vector<128xf32>
    %69 = vector.multi_reduction <add>, %68, %cst_66 [0] : vector<256x128xf32> to vector<128xf32>
    %70 = vector.shape_cast %69 : vector<128xf32> to vector<1x128xf32>
    %cst_67 = arith.constant 3.906250e-03 : f32
    %71 = vector.broadcast %cst_67 : f32 to vector<1x128xf32>
    %72 = arith.mulf %70, %71 : vector<1x128xf32>
    %c0_68 = arith.constant 0 : index
    %c0_69 = arith.constant 0 : index
    %73 = vector.load %arg4[%c0_68, %c0_69] : memref<128x128xf32, #tpu.memory_space<vmem>>, vector<128x128xf32>
    %cst_70 = arith.constant dense<0.000000e+00> : vector<1x128xf32>
    %74 = tpu.matmul %72, %73, %cst_70 {dimension_numbers = #tpu.dot_dimension_numbers<[1], [0], [0], [1], [0, 0, 1, 1], [], []>} : vector<1x128xf32>, vector<128x128xf32>, vector<1x128xf32> -> vector<1x128xf32>
    %c0_71 = arith.constant 0 : index
    %c0_72 = arith.constant 0 : index
    %75 = vector.load %arg5[%c0_71, %c0_72] : memref<1x128xf32, #tpu.memory_space<vmem>>, vector<1x128xf32>
    %76 = arith.addf %74, %75 : vector<1x128xf32>
    %77 = tpu.iota {dimensions = array<i32: 1>} : vector<1x128xi32>
    %78 = arith.negf %76 : vector<1x128xf32>
    %79 = math.exp %78 : vector<1x128xf32>
    %cst_73 = arith.constant 1.000000e+00 : f32
    %80 = vector.broadcast %cst_73 : f32 to vector<1x128xf32>
    %81 = arith.addf %80, %79 : vector<1x128xf32>
    %82 = arith.divf %80, %81 : vector<1x128xf32>
    %c6_i32 = arith.constant 6 : i32
    %83 = vector.broadcast %c6_i32 : i32 to vector<1x128xi32>
    %84 = arith.cmpi sge, %77, %83 : vector<1x128xi32>
    %c9_i32 = arith.constant 9 : i32
    %85 = vector.broadcast %c9_i32 : i32 to vector<1x128xi32>
    %86 = arith.cmpi slt, %77, %85 : vector<1x128xi32>
    %87 = arith.andi %84, %86 : vector<1x128xi1>
    %cst_74 = arith.constant 0.000000e+00 : f32
    %88 = vector.broadcast %cst_74 : f32 to vector<1x128xf32>
    %89 = arith.select %87, %82, %88 : vector<1x128xi1>, vector<1x128xf32>
    %cst_75 = arith.constant dense<0.000000e+00> : vector<1xf32>
    %90 = vector.multi_reduction <add>, %89, %cst_75 [1] : vector<1x128xf32> to vector<1xf32>
    %91 = vector.shape_cast %90 : vector<1xf32> to vector<1x1xf32>
    %cst_76 = arith.constant 0.333333343 : f32
    %92 = vector.broadcast %cst_76 : f32 to vector<1x1xf32>
    %93 = arith.mulf %91, %92 : vector<1x1xf32>
    %c6_i32_77 = arith.constant 6 : i32
    %94 = vector.broadcast %c6_i32_77 : i32 to vector<1x128xi32>
    %95 = arith.cmpi slt, %77, %94 : vector<1x128xi32>
    %cst_78 = arith.constant 0.000000e+00 : f32
    %96 = vector.broadcast %cst_78 : f32 to vector<1x128xf32>
    %97 = arith.select %95, %76, %96 : vector<1x128xi1>, vector<1x128xf32>
    %c6_i32_79 = arith.constant 6 : i32
    %98 = vector.broadcast %c6_i32_79 : i32 to vector<1x128xi32>
    %99 = arith.cmpi eq, %77, %98 : vector<1x128xi32>
    %cst_80 = arith.constant 0.000000e+00 : f32
    %100 = vector.shape_cast %93 : vector<1x1xf32> to vector<1x1xf32>
    %101 = vector.broadcast %100 : vector<1x1xf32> to vector<1x128xf32>
    %102 = vector.broadcast %cst_80 : f32 to vector<1x128xf32>
    %103 = arith.select %99, %101, %102 : vector<1x128xi1>, vector<1x128xf32>
    %104 = arith.addf %97, %103 : vector<1x128xf32>
    %105 = vector.shape_cast %104 : vector<1x128xf32> to vector<1x1x128xf32>
    %c0_81 = arith.constant 0 : index
    %c0_82 = arith.constant 0 : index
    %c0_83 = arith.constant 0 : index
    %106 = vector.load %arg6[%c0_81, %c0_82, %c0_83] : memref<1x1x128xf32, #tpu.memory_space<vmem>>, vector<1x1x128xf32>
    tpu.vector_store %arg6[%c0_81, %c0_82, %c0_83], %105 {strides = array<i32>} : memref<1x1x128xf32, #tpu.memory_space<vmem>>, vector<1x1x128xf32>,
    return
  }
  func.func @transform_0(%arg0: i32) -> (i32, i32, i32, i32) {
    %c0_i32 = arith.constant 0 : i32
    %c0_i32_0 = arith.constant 0 : i32
    %c0_i32_1 = arith.constant 0 : i32
    %c0_i32_2 = arith.constant 0 : i32
    return %arg0, %c0_i32, %c0_i32_0, %c0_i32_1 : i32, i32, i32, i32
  }
  func.func @transform_1(%arg0: i32) -> (i32, i32, i32) {
    %c0_i32 = arith.constant 0 : i32
    %c0_i32_0 = arith.constant 0 : i32
    %c0_i32_1 = arith.constant 0 : i32
    %c0_i32_2 = arith.constant 0 : i32
    return %c0_i32, %c0_i32_0, %c0_i32_1 : i32, i32, i32
  }
  func.func @transform_2(%arg0: i32) -> (i32, i32) {
    %c0_i32 = arith.constant 0 : i32
    %c0_i32_0 = arith.constant 0 : i32
    %c0_i32_1 = arith.constant 0 : i32
    return %c0_i32, %c0_i32_0 : i32, i32
  }
  func.func @transform_3(%arg0: i32) -> (i32, i32) {
    %c0_i32 = arith.constant 0 : i32
    %c0_i32_0 = arith.constant 0 : i32
    %c0_i32_1 = arith.constant 0 : i32
    return %c0_i32, %c0_i32_0 : i32, i32
  }
  func.func @transform_4(%arg0: i32) -> (i32, i32) {
    %c0_i32 = arith.constant 0 : i32
    %c0_i32_0 = arith.constant 0 : i32
    %c0_i32_1 = arith.constant 0 : i32
    return %c0_i32, %c0_i32_0 : i32, i32
  }
  func.func @transform_5(%arg0: i32) -> (i32, i32, i32) {
    %c0_i32 = arith.constant 0 : i32
    %c0_i32_0 = arith.constant 0 : i32
    %c0_i32_1 = arith.constant 0 : i32
    return %arg0, %c0_i32, %c0_i32_0 : i32, i32, i32
  }
}

</mosaic_0001>

<llo_original>
// kernel: ensemble_forward.1
$region0: #{ensemble_forward.1}
  #allocation0 [shape = 'u32[]', space=smem, size = 0x4, offset = 0x4, fixed_abs, tag = 'smem constant byte address 0x4 - core index']
  #allocation1 [shape = 'u32[72,128]{1,0:T(1,128)}', space=vmem, size = 0x9000, scoped, tag = 'internal scratch']
  %s0 = inlined_call_operand.vmem [shape: bf16[2,18,18,4], index: 0, kind: input, shape index: {}]
  %s1 = inlined_call_operand.vmem [shape: bf16[9,4,128], index: 1, kind: input, shape index: {}]
  %s2 = inlined_call_operand.vmem [shape: f32[1,128], index: 2, kind: input, shape index: {}]
  %s3 = inlined_call_operand.vmem [shape: f32[128,128], index: 3, kind: input, shape index: {}]
  %s4 = inlined_call_operand.vmem [shape: f32[1,128], index: 4, kind: input, shape index: {}]
  %s5 = inlined_call_operand.vmem [shape: f32[2,1,128], index: 5, kind: output, shape index: {}]
  %s6 = sld [smem:[#allocation0]]
  $region53: #{ensemble_forward.1} parent=0
    _
  %s8 = ssub.s32 1, %s6
  %s9 = scalar_select 0, %s8, %s6
  loop: start=0, step=1, limit=4
  $region2: #{ensemble_forward.1} parent=0 // loop_pre_header
    _
  $region3: #{ensemble_forward.1} parent=0 // loop_header
    %s11 = sphi 0, %s15
    %p12 = scmp.ge.s32.totalorder %s11, 4
    %s21 = sphi 0, %s23
    %s24 = sphi 0, %s21
    %s25 = sphi 0, %s24
    %s41 = sphi 0, %s25
    %s45 = sphi 0, %s45
    %s47 = sphi 0, %s45
    %s48 = sphi 0, %s47
    %s62 = sphi 0, %s48
    %s66 = sphi 0, %s66
    %s68 = sphi 0, %s66
    %s69 = sphi 0, %s68
    %s83 = sphi 0, %s69
    %s87 = sphi 0, %s87
    %s89 = sphi 0, %s87
    %s90 = sphi 0, %s89
    %s104 = sphi 0, %s90
    %s108 = sphi 0, %s108
    %s110 = sphi 0, %s108
    %s111 = sphi 0, %s110
    %s125 = sphi 0, %s111
    %s131 = sphi 0, %s133
    %s134 = sphi 0, %s131
    %s135 = sphi 0, %s134
    %s151 = sphi 0, %s135
  $region4: #{ensemble_forward.1} parent=0 // loop_header_branch
    %14 = sbr.rel (%p12) target = $region8
  $region5: #{ensemble_forward.1} parent=0 // loop_body
    %s16 = ssub.s32 %s11, 1
    %s17 = ssub.s32 %s11, 2
    %s18 = sadd.s32 %s11, 1
    %s19 = ssub.s32 %s11, %s18
    %p20 = scmp.eq.s32.totalorder %s19, 0
    %s22 = sadd.s32 %s21, 1
    %s23 = scalar_select %p20, %s21, %s22
    %p26 = pneg %p20
    %p27 = scmp.eq.s32.totalorder %s11, 1
    %p28 = por %p26, %p27
    %p29 = scmp.ne.s32.totalorder %s21, %s24
    %p30 = scmp.eq.s32.totalorder %s11, 0
    %p31 = por %p29, %p30
    %p32 = scmp.ne.s32.totalorder %s21, %s24
    %p33 = scmp.eq.s32.totalorder %s16, 1
    %p34 = por %p32, %p33
    %p35 = scmp.ne.s32.totalorder %s24, %s25
    %p36 = scmp.eq.s32.totalorder %s16, 0
    %p37 = por %p35, %p36
    %p38 = scmp.ne.s32.totalorder %s24, %s25
    %p39 = scmp.eq.s32.totalorder %s17, 1
    %p40 = por %p38, %p39
    %p42 = scmp.ne.s32.totalorder %s25, %s41
    %p43 = scmp.eq.s32.totalorder %s17, 0
    %p44 = por %p42, %p43
    %s46 = sadd.s32 %s45, 1
    %p49 = scmp.eq.s32.totalorder %s11, 1
    %p50 = scmp.ne.s32.totalorder %s45, %s47
    %p51 = scmp.eq.s32.totalorder %s11, 0
    %p52 = por %p50, %p51
    %p53 = scmp.ne.s32.totalorder %s45, %s47
    %p54 = scmp.eq.s32.totalorder %s16, 1
    %p55 = por %p53, %p54
    %p56 = scmp.ne.s32.totalorder %s47, %s48
    %p57 = scmp.eq.s32.totalorder %s16, 0
    %p58 = por %p56, %p57
    %p59 = scmp.ne.s32.totalorder %s47, %s48
    %p60 = scmp.eq.s32.totalorder %s17, 1
    %p61 = por %p59, %p60
    %p63 = scmp.ne.s32.totalorder %s48, %s62
    %p64 = scmp.eq.s32.totalorder %s17, 0
    %p65 = por %p63, %p64
    %s67 = sadd.s32 %s66, 1
    %p70 = scmp.eq.s32.totalorder %s11, 1
    %p71 = scmp.ne.s32.totalorder %s66, %s68
    %p72 = scmp.eq.s32.totalorder %s11, 0
    %p73 = por %p71, %p72
    %p74 = scmp.ne.s32.totalorder %s66, %s68
    %p75 = scmp.eq.s32.totalorder %s16, 1
    %p76 = por %p74, %p75
    %p77 = scmp.ne.s32.totalorder %s68, %s69
    %p78 = scmp.eq.s32.totalorder %s16, 0
    %p79 = por %p77, %p78
    %p80 = scmp.ne.s32.totalorder %s68, %s69
    %p81 = scmp.eq.s32.totalorder %s17, 1
    %p82 = por %p80, %p81
    %p84 = scmp.ne.s32.totalorder %s69, %s83
    %p85 = scmp.eq.s32.totalorder %s17, 0
    %p86 = por %p84, %p85
    %s88 = sadd.s32 %s87, 1
    %p91 = scmp.eq.s32.totalorder %s11, 1
    %p92 = scmp.ne.s32.totalorder %s87, %s89
    %p93 = scmp.eq.s32.totalorder %s11, 0
    %p94 = por %p92, %p93
    %p95 = scmp.ne.s32.totalorder %s87, %s89
    %p96 = scmp.eq.s32.totalorder %s16, 1
    %p97 = por %p95, %p96
    %p98 = scmp.ne.s32.totalorder %s89, %s90
    %p99 = scmp.eq.s32.totalorder %s16, 0
    %p100 = por %p98, %p99
    %p101 = scmp.ne.s32.totalorder %s89, %s90
    %p102 = scmp.eq.s32.totalorder %s17, 1
    %p103 = por %p101, %p102
    %p105 = scmp.ne.s32.totalorder %s90, %s104
    %p106 = scmp.eq.s32.totalorder %s17, 0
    %p107 = por %p105, %p106
    %s109 = sadd.s32 %s108, 1
    %p112 = scmp.eq.s32.totalorder %s11, 1
    %p113 = scmp.ne.s32.totalorder %s108, %s110
    %p114 = scmp.eq.s32.totalorder %s11, 0
    %p115 = por %p113, %p114
    %p116 = scmp.ne.s32.totalorder %s108, %s110
    %p117 = scmp.eq.s32.totalorder %s16, 1
    %p118 = por %p116, %p117
    %p119 = scmp.ne.s32.totalorder %s110, %s111
    %p120 = scmp.eq.s32.totalorder %s16, 0
    %p121 = por %p119, %p120
    %p122 = scmp.ne.s32.totalorder %s110, %s111
    %p123 = scmp.eq.s32.totalorder %s17, 1
    %p124 = por %p122, %p123
    %p126 = scmp.ne.s32.totalorder %s111, %s125
    %p127 = scmp.eq.s32.totalorder %s17, 0
    %p128 = por %p126, %p127
    %s129 = ssub.s32 %s11, %s18
    %p130 = scmp.eq.s32.totalorder %s129, 0
    %s132 = sadd.s32 %s131, 1
    %s133 = scalar_select %p130, %s131, %s132
    %p136 = pneg %p130
    %p137 = scmp.eq.s32.totalorder %s11, 1
    %p138 = por %p136, %p137
    %p139 = scmp.ne.s32.totalorder %s131, %s134
    %p140 = scmp.eq.s32.totalorder %s11, 0
    %p141 = por %p139, %p140
    %p142 = scmp.ne.s32.totalorder %s131, %s134
    %p143 = scmp.eq.s32.totalorder %s16, 1
    %p144 = por %p142, %p143
    %p145 = scmp.ne.s32.totalorder %s134, %s135
    %p146 = scmp.eq.s32.totalorder %s16, 0
    %p147 = por %p145, %p146
    %p148 = scmp.ne.s32.totalorder %s134, %s135
    %p149 = scmp.eq.s32.totalorder %s17, 1
    %p150 = por %p148, %p149
    %p152 = scmp.ne.s32.totalorder %s135, %s151
    %p153 = scmp.eq.s32.totalorder %s17, 0
    %p154 = por %p152, %p153
    %p155 = scmp.le.s32.totalorder 1, %s11
    %p156 = scmp.lt.s32.totalorder %s11, 3
    %p157 = pnand %p155, %p156
    %p158 = pneg %p157
    // Predicated region
    $region9: #{ensemble_forward.1} parent=5 // pred_check
      _
    $region10: #{ensemble_forward.1} parent=5 // pred_check_branch
      %160 = sbr.rel (%p157) target = $region12
    $region11: #{ensemble_forward.1} parent=5 // pred_region
      %s161 = ssub.s32 %s11, 1
      // Predicated region
      $region13: #{ensemble_forward.1} parent=11 // pred_check
        %p162 = pneg %p58
      $region14: #{ensemble_forward.1} parent=11 // pred_check_branch
        %164 = sbr.rel (%p162) target = $region16
      $region15: #{ensemble_forward.1} parent=11 // pred_region
        _
      $region16: #{ensemble_forward.1} parent=11 // pred_fallthru
        _
      // Predicated region
      $region17: #{ensemble_forward.1} parent=11 // pred_check
        %p165 = pneg %p79
      $region18: #{ensemble_forward.1} parent=11 // pred_check_branch
        %167 = sbr.rel (%p165) target = $region20
      $region19: #{ensemble_forward.1} parent=11 // pred_region
        _
      $region20: #{ensemble_forward.1} parent=11 // pred_fallthru
        _
      // Predicated region
      $region21: #{ensemble_forward.1} parent=11 // pred_check
        %p168 = pneg %p100
      $region22: #{ensemble_forward.1} parent=11 // pred_check_branch
        %170 = sbr.rel (%p168) target = $region24
      $region23: #{ensemble_forward.1} parent=11 // pred_region
        _
      $region24: #{ensemble_forward.1} parent=11 // pred_fallthru
        _
      // Predicated region
      $region25: #{ensemble_forward.1} parent=11 // pred_check
        %p171 = pneg %p121
      $region26: #{ensemble_forward.1} parent=11 // pred_check_branch
        %173 = sbr.rel (%p171) target = $region28
      $region27: #{ensemble_forward.1} parent=11 // pred_region
        _
      $region28: #{ensemble_forward.1} parent=11 // pred_fallthru
        _
    $region12: #{ensemble_forward.1} parent=5 // pred_fallthru
      _
    %p174 = scmp.lt.s32.totalorder %s11, 2
    // Predicated region
    $region29: #{ensemble_forward.1} parent=5 // pred_check
      %p175 = pneg %p174
    $region30: #{ensemble_forward.1} parent=5 // pred_check_branch
      %177 = sbr.rel (%p175) target = $region32
    $region31: #{ensemble_forward.1} parent=5 // pred_region
      // Predicated region
      $region33: #{ensemble_forward.1} parent=31 // pred_check
        %p178 = pneg %p31
      $region34: #{ensemble_forward.1} parent=31 // pred_check_branch
        %180 = sbr.rel (%p178) target = $region36
      $region35: #{ensemble_forward.1} parent=31 // pred_region
        %p181 = scmp.lt.s32.totalorder %s11, 1
        %s182 = scalar_select %p181, %s11, 1
        %s183 = smul.addr %s182, 54
        %s184 = smul.addr %s183, 4
        %s185 = scalar_lea.vmem %s0, %s184
      $region36: #{ensemble_forward.1} parent=31 // pred_fallthru
        _
    $region32: #{ensemble_forward.1} parent=5 // pred_fallthru
      _
    %p186 = scmp.le.s32.totalorder 1, %s11
    %p187 = scmp.lt.s32.totalorder %s11, 3
    %p188 = pnand %p186, %p187
    %p189 = pneg %p188
    // Predicated region
    $region37: #{ensemble_forward.1} parent=5 // pred_check
      _
    $region38: #{ensemble_forward.1} parent=5 // pred_check_branch
      %191 = sbr.rel (%p188) target = $region40
    $region39: #{ensemble_forward.1} parent=5 // pred_region
      %s192 = ssub.s32 %s11, 1
      %p193 = scmp.lt.s32.totalorder %s16, 1
      %s194 = scalar_select %p193, %s16, 1
      %s195 = smul.addr %s194, 54
      %s196 = smul.addr %s195, 4
      %s197 = scalar_lea.vmem %s0, %s196
      %p198 = pneg %p37
      %p199 = pneg %p34
      %p200 = pneg %p58
      %p201 = pneg %p55
      %p202 = pneg %p79
      %p203 = pneg %p76
      %p204 = pneg %p100
      %p205 = pneg %p97
      %p206 = pneg %p121
      %p207 = pneg %p118
      %p208 = pneg %p147
      %p209 = pneg %p144
      %p210 = scmp.lt.s32.totalorder %s16, 1
      %s211 = scalar_select %p210, %s16, 1
      %s212 = scalar_lea.vmem %s5, %s211
      %p213 = scmp.lt.s32.totalorder %s16, 1
      %s214 = scalar_select %p213, %s16, 1
      %s215 = smul.addr %s214, 54
      %s216 = smul.addr %s215, 4
      %s217 = scalar_lea.vmem %s0, %s216
      %p218 = scmp.lt.s32.totalorder %s16, 1
      %s219 = scalar_select %p218, %s16, 1
      %s220 = scalar_lea.vmem %s5, %s219
      %v222 = vld [vmem:[%s217] sm:$0xf]
      %v223 = vld [vmem:[%s217 + $0x4] sm:$0xf]
      %v224 = vld [vmem:[%s217 + $0xc] sm:$0xf]
      %v225 = vld [vmem:[%s217 + $0x10] sm:$0xf]
      %v226 = vld [vmem:[%s217 + $0x18] sm:$0xf]
      %v227 = vld [vmem:[%s217 + $0x1c] sm:$0xf]
      %v228 = vld [vmem:[%s217 + $0x24] sm:$0xf]
      %v229 = vld [vmem:[%s217 + $0x28] sm:$0xf]
      %v230 = vld [vmem:[%s217 + $0x30] sm:$0xf]
      %v231 = vld [vmem:[%s217 + $0x34] sm:$0xf]
      %v232 = vld [vmem:[%s217 + $0x3c] sm:$0xf]
      %v233 = vld [vmem:[%s217 + $0x40] sm:$0xf]
      %v234 = vld [vmem:[%s217 + $0x48] sm:$0xf]
      %v235 = vld [vmem:[%s217 + $0x4c] sm:$0xf]
      %v236 = vld [vmem:[%s217 + $0x54] sm:$0xf]
      %v237 = vld [vmem:[%s217 + $0x58] sm:$0xf]
      %v238 = vld [vmem:[%s217 + $0x60] sm:$0xf]
      %v239 = vld [vmem:[%s217 + $0x64] sm:$0xf]
      %v240 = vld [vmem:[%s217 + $0x6c] sm:$0xf]
      %v241 = vld [vmem:[%s217 + $0x70] sm:$0xf]
      %v242 = vld [vmem:[%s217 + $0x78] sm:$0xf]
      %v243 = vld [vmem:[%s217 + $0x7c] sm:$0xf]
      %v244 = vld [vmem:[%s217 + $0x84] sm:$0xf]
      %v245 = vld [vmem:[%s217 + $0x88] sm:$0xf]
      %v246 = vld [vmem:[%s217 + $0x90] sm:$0xf]
      %v247 = vld [vmem:[%s217 + $0x94] sm:$0xf]
      %v248 = vld [vmem:[%s217 + $0x9c] sm:$0xf]
      %v249 = vld [vmem:[%s217 + $0xa0] sm:$0xf]
      %v250 = vld [vmem:[%s217 + $0xa8] sm:$0xf]
      %v251 = vld [vmem:[%s217 + $0xac] sm:$0xf]
      %v252 = vld [vmem:[%s217 + $0xb4] sm:$0xf]
      %v253 = vld [vmem:[%s217 + $0xb8] sm:$0xf]
      %v254 = vld [vmem:[%s1] sm:$0x3]
      %v255 = vld [vmem:[%s217 + $0x8] sm:$0x1]
      %v256 = vld [vmem:[%s217 + $0x14] sm:$0x1]
      %v257 = vld [vmem:[%s217 + $0x20] sm:$0x1]
      %v258 = vld [vmem:[%s217 + $0x2c] sm:$0x1]
      %v259 = vld [vmem:[%s217 + $0x38] sm:$0x1]
      %v260 = vld [vmem:[%s217 + $0x44] sm:$0x1]
      %v261 = vld [vmem:[%s217 + $0x50] sm:$0x1]
      %v262 = vld [vmem:[%s217 + $0x5c] sm:$0x1]
      %v263 = vld [vmem:[%s217 + $0x68] sm:$0x1]
      %v264 = vld [vmem:[%s217 + $0x74] sm:$0x1]
      %v265 = vld [vmem:[%s217 + $0x80] sm:$0x1]
      %v266 = vld [vmem:[%s217 + $0x8c] sm:$0x1]
      %v267 = vld [vmem:[%s217 + $0x98] sm:$0x1]
      %v268 = vld [vmem:[%s217 + $0xa4] sm:$0x1]
      %v269 = vld [vmem:[%s217 + $0xb0] sm:$0x1]
      %v270 = vld [vmem:[%s217 + $0xbc] sm:$0x1]
      %vm271 = vsmask.f32 3328
      %vm272 = vsmask.f32 7440
      %vm273 = vmor %vm271, %vm272
      %v275 = vshrl.u32 %v222, 16
      %v277 = vrot.slane %v275, 4
      %v278 = vshll.u32 %v222, 16
      %v280 = vrot.slane %v278, 5
      %v281 = vor.u32 %v277, %v280
      %v282 = vrot.slane %v281, 4
      %v284 = vshll.u32 %v223, 16
      %v286 = vrot.slane %v284, 5
      %v287 = vsel %vm273, %v282, %v286
      %v288 = vshrl.u32 %v223, 16
      %v290 = vrot.slane %v288, 4
      %v291 = vor.u32 %v290, %v286
      %v292 = vrot.slane %v291, 4
      %v294 = vshll.u32 %v255, 16
      %v296 = vrot.slane %v294, 5
      %v297 = vsel %vm273, %v292, %v296
      %v299 = vshrl.u32 %v224, 16
      %v301 = vrot.slane %v299, 4
      %v302 = vshll.u32 %v224, 16
      %v304 = vrot.slane %v302, 5
      %v305 = vor.u32 %v301, %v304
      %v306 = vrot.slane %v305, 4
      %v308 = vshll.u32 %v225, 16
      %v310 = vrot.slane %v308, 5
      %v311 = vsel %vm273, %v306, %v310
      %v312 = vshrl.u32 %v225, 16
      %v314 = vrot.slane %v312, 4
      %v315 = vor.u32 %v314, %v310
      %v316 = vrot.slane %v315, 4
      %v318 = vshll.u32 %v256, 16
      %v320 = vrot.slane %v318, 5
      %v321 = vsel %vm273, %v316, %v320
      %v323 = vshrl.u32 %v226, 16
      %v325 = vrot.slane %v323, 4
      %v326 = vshll.u32 %v226, 16
      %v328 = vrot.slane %v326, 5
      %v329 = vor.u32 %v325, %v328
      %v330 = vrot.slane %v329, 4
      %v332 = vshll.u32 %v227, 16
      %v334 = vrot.slane %v332, 5
      %v335 = vsel %vm273, %v330, %v334
      %v336 = vshrl.u32 %v227, 16
      %v338 = vrot.slane %v336, 4
      %v339 = vor.u32 %v338, %v334
      %v340 = vrot.slane %v339, 4
      %v342 = vshll.u32 %v257, 16
      %v344 = vrot.slane %v342, 5
      %v345 = vsel %vm273, %v340, %v344
      %v347 = vshrl.u32 %v228, 16
      %v349 = vrot.slane %v347, 4
      %v350 = vshll.u32 %v228, 16
      %v352 = vrot.slane %v350, 5
      %v353 = vor.u32 %v349, %v352
      %v354 = vrot.slane %v353, 4
      %v356 = vshll.u32 %v229, 16
      %v358 = vrot.slane %v356, 5
      %v359 = vsel %vm273, %v354, %v358
      %v360 = vshrl.u32 %v229, 16
      %v362 = vrot.slane %v360, 4
      %v363 = vor.u32 %v362, %v358
      %v364 = vrot.slane %v363, 4
      %v366 = vshll.u32 %v258, 16
      %v368 = vrot.slane %v366, 5
      %v369 = vsel %vm273, %v364, %v368
      %v371 = vshrl.u32 %v230, 16
      %v373 = vrot.slane %v371, 4
      %v374 = vshll.u32 %v230, 16
      %v376 = vrot.slane %v374, 5
      %v377 = vor.u32 %v373, %v376
      %v378 = vrot.slane %v377, 4
      %v380 = vshll.u32 %v231, 16
      %v382 = vrot.slane %v380, 5
      %v383 = vsel %vm273, %v378, %v382
      %v384 = vshrl.u32 %v231, 16
      %v386 = vrot.slane %v384, 4
      %v387 = vor.u32 %v386, %v382
      %v388 = vrot.slane %v387, 4
      %v390 = vshll.u32 %v259, 16
      %v392 = vrot.slane %v390, 5
      %v393 = vsel %vm273, %v388, %v392
      %v395 = vshrl.u32 %v232, 16
      %v397 = vrot.slane %v395, 4
      %v398 = vshll.u32 %v232, 16
      %v400 = vrot.slane %v398, 5
      %v401 = vor.u32 %v397, %v400
      %v402 = vrot.slane %v401, 4
      %v404 = vshll.u32 %v233, 16
      %v406 = vrot.slane %v404, 5
      %v407 = vsel %vm273, %v402, %v406
      %v408 = vshrl.u32 %v233, 16
      %v410 = vrot.slane %v408, 4
      %v411 = vor.u32 %v410, %v406
      %v412 = vrot.slane %v411, 4
      %v414 = vshll.u32 %v260, 16
      %v416 = vrot.slane %v414, 5
      %v417 = vsel %vm273, %v412, %v416
      %v419 = vshrl.u32 %v234, 16
      %v421 = vrot.slane %v419, 4
      %v422 = vshll.u32 %v234, 16
      %v424 = vrot.slane %v422, 5
      %v425 = vor.u32 %v421, %v424
      %v426 = vrot.slane %v425, 4
      %v428 = vshll.u32 %v235, 16
      %v430 = vrot.slane %v428, 5
      %v431 = vsel %vm273, %v426, %v430
      %v432 = vshrl.u32 %v235, 16
      %v434 = vrot.slane %v432, 4
      %v435 = vor.u32 %v434, %v430
      %v436 = vrot.slane %v435, 4
      %v438 = vshll.u32 %v261, 16
      %v440 = vrot.slane %v438, 5
      %v441 = vsel %vm273, %v436, %v440
      %v443 = vshrl.u32 %v236, 16
      %v445 = vrot.slane %v443, 4
      %v446 = vshll.u32 %v236, 16
      %v448 = vrot.slane %v446, 5
      %v449 = vor.u32 %v445, %v448
      %v450 = vrot.slane %v449, 4
      %v452 = vshll.u32 %v237, 16
      %v454 = vrot.slane %v452, 5
      %v455 = vsel %vm273, %v450, %v454
      %v456 = vshrl.u32 %v237, 16
      %v458 = vrot.slane %v456, 4
      %v459 = vor.u32 %v458, %v454
      %v460 = vrot.slane %v459, 4
      %v462 = vshll.u32 %v262, 16
      %v464 = vrot.slane %v462, 5
      %v465 = vsel %vm273, %v460, %v464
      %v467 = vshrl.u32 %v238, 16
      %v469 = vrot.slane %v467, 4
      %v470 = vshll.u32 %v238, 16
      %v472 = vrot.slane %v470, 5
      %v473 = vor.u32 %v469, %v472
      %v474 = vrot.slane %v473, 4
      %v476 = vshll.u32 %v239, 16
      %v478 = vrot.slane %v476, 5
      %v479 = vsel %vm273, %v474, %v478
      %v480 = vshrl.u32 %v239, 16
      %v482 = vrot.slane %v480, 4
      %v483 = vor.u32 %v482, %v478
      %v484 = vrot.slane %v483, 4
      %v486 = vshll.u32 %v263, 16
      %v488 = vrot.slane %v486, 5
      %v489 = vsel %vm273, %v484, %v488
      %v491 = vshrl.u32 %v240, 16
      %v493 = vrot.slane %v491, 4
      %v494 = vshll.u32 %v240, 16
      %v496 = vrot.slane %v494, 5
      %v497 = vor.u32 %v493, %v496
      %v498 = vrot.slane %v497, 4
      %v500 = vshll.u32 %v241, 16
      %v502 = vrot.slane %v500, 5
      %v503 = vsel %vm273, %v498, %v502
      %v504 = vshrl.u32 %v241, 16
      %v506 = vrot.slane %v504, 4
      %v507 = vor.u32 %v506, %v502
      %v508 = vrot.slane %v507, 4
      %v510 = vshll.u32 %v264, 16
      %v512 = vrot.slane %v510, 5
      %v513 = vsel %vm273, %v508, %v512
      %v515 = vshrl.u32 %v242, 16
      %v517 = vrot.slane %v515, 4
      %v518 = vshll.u32 %v242, 16
      %v520 = vrot.slane %v518, 5
      %v521 = vor.u32 %v517, %v520
      %v522 = vrot.slane %v521, 4
      %v524 = vshll.u32 %v243, 16
      %v526 = vrot.slane %v524, 5
      %v527 = vsel %vm273, %v522, %v526
      %v528 = vshrl.u32 %v243, 16
      %v530 = vrot.slane %v528, 4
      %v531 = vor.u32 %v530, %v526
      %v532 = vrot.slane %v531, 4
      %v534 = vshll.u32 %v265, 16
      %v536 = vrot.slane %v534, 5
      %v537 = vsel %vm273, %v532, %v536
      %v539 = vshrl.u32 %v244, 16
      %v541 = vrot.slane %v539, 4
      %v542 = vshll.u32 %v244, 16
      %v544 = vrot.slane %v542, 5
      %v545 = vor.u32 %v541, %v544
      %v546 = vrot.slane %v545, 4
      %v548 = vshll.u32 %v245, 16
      %v550 = vrot.slane %v548, 5
      %v551 = vsel %vm273, %v546, %v550
      %v552 = vshrl.u32 %v245, 16
      %v554 = vrot.slane %v552, 4
      %v555 = vor.u32 %v554, %v550
      %v556 = vrot.slane %v555, 4
      %v558 = vshll.u32 %v266, 16
      %v560 = vrot.slane %v558, 5
      %v561 = vsel %vm273, %v556, %v560
      %v563 = vshrl.u32 %v246, 16
      %v565 = vrot.slane %v563, 4
      %v566 = vshll.u32 %v246, 16
      %v568 = vrot.slane %v566, 5
      %v569 = vor.u32 %v565, %v568
      %v570 = vrot.slane %v569, 4
      %v572 = vshll.u32 %v247, 16
      %v574 = vrot.slane %v572, 5
      %v575 = vsel %vm273, %v570, %v574
      %v576 = vshrl.u32 %v247, 16
      %v578 = vrot.slane %v576, 4
      %v579 = vor.u32 %v578, %v574
      %v580 = vrot.slane %v579, 4
      %v582 = vshll.u32 %v267, 16
      %v584 = vrot.slane %v582, 5
      %v585 = vsel %vm273, %v580, %v584
      %v587 = vshrl.u32 %v248, 16
      %v589 = vrot.slane %v587, 4
      %v590 = vshll.u32 %v248, 16
      %v592 = vrot.slane %v590, 5
      %v593 = vor.u32 %v589, %v592
      %v594 = vrot.slane %v593, 4
      %v596 = vshll.u32 %v249, 16
      %v598 = vrot.slane %v596, 5
      %v599 = vsel %vm273, %v594, %v598
      %v600 = vshrl.u32 %v249, 16
      %v602 = vrot.slane %v600, 4
      %v603 = vor.u32 %v602, %v598
      %v604 = vrot.slane %v603, 4
      %v606 = vshll.u32 %v268, 16
      %v608 = vrot.slane %v606, 5
      %v609 = vsel %vm273, %v604, %v608
      %v611 = vshrl.u32 %v250, 16
      %v613 = vrot.slane %v611, 4
      %v614 = vshll.u32 %v250, 16
      %v616 = vrot.slane %v614, 5
      %v617 = vor.u32 %v613, %v616
      %v618 = vrot.slane %v617, 4
      %v620 = vshll.u32 %v251, 16
      %v622 = vrot.slane %v620, 5
      %v623 = vsel %vm273, %v618, %v622
      %v624 = vshrl.u32 %v251, 16
      %v626 = vrot.slane %v624, 4
      %v627 = vor.u32 %v626, %v622
      %v628 = vrot.slane %v627, 4
      %v630 = vshll.u32 %v269, 16
      %v632 = vrot.slane %v630, 5
      %v633 = vsel %vm273, %v628, %v632
      %v635 = vshrl.u32 %v252, 16
      %v637 = vrot.slane %v635, 4
      %v638 = vshll.u32 %v252, 16
      %v640 = vrot.slane %v638, 5
      %v641 = vor.u32 %v637, %v640
      %v642 = vrot.slane %v641, 4
      %v644 = vshll.u32 %v253, 16
      %v646 = vrot.slane %v644, 5
      %v647 = vsel %vm273, %v642, %v646
      %v648 = vshrl.u32 %v253, 16
      %v650 = vrot.slane %v648, 4
      %v651 = vor.u32 %v650, %v646
      %v652 = vrot.slane %v651, 4
      %v654 = vshll.u32 %v270, 16
      %v656 = vrot.slane %v654, 5
      %v657 = vsel %vm273, %v652, %v656
      %s658 = scalar_lea.vmem %s1, 2
      %v659 = vld [vmem:[%s658] sm:$0x3]
      %v660 = vunpack.c.l.b16 %v287
      %v661 = vunpack.c.l.b16 %v297
      %v662 = vunpack.c.l.b16 %v311
      %v663 = vunpack.c.l.b16 %v321
      %v664 = vunpack.c.l.b16 %v335
      %v665 = vunpack.c.l.b16 %v345
      %v666 = vunpack.c.l.b16 %v359
      %v667 = vunpack.c.l.b16 %v369
      %v668 = vunpack.c.l.b16 %v383
      %v669 = vunpack.c.l.b16 %v393
      %v670 = vunpack.c.l.b16 %v407
      %v671 = vunpack.c.l.b16 %v417
      %v672 = vunpack.c.l.b16 %v431
      %v673 = vunpack.c.l.b16 %v441
      %v674 = vunpack.c.l.b16 %v455
      %v675 = vunpack.c.l.b16 %v465
      %v676 = vunpack.c.l.b16 %v479
      %v677 = vunpack.c.l.b16 %v489
      %v678 = vunpack.c.l.b16 %v503
      %v679 = vunpack.c.l.b16 %v513
      %v680 = vunpack.c.l.b16 %v527
      %v681 = vunpack.c.l.b16 %v537
      %v682 = vunpack.c.l.b16 %v551
      %v683 = vunpack.c.l.b16 %v561
      %v684 = vunpack.c.l.b16 %v575
      %v685 = vunpack.c.l.b16 %v585
      %v686 = vunpack.c.l.b16 %v599
      %v687 = vunpack.c.l.b16 %v609
      %v688 = vunpack.c.l.b16 %v623
      %v689 = vunpack.c.l.b16 %v633
      %v690 = vunpack.c.l.b16 %v647
      %v691 = vunpack.c.l.b16 %v657
      %v692 = vpack.c.b16 %v661, %v660
      %v693 = vpack.c.b16 %v663, %v662
      %v694 = vpack.c.b16 %v665, %v664
      %v695 = vpack.c.b16 %v667, %v666
      %v696 = vpack.c.b16 %v669, %v668
      %v697 = vpack.c.b16 %v671, %v670
      %v698 = vpack.c.b16 %v673, %v672
      %v699 = vpack.c.b16 %v675, %v674
      %v700 = vpack.c.b16 %v677, %v676
      %v701 = vpack.c.b16 %v679, %v678
      %v702 = vpack.c.b16 %v681, %v680
      %v703 = vpack.c.b16 %v683, %v682
      %v704 = vpack.c.b16 %v685, %v684
      %v705 = vpack.c.b16 %v687, %v686
      %v706 = vpack.c.b16 %v689, %v688
      %v707 = vpack.c.b16 %v691, %v690
      %vm708 = vcmask 31744
      %v710 = vsel %vm708, %v692, 0
      %v713 = vsel %vm708, %v693, 0
      %v716 = vsel %vm708, %v694, 0
      %v719 = vsel %vm708, %v695, 0
      %v722 = vsel %vm708, %v696, 0
      %v725 = vsel %vm708, %v697, 0
      %v728 = vsel %vm708, %v698, 0
      %v731 = vsel %vm708, %v699, 0
      %v734 = vsel %vm708, %v700, 0
      %v737 = vsel %vm708, %v701, 0
      %v740 = vsel %vm708, %v702, 0
      %v743 = vsel %vm708, %v703, 0
      %v746 = vsel %vm708, %v704, 0
      %v749 = vsel %vm708, %v705, 0
      %v752 = vsel %vm708, %v706, 0
      %v755 = vsel %vm708, %v707, 0
      %vm757 = vcmask 1041408
      %v759 = vsel %vm757, %v659, 0
      %761 = vmatpush.bf16.msra.mxu0 0
      %762 = vmatpush.bf16.msra.mxu0 0
      %763 = vmatpush.bf16.msra.mxu0 0
      %764 = vmatpush.bf16.msra.mxu0 0
      %765 = vmatpush.bf16.msra.mxu0 0
      %766 = vmatpush.bf16.msra.mxu0 0
      %767 = vmatpush.bf16.msra.mxu0 0
      %768 = vmatpush.bf16.msra.mxu0 %v759
      %769 = vmatmul.bf16.gmra.mxu0 %v710
      %v770 = vpop.f32.mrf.mxu0
      %v771 = vadd.f32 0.0, %v770
      %v772 = vpop.f32.mrf.mxu0
      %v773 = vadd.f32 0.0, %v772
      %774 = vmatmul.bf16.gmra.mxu0 %v713
      %v775 = vpop.f32.mrf.mxu0
      %v776 = vadd.f32 0.0, %v775
      %v777 = vpop.f32.mrf.mxu0
      %v778 = vadd.f32 0.0, %v777
      %779 = vmatmul.bf16.gmra.mxu0 %v716
      %v780 = vpop.f32.mrf.mxu0
      %v781 = vadd.f32 0.0, %v780
      %v782 = vpop.f32.mrf.mxu0
      %v783 = vadd.f32 0.0, %v782
      %784 = vmatmul.bf16.gmra.mxu0 %v719
      %v785 = vpop.f32.mrf.mxu0
      %v786 = vadd.f32 0.0, %v785
      %v787 = vpop.f32.mrf.mxu0
      %v788 = vadd.f32 0.0, %v787
      %789 = vmatmul.bf16.gmra.mxu0 %v722
      %v790 = vpop.f32.mrf.mxu0
      %v791 = vadd.f32 0.0, %v790
      %v792 = vpop.f32.mrf.mxu0
      %v793 = vadd.f32 0.0, %v792
      %794 = vmatmul.bf16.gmra.mxu0 %v725
      %v795 = vpop.f32.mrf.mxu0
      %v796 = vadd.f32 0.0, %v795
      %v797 = vpop.f32.mrf.mxu0
      %v798 = vadd.f32 0.0, %v797
      %799 = vmatmul.bf16.gmra.mxu0 %v728
      %v800 = vpop.f32.mrf.mxu0
      %v801 = vadd.f32 0.0, %v800
      %v802 = vpop.f32.mrf.mxu0
      %v803 = vadd.f32 0.0, %v802
      %804 = vmatmul.bf16.gmra.mxu0 %v731
      %v805 = vpop.f32.mrf.mxu0
      %v806 = vadd.f32 0.0, %v805
      %v807 = vpop.f32.mrf.mxu0
      %v808 = vadd.f32 0.0, %v807
      %809 = vmatmul.bf16.gmra.mxu0 %v734
      %v810 = vpop.f32.mrf.mxu0
      %v811 = vadd.f32 0.0, %v810
      %v812 = vpop.f32.mrf.mxu0
      %v813 = vadd.f32 0.0, %v812
      %814 = vmatmul.bf16.gmra.mxu0 %v737
      %v815 = vpop.f32.mrf.mxu0
      %v816 = vadd.f32 0.0, %v815
      %v817 = vpop.f32.mrf.mxu0
      %v818 = vadd.f32 0.0, %v817
      %819 = vmatmul.bf16.gmra.mxu0 %v740
      %v820 = vpop.f32.mrf.mxu0
      %v821 = vadd.f32 0.0, %v820
      %v822 = vpop.f32.mrf.mxu0
      %v823 = vadd.f32 0.0, %v822
      %824 = vmatmul.bf16.gmra.mxu0 %v743
      %v825 = vpop.f32.mrf.mxu0
      %v826 = vadd.f32 0.0, %v825
      %v827 = vpop.f32.mrf.mxu0
      %v828 = vadd.f32 0.0, %v827
      %829 = vmatmul.bf16.gmra.mxu0 %v746
      %v830 = vpop.f32.mrf.mxu0
      %v831 = vadd.f32 0.0, %v830
      %v832 = vpop.f32.mrf.mxu0
      %v833 = vadd.f32 0.0, %v832
      %834 = vmatmul.bf16.gmra.mxu0 %v749
      %v835 = vpop.f32.mrf.mxu0
      %v836 = vadd.f32 0.0, %v835
      %v837 = vpop.f32.mrf.mxu0
      %v838 = vadd.f32 0.0, %v837
      %839 = vmatmul.bf16.gmra.mxu0 %v752
      %v840 = vpop.f32.mrf.mxu0
      %v841 = vadd.f32 0.0, %v840
      %v842 = vpop.f32.mrf.mxu0
      %v843 = vadd.f32 0.0, %v842
      %844 = vmatmul.bf16.gmra.mxu0 %v755
      %v845 = vpop.f32.mrf.mxu0
      %v846 = vadd.f32 0.0, %v845
      %v847 = vpop.f32.mrf.mxu0
      %v848 = vadd.f32 0.0, %v847
      %849 = vdwg.mxu0
      %v882 = vunpack.c.l.b16 %v222
      %v883 = vunpack.c.l.b16 %v223
      %v884 = vunpack.c.l.b16 %v224
      %v885 = vunpack.c.l.b16 %v225
      %v886 = vunpack.c.l.b16 %v226
      %v887 = vunpack.c.l.b16 %v227
      %v888 = vunpack.c.l.b16 %v228
      %v889 = vunpack.c.l.b16 %v229
      %v890 = vunpack.c.l.b16 %v230
      %v891 = vunpack.c.l.b16 %v231
      %v892 = vunpack.c.l.b16 %v232
      %v893 = vunpack.c.l.b16 %v233
      %v894 = vunpack.c.l.b16 %v234
      %v895 = vunpack.c.l.b16 %v235
      %v896 = vunpack.c.l.b16 %v236
      %v897 = vunpack.c.l.b16 %v237
      %v898 = vunpack.c.l.b16 %v238
      %v899 = vunpack.c.l.b16 %v239
      %v900 = vunpack.c.l.b16 %v240
      %v901 = vunpack.c.l.b16 %v241
      %v902 = vunpack.c.l.b16 %v242
      %v903 = vunpack.c.l.b16 %v243
      %v904 = vunpack.c.l.b16 %v244
      %v905 = vunpack.c.l.b16 %v245
      %v906 = vunpack.c.l.b16 %v246
      %v907 = vunpack.c.l.b16 %v247
      %v908 = vunpack.c.l.b16 %v248
      %v909 = vunpack.c.l.b16 %v249
      %v910 = vunpack.c.l.b16 %v250
      %v911 = vunpack.c.l.b16 %v251
      %v912 = vunpack.c.l.b16 %v252
      %v913 = vunpack.c.l.b16 %v253
      %v914 = vpack.c.b16 %v883, %v882
      %v915 = vpack.c.b16 %v885, %v884
      %v916 = vpack.c.b16 %v887, %v886
      %v917 = vpack.c.b16 %v889, %v888
      %v918 = vpack.c.b16 %v891, %v890
      %v919 = vpack.c.b16 %v893, %v892
      %v920 = vpack.c.b16 %v895, %v894
      %v921 = vpack.c.b16 %v897, %v896
      %v922 = vpack.c.b16 %v899, %v898
      %v923 = vpack.c.b16 %v901, %v900
      %v924 = vpack.c.b16 %v903, %v902
      %v925 = vpack.c.b16 %v905, %v904
      %v926 = vpack.c.b16 %v907, %v906
      %v927 = vpack.c.b16 %v909, %v908
      %v928 = vpack.c.b16 %v911, %v910
      %v929 = vpack.c.b16 %v913, %v912
      %v931 = vsel %vm708, %v914, 0
      %v934 = vsel %vm708, %v915, 0
      %v937 = vsel %vm708, %v916, 0
      %v940 = vsel %vm708, %v917, 0
      %v943 = vsel %vm708, %v918, 0
      %v946 = vsel %vm708, %v919, 0
      %v949 = vsel %vm708, %v920, 0
      %v952 = vsel %vm708, %v921, 0
      %v955 = vsel %vm708, %v922, 0
      %v958 = vsel %vm708, %v923, 0
      %v961 = vsel %vm708, %v924, 0
      %v964 = vsel %vm708, %v925, 0
      %v967 = vsel %vm708, %v926, 0
      %v970 = vsel %vm708, %v927, 0
      %v973 = vsel %vm708, %v928, 0
      %v976 = vsel %vm708, %v929, 0
      %v979 = vsel %vm757, %v254, 0
      %981 = vmatpush.bf16.msra.mxu0 0
      %982 = vmatpush.bf16.msra.mxu0 0
      %983 = vmatpush.bf16.msra.mxu0 0
      %984 = vmatpush.bf16.msra.mxu0 0
      %985 = vmatpush.bf16.msra.mxu0 0
      %986 = vmatpush.bf16.msra.mxu0 0
      %987 = vmatpush.bf16.msra.mxu0 0
      %988 = vmatpush.bf16.msra.mxu0 %v979
      %989 = vmatmul.bf16.gmra.mxu0 %v931
      %v990 = vpop.f32.mrf.mxu0
      %v991 = vadd.f32 %v771, %v990
      %v992 = vpop.f32.mrf.mxu0
      %v993 = vadd.f32 %v773, %v992
      %994 = vmatmul.bf16.gmra.mxu0 %v934
      %v995 = vpop.f32.mrf.mxu0
      %v996 = vadd.f32 %v776, %v995
      %v997 = vpop.f32.mrf.mxu0
      %v998 = vadd.f32 %v778, %v997
      %999 = vmatmul.bf16.gmra.mxu0 %v937
      %v1000 = vpop.f32.mrf.mxu0
      %v1001 = vadd.f32 %v781, %v1000
      %v1002 = vpop.f32.mrf.mxu0
      %v1003 = vadd.f32 %v783, %v1002
      %1004 = vmatmul.bf16.gmra.mxu0 %v940
      %v1005 = vpop.f32.mrf.mxu0
      %v1006 = vadd.f32 %v786, %v1005
      %v1007 = vpop.f32.mrf.mxu0
      %v1008 = vadd.f32 %v788, %v1007
      %1009 = vmatmul.bf16.gmra.mxu0 %v943
      %v1010 = vpop.f32.mrf.mxu0
      %v1011 = vadd.f32 %v791, %v1010
      %v1012 = vpop.f32.mrf.mxu0
      %v1013 = vadd.f32 %v793, %v1012
      %1014 = vmatmul.bf16.gmra.mxu0 %v946
      %v1015 = vpop.f32.mrf.mxu0
      %v1016 = vadd.f32 %v796, %v1015
      %v1017 = vpop.f32.mrf.mxu0
      %v1018 = vadd.f32 %v798, %v1017
      %1019 = vmatmul.bf16.gmra.mxu0 %v949
      %v1020 = vpop.f32.mrf.mxu0
      %v1021 = vadd.f32 %v801, %v1020
      %v1022 = vpop.f32.mrf.mxu0
      %v1023 = vadd.f32 %v803, %v1022
      %1024 = vmatmul.bf16.gmra.mxu0 %v952
      %v1025 = vpop.f32.mrf.mxu0
      %v1026 = vadd.f32 %v806, %v1025
      %v1027 = vpop.f32.mrf.mxu0
      %v1028 = vadd.f32 %v808, %v1027
      %1029 = vmatmul.bf16.gmra.mxu0 %v955
      %v1030 = vpop.f32.mrf.mxu0
      %v1031 = vadd.f32 %v811, %v1030
      %v1032 = vpop.f32.mrf.mxu0
      %v1033 = vadd.f32 %v813, %v1032
      %1034 = vmatmul.bf16.gmra.mxu0 %v958
      %v1035 = vpop.f32.mrf.mxu0
      %v1036 = vadd.f32 %v816, %v1035
      %v1037 = vpop.f32.mrf.mxu0
      %v1038 = vadd.f32 %v818, %v1037
      %1039 = vmatmul.bf16.gmra.mxu0 %v961
      %v1040 = vpop.f32.mrf.mxu0
      %v1041 = vadd.f32 %v821, %v1040
      %v1042 = vpop.f32.mrf.mxu0
      %v1043 = vadd.f32 %v823, %v1042
      %1044 = vmatmul.bf16.gmra.mxu0 %v964
      %v1045 = vpop.f32.mrf.mxu0
      %v1046 = vadd.f32 %v826, %v1045
      %v1047 = vpop.f32.mrf.mxu0
      %v1048 = vadd.f32 %v828, %v1047
      %1049 = vmatmul.bf16.gmra.mxu0 %v967
      %v1050 = vpop.f32.mrf.mxu0
      %v1051 = vadd.f32 %v831, %v1050
      %v1052 = vpop.f32.mrf.mxu0
      %v1053 = vadd.f32 %v833, %v1052
      %1054 = vmatmul.bf16.gmra.mxu0 %v970
      %v1055 = vpop.f32.mrf.mxu0
      %v1056 = vadd.f32 %v836, %v1055
      %v1057 = vpop.f32.mrf.mxu0
      %v1058 = vadd.f32 %v838, %v1057
      %1059 = vmatmul.bf16.gmra.mxu0 %v973
      %v1060 = vpop.f32.mrf.mxu0
      %v1061 = vadd.f32 %v841, %v1060
      %v1062 = vpop.f32.mrf.mxu0
      %v1063 = vadd.f32 %v843, %v1062
      %1064 = vmatmul.bf16.gmra.mxu0 %v976
      %v1065 = vpop.f32.mrf.mxu0
      %v1066 = vadd.f32 %v846, %v1065
      %v1067 = vpop.f32.mrf.mxu0
      %v1068 = vadd.f32 %v848, %v1067
      %1069 = vdwg.mxu0
      %v1070 = vld [vmem:[%s217] sm:$0xe]
      %v1071 = vld [vmem:[%s217 + $0xc] sm:$0xe]
      %v1072 = vld [vmem:[%s217 + $0x18] sm:$0xe]
      %v1073 = vld [vmem:[%s217 + $0x24] sm:$0xe]
      %v1074 = vld [vmem:[%s217 + $0x30] sm:$0xe]
      %v1075 = vld [vmem:[%s217 + $0x3c] sm:$0xe]
      %v1076 = vld [vmem:[%s217 + $0x48] sm:$0xe]
      %v1077 = vld [vmem:[%s217 + $0x54] sm:$0xe]
      %v1078 = vld [vmem:[%s217 + $0x60] sm:$0xe]
      %v1079 = vld [vmem:[%s217 + $0x6c] sm:$0xe]
      %v1080 = vld [vmem:[%s217 + $0x78] sm:$0xe]
      %v1081 = vld [vmem:[%s217 + $0x84] sm:$0xe]
      %v1082 = vld [vmem:[%s217 + $0x90] sm:$0xe]
      %v1083 = vld [vmem:[%s217 + $0x9c] sm:$0xe]
      %v1084 = vld [vmem:[%s217 + $0xa8] sm:$0xe]
      %v1085 = vld [vmem:[%s217 + $0xb4] sm:$0xe]
      %vm1118 = vcmask 1042432
      %vm1119 = vcmask 1046532
      %vm1120 = vmor %vm1118, %vm1119
      %v1121 = vrot.slane %v1070, 5
      %v1122 = vrot.slane %v1121, 4
      %v1123 = vrot.slane %v223, 5
      %v1124 = vsel %vm1120, %v1122, %v1123
      %v1125 = vrot.slane %v1123, 4
      %v1126 = vrot.slane %v255, 5
      %v1127 = vsel %vm1120, %v1125, %v1126
      %v1128 = vrot.slane %v1071, 5
      %v1129 = vrot.slane %v1128, 4
      %v1130 = vrot.slane %v225, 5
      %v1131 = vsel %vm1120, %v1129, %v1130
      %v1132 = vrot.slane %v1130, 4
      %v1133 = vrot.slane %v256, 5
      %v1134 = vsel %vm1120, %v1132, %v1133
      %v1135 = vrot.slane %v1072, 5
      %v1136 = vrot.slane %v1135, 4
      %v1137 = vrot.slane %v227, 5
      %v1138 = vsel %vm1120, %v1136, %v1137
      %v1139 = vrot.slane %v1137, 4
      %v1140 = vrot.slane %v257, 5
      %v1141 = vsel %vm1120, %v1139, %v1140
      %v1142 = vrot.slane %v1073, 5
      %v1143 = vrot.slane %v1142, 4
      %v1144 = vrot.slane %v229, 5
      %v1145 = vsel %vm1120, %v1143, %v1144
      %v1146 = vrot.slane %v1144, 4
      %v1147 = vrot.slane %v258, 5
      %v1148 = vsel %vm1120, %v1146, %v1147
      %v1149 = vrot.slane %v1074, 5
      %v1150 = vrot.slane %v1149, 4
      %v1151 = vrot.slane %v231, 5
      %v1152 = vsel %vm1120, %v1150, %v1151
      %v1153 = vrot.slane %v1151, 4
      %v1154 = vrot.slane %v259, 5
      %v1155 = vsel %vm1120, %v1153, %v1154
      %v1156 = vrot.slane %v1075, 5
      %v1157 = vrot.slane %v1156, 4
      %v1158 = vrot.slane %v233, 5
      %v1159 = vsel %vm1120, %v1157, %v1158
      %v1160 = vrot.slane %v1158, 4
      %v1161 = vrot.slane %v260, 5
      %v1162 = vsel %vm1120, %v1160, %v1161
      %v1163 = vrot.slane %v1076, 5
      %v1164 = vrot.slane %v1163, 4
      %v1165 = vrot.slane %v235, 5
      %v1166 = vsel %vm1120, %v1164, %v1165
      %v1167 = vrot.slane %v1165, 4
      %v1168 = vrot.slane %v261, 5
      %v1169 = vsel %vm1120, %v1167, %v1168
      %v1170 = vrot.slane %v1077, 5
      %v1171 = vrot.slane %v1170, 4
      %v1172 = vrot.slane %v237, 5
      %v1173 = vsel %vm1120, %v1171, %v1172
      %v1174 = vrot.slane %v1172, 4
      %v1175 = vrot.slane %v262, 5
      %v1176 = vsel %vm1120, %v1174, %v1175
      %v1177 = vrot.slane %v1078, 5
      %v1178 = vrot.slane %v1177, 4
      %v1179 = vrot.slane %v239, 5
      %v1180 = vsel %vm1120, %v1178, %v1179
      %v1181 = vrot.slane %v1179, 4
      %v1182 = vrot.slane %v263, 5
      %v1183 = vsel %vm1120, %v1181, %v1182
      %v1184 = vrot.slane %v1079, 5
      %v1185 = vrot.slane %v1184, 4
      %v1186 = vrot.slane %v241, 5
      %v1187 = vsel %vm1120, %v1185, %v1186
      %v1188 = vrot.slane %v1186, 4
      %v1189 = vrot.slane %v264, 5
      %v1190 = vsel %vm1120, %v1188, %v1189
      %v1191 = vrot.slane %v1080, 5
      %v1192 = vrot.slane %v1191, 4
      %v1193 = vrot.slane %v243, 5
      %v1194 = vsel %vm1120, %v1192, %v1193
      %v1195 = vrot.slane %v1193, 4
      %v1196 = vrot.slane %v265, 5
      %v1197 = vsel %vm1120, %v1195, %v1196
      %v1198 = vrot.slane %v1081, 5
      %v1199 = vrot.slane %v1198, 4
      %v1200 = vrot.slane %v245, 5
      %v1201 = vsel %vm1120, %v1199, %v1200
      %v1202 = vrot.slane %v1200, 4
      %v1203 = vrot.slane %v266, 5
      %v1204 = vsel %vm1120, %v1202, %v1203
      %v1205 = vrot.slane %v1082, 5
      %v1206 = vrot.slane %v1205, 4
      %v1207 = vrot.slane %v247, 5
      %v1208 = vsel %vm1120, %v1206, %v1207
      %v1209 = vrot.slane %v1207, 4
      %v1210 = vrot.slane %v267, 5
      %v1211 = vsel %vm1120, %v1209, %v1210
      %v1212 = vrot.slane %v1083, 5
      %v1213 = vrot.slane %v1212, 4
      %v1214 = vrot.slane %v249, 5
      %v1215 = vsel %vm1120, %v1213, %v1214
      %v1216 = vrot.slane %v1214, 4
      %v1217 = vrot.slane %v268, 5
      %v1218 = vsel %vm1120, %v1216, %v1217
      %v1219 = vrot.slane %v1084, 5
      %v1220 = vrot.slane %v1219, 4
      %v1221 = vrot.slane %v251, 5
      %v1222 = vsel %vm1120, %v1220, %v1221
      %v1223 = vrot.slane %v1221, 4
      %v1224 = vrot.slane %v269, 5
      %v1225 = vsel %vm1120, %v1223, %v1224
      %v1226 = vrot.slane %v1085, 5
      %v1227 = vrot.slane %v1226, 4
      %v1228 = vrot.slane %v253, 5
      %v1229 = vsel %vm1120, %v1227, %v1228
      %v1230 = vrot.slane %v1228, 4
      %v1231 = vrot.slane %v270, 5
      %v1232 = vsel %vm1120, %v1230, %v1231
      %s1233 = scalar_lea.vmem %s1, 4
      %v1234 = vld [vmem:[%s1233] sm:$0x3]
      %v1235 = vunpack.c.l.b16 %v1124
      %v1236 = vunpack.c.l.b16 %v1127
      %v1237 = vunpack.c.l.b16 %v1131
      %v1238 = vunpack.c.l.b16 %v1134
      %v1239 = vunpack.c.l.b16 %v1138
      %v1240 = vunpack.c.l.b16 %v1141
      %v1241 = vunpack.c.l.b16 %v1145
      %v1242 = vunpack.c.l.b16 %v1148
      %v1243 = vunpack.c.l.b16 %v1152
      %v1244 = vunpack.c.l.b16 %v1155
      %v1245 = vunpack.c.l.b16 %v1159
      %v1246 = vunpack.c.l.b16 %v1162
      %v1247 = vunpack.c.l.b16 %v1166
      %v1248 = vunpack.c.l.b16 %v1169
      %v1249 = vunpack.c.l.b16 %v1173
      %v1250 = vunpack.c.l.b16 %v1176
      %v1251 = vunpack.c.l.b16 %v1180
      %v1252 = vunpack.c.l.b16 %v1183
      %v1253 = vunpack.c.l.b16 %v1187
      %v1254 = vunpack.c.l.b16 %v1190
      %v1255 = vunpack.c.l.b16 %v1194
      %v1256 = vunpack.c.l.b16 %v1197
      %v1257 = vunpack.c.l.b16 %v1201
      %v1258 = vunpack.c.l.b16 %v1204
      %v1259 = vunpack.c.l.b16 %v1208
      %v1260 = vunpack.c.l.b16 %v1211
      %v1261 = vunpack.c.l.b16 %v1215
      %v1262 = vunpack.c.l.b16 %v1218
      %v1263 = vunpack.c.l.b16 %v1222
      %v1264 = vunpack.c.l.b16 %v1225
      %v1265 = vunpack.c.l.b16 %v1229
      %v1266 = vunpack.c.l.b16 %v1232
      %v1267 = vpack.c.b16 %v1236, %v1235
      %v1268 = vpack.c.b16 %v1238, %v1237
      %v1269 = vpack.c.b16 %v1240, %v1239
      %v1270 = vpack.c.b16 %v1242, %v1241
      %v1271 = vpack.c.b16 %v1244, %v1243
      %v1272 = vpack.c.b16 %v1246, %v1245
      %v1273 = vpack.c.b16 %v1248, %v1247
      %v1274 = vpack.c.b16 %v1250, %v1249
      %v1275 = vpack.c.b16 %v1252, %v1251
      %v1276 = vpack.c.b16 %v1254, %v1253
      %v1277 = vpack.c.b16 %v1256, %v1255
      %v1278 = vpack.c.b16 %v1258, %v1257
      %v1279 = vpack.c.b16 %v1260, %v1259
      %v1280 = vpack.c.b16 %v1262, %v1261
      %v1281 = vpack.c.b16 %v1264, %v1263
      %v1282 = vpack.c.b16 %v1266, %v1265
      %v1284 = vsel %vm708, %v1267, 0
      %v1287 = vsel %vm708, %v1268, 0
      %v1290 = vsel %vm708, %v1269, 0
      %v1293 = vsel %vm708, %v1270, 0
      %v1296 = vsel %vm708, %v1271, 0
      %v1299 = vsel %vm708, %v1272, 0
      %v1302 = vsel %vm708, %v1273, 0
      %v1305 = vsel %vm708, %v1274, 0
      %v1308 = vsel %vm708, %v1275, 0
      %v1311 = vsel %vm708, %v1276, 0
      %v1314 = vsel %vm708, %v1277, 0
      %v1317 = vsel %vm708, %v1278, 0
      %v1320 = vsel %vm708, %v1279, 0
      %v1323 = vsel %vm708, %v1280, 0
      %v1326 = vsel %vm708, %v1281, 0
      %v1329 = vsel %vm708, %v1282, 0
      %v1332 = vsel %vm757, %v1234, 0
      %1334 = vmatpush.bf16.msra.mxu0 0
      %1335 = vmatpush.bf16.msra.mxu0 0
      %1336 = vmatpush.bf16.msra.mxu0 0
      %1337 = vmatpush.bf16.msra.mxu0 0
      %1338 = vmatpush.bf16.msra.mxu0 0
      %1339 = vmatpush.bf16.msra.mxu0 0
      %1340 = vmatpush.bf16.msra.mxu0 0
      %1341 = vmatpush.bf16.msra.mxu0 %v1332
      %1342 = vmatmul.bf16.gmra.mxu0 %v1284
      %v1343 = vpop.f32.mrf.mxu0
      %v1344 = vadd.f32 0.0, %v1343
      %v1345 = vpop.f32.mrf.mxu0
      %v1346 = vadd.f32 0.0, %v1345
      %1347 = vmatmul.bf16.gmra.mxu0 %v1287
      %v1348 = vpop.f32.mrf.mxu0
      %v1349 = vadd.f32 0.0, %v1348
      %v1350 = vpop.f32.mrf.mxu0
      %v1351 = vadd.f32 0.0, %v1350
      %1352 = vmatmul.bf16.gmra.mxu0 %v1290
      %v1353 = vpop.f32.mrf.mxu0
      %v1354 = vadd.f32 0.0, %v1353
      %v1355 = vpop.f32.mrf.mxu0
      %v1356 = vadd.f32 0.0, %v1355
      %1357 = vmatmul.bf16.gmra.mxu0 %v1293
      %v1358 = vpop.f32.mrf.mxu0
      %v1359 = vadd.f32 0.0, %v1358
      %v1360 = vpop.f32.mrf.mxu0
      %v1361 = vadd.f32 0.0, %v1360
      %1362 = vmatmul.bf16.gmra.mxu0 %v1296
      %v1363 = vpop.f32.mrf.mxu0
      %v1364 = vadd.f32 0.0, %v1363
      %v1365 = vpop.f32.mrf.mxu0
      %v1366 = vadd.f32 0.0, %v1365
      %1367 = vmatmul.bf16.gmra.mxu0 %v1299
      %v1368 = vpop.f32.mrf.mxu0
      %v1369 = vadd.f32 0.0, %v1368
      %v1370 = vpop.f32.mrf.mxu0
      %v1371 = vadd.f32 0.0, %v1370
      %1372 = vmatmul.bf16.gmra.mxu0 %v1302
      %v1373 = vpop.f32.mrf.mxu0
      %v1374 = vadd.f32 0.0, %v1373
      %v1375 = vpop.f32.mrf.mxu0
      %v1376 = vadd.f32 0.0, %v1375
      %1377 = vmatmul.bf16.gmra.mxu0 %v1305
      %v1378 = vpop.f32.mrf.mxu0
      %v1379 = vadd.f32 0.0, %v1378
      %v1380 = vpop.f32.mrf.mxu0
      %v1381 = vadd.f32 0.0, %v1380
      %1382 = vmatmul.bf16.gmra.mxu0 %v1308
      %v1383 = vpop.f32.mrf.mxu0
      %v1384 = vadd.f32 0.0, %v1383
      %v1385 = vpop.f32.mrf.mxu0
      %v1386 = vadd.f32 0.0, %v1385
      %1387 = vmatmul.bf16.gmra.mxu0 %v1311
      %v1388 = vpop.f32.mrf.mxu0
      %v1389 = vadd.f32 0.0, %v1388
      %v1390 = vpop.f32.mrf.mxu0
      %v1391 = vadd.f32 0.0, %v1390
      %1392 = vmatmul.bf16.gmra.mxu0 %v1314
      %v1393 = vpop.f32.mrf.mxu0
      %v1394 = vadd.f32 0.0, %v1393
      %v1395 = vpop.f32.mrf.mxu0
      %v1396 = vadd.f32 0.0, %v1395
      %1397 = vmatmul.bf16.gmra.mxu0 %v1317
      %v1398 = vpop.f32.mrf.mxu0
      %v1399 = vadd.f32 0.0, %v1398
      %v1400 = vpop.f32.mrf.mxu0
      %v1401 = vadd.f32 0.0, %v1400
      %1402 = vmatmul.bf16.gmra.mxu0 %v1320
      %v1403 = vpop.f32.mrf.mxu0
      %v1404 = vadd.f32 0.0, %v1403
      %v1405 = vpop.f32.mrf.mxu0
      %v1406 = vadd.f32 0.0, %v1405
      %1407 = vmatmul.bf16.gmra.mxu0 %v1323
      %v1408 = vpop.f32.mrf.mxu0
      %v1409 = vadd.f32 0.0, %v1408
      %v1410 = vpop.f32.mrf.mxu0
      %v1411 = vadd.f32 0.0, %v1410
      %1412 = vmatmul.bf16.gmra.mxu0 %v1326
      %v1413 = vpop.f32.mrf.mxu0
      %v1414 = vadd.f32 0.0, %v1413
      %v1415 = vpop.f32.mrf.mxu0
      %v1416 = vadd.f32 0.0, %v1415
      %1417 = vmatmul.bf16.gmra.mxu0 %v1329
      %v1418 = vpop.f32.mrf.mxu0
      %v1419 = vadd.f32 0.0, %v1418
      %v1420 = vpop.f32.mrf.mxu0
      %v1421 = vadd.f32 0.0, %v1420
      %1422 = vdwg.mxu0
      %v1423 = vadd.f32 %v991, %v1344
      %v1424 = vadd.f32 %v993, %v1346
      %v1425 = vadd.f32 %v996, %v1349
      %v1426 = vadd.f32 %v998, %v1351
      %v1427 = vadd.f32 %v1001, %v1354
      %v1428 = vadd.f32 %v1003, %v1356
      %v1429 = vadd.f32 %v1006, %v1359
      %v1430 = vadd.f32 %v1008, %v1361
      %v1431 = vadd.f32 %v1011, %v1364
      %v1432 = vadd.f32 %v1013, %v1366
      %v1433 = vadd.f32 %v1016, %v1369
      %v1434 = vadd.f32 %v1018, %v1371
      %v1435 = vadd.f32 %v1021, %v1374
      %v1436 = vadd.f32 %v1023, %v1376
      %v1437 = vadd.f32 %v1026, %v1379
      %v1438 = vadd.f32 %v1028, %v1381
      %v1439 = vadd.f32 %v1031, %v1384
      %v1440 = vadd.f32 %v1033, %v1386
      %v1441 = vadd.f32 %v1036, %v1389
      %v1442 = vadd.f32 %v1038, %v1391
      %v1443 = vadd.f32 %v1041, %v1394
      %v1444 = vadd.f32 %v1043, %v1396
      %v1445 = vadd.f32 %v1046, %v1399
      %v1446 = vadd.f32 %v1048, %v1401
      %v1447 = vadd.f32 %v1051, %v1404
      %v1448 = vadd.f32 %v1053, %v1406
      %v1449 = vadd.f32 %v1056, %v1409
      %v1450 = vadd.f32 %v1058, %v1411
      %v1451 = vadd.f32 %v1061, %v1414
      %v1452 = vadd.f32 %v1063, %v1416
      %v1453 = vadd.f32 %v1066, %v1419
      %v1454 = vadd.f32 %v1068, %v1421
      %s1455 = scalar_lea.vmem %s217, 12
      %v1456 = vld [vmem:[%s1455] sm:$0xf]
      %v1457 = vld [vmem:[%s1455 + $0x4] sm:$0xf]
      %v1458 = vld [vmem:[%s1455 + $0xc] sm:$0xf]
      %v1459 = vld [vmem:[%s1455 + $0x10] sm:$0xf]
      %v1460 = vld [vmem:[%s1455 + $0x18] sm:$0xf]
      %v1461 = vld [vmem:[%s1455 + $0x1c] sm:$0xf]
      %v1462 = vld [vmem:[%s1455 + $0x24] sm:$0xf]
      %v1463 = vld [vmem:[%s1455 + $0x28] sm:$0xf]
      %v1464 = vld [vmem:[%s1455 + $0x30] sm:$0xf]
      %v1465 = vld [vmem:[%s1455 + $0x34] sm:$0xf]
      %v1466 = vld [vmem:[%s1455 + $0x3c] sm:$0xf]
      %v1467 = vld [vmem:[%s1455 + $0x40] sm:$0xf]
      %v1468 = vld [vmem:[%s1455 + $0x48] sm:$0xf]
      %v1469 = vld [vmem:[%s1455 + $0x4c] sm:$0xf]
      %v1470 = vld [vmem:[%s1455 + $0x54] sm:$0xf]
      %v1471 = vld [vmem:[%s1455 + $0x58] sm:$0xf]
      %v1472 = vld [vmem:[%s1455 + $0x60] sm:$0xf]
      %v1473 = vld [vmem:[%s1455 + $0x64] sm:$0xf]
      %v1474 = vld [vmem:[%s1455 + $0x6c] sm:$0xf]
      %v1475 = vld [vmem:[%s1455 + $0x70] sm:$0xf]
      %v1476 = vld [vmem:[%s1455 + $0x78] sm:$0xf]
      %v1477 = vld [vmem:[%s1455 + $0x7c] sm:$0xf]
      %v1478 = vld [vmem:[%s1455 + $0x84] sm:$0xf]
      %v1479 = vld [vmem:[%s1455 + $0x88] sm:$0xf]
      %v1480 = vld [vmem:[%s1455 + $0x90] sm:$0xf]
      %v1481 = vld [vmem:[%s1455 + $0x94] sm:$0xf]
      %v1482 = vld [vmem:[%s1455 + $0x9c] sm:$0xf]
      %v1483 = vld [vmem:[%s1455 + $0xa0] sm:$0xf]
      %v1484 = vld [vmem:[%s1455 + $0xa8] sm:$0xf]
      %v1485 = vld [vmem:[%s1455 + $0xac] sm:$0xf]
      %v1486 = vld [vmem:[%s1455 + $0xb4] sm:$0xf]
      %v1487 = vld [vmem:[%s1455 + $0xb8] sm:$0xf]
      %s1488 = scalar_lea.vmem %s1, 6
      %v1489 = vld [vmem:[%s1488] sm:$0x3]
      %v1522 = vunpack.c.l.b16 %v1456
      %v1523 = vunpack.c.l.b16 %v1457
      %v1524 = vunpack.c.l.b16 %v1458
      %v1525 = vunpack.c.l.b16 %v1459
      %v1526 = vunpack.c.l.b16 %v1460
      %v1527 = vunpack.c.l.b16 %v1461
      %v1528 = vunpack.c.l.b16 %v1462
      %v1529 = vunpack.c.l.b16 %v1463
      %v1530 = vunpack.c.l.b16 %v1464
      %v1531 = vunpack.c.l.b16 %v1465
      %v1532 = vunpack.c.l.b16 %v1466
      %v1533 = vunpack.c.l.b16 %v1467
      %v1534 = vunpack.c.l.b16 %v1468
      %v1535 = vunpack.c.l.b16 %v1469
      %v1536 = vunpack.c.l.b16 %v1470
      %v1537 = vunpack.c.l.b16 %v1471
      %v1538 = vunpack.c.l.b16 %v1472
      %v1539 = vunpack.c.l.b16 %v1473
      %v1540 = vunpack.c.l.b16 %v1474
      %v1541 = vunpack.c.l.b16 %v1475
      %v1542 = vunpack.c.l.b16 %v1476
      %v1543 = vunpack.c.l.b16 %v1477
      %v1544 = vunpack.c.l.b16 %v1478
      %v1545 = vunpack.c.l.b16 %v1479
      %v1546 = vunpack.c.l.b16 %v1480
      %v1547 = vunpack.c.l.b16 %v1481
      %v1548 = vunpack.c.l.b16 %v1482
      %v1549 = vunpack.c.l.b16 %v1483
      %v1550 = vunpack.c.l.b16 %v1484
      %v1551 = vunpack.c.l.b16 %v1485
      %v1552 = vunpack.c.l.b16 %v1486
      %v1553 = vunpack.c.l.b16 %v1487
      %v1554 = vpack.c.b16 %v1523, %v1522
      %v1555 = vpack.c.b16 %v1525, %v1524
      %v1556 = vpack.c.b16 %v1527, %v1526
      %v1557 = vpack.c.b16 %v1529, %v1528
      %v1558 = vpack.c.b16 %v1531, %v1530
      %v1559 = vpack.c.b16 %v1533, %v1532
      %v1560 = vpack.c.b16 %v1535, %v1534
      %v1561 = vpack.c.b16 %v1537, %v1536
      %v1562 = vpack.c.b16 %v1539, %v1538
      %v1563 = vpack.c.b16 %v1541, %v1540
      %v1564 = vpack.c.b16 %v1543, %v1542
      %v1565 = vpack.c.b16 %v1545, %v1544
      %v1566 = vpack.c.b16 %v1547, %v1546
      %v1567 = vpack.c.b16 %v1549, %v1548
      %v1568 = vpack.c.b16 %v1551, %v1550
      %v1569 = vpack.c.b16 %v1553, %v1552
      %v1571 = vsel %vm708, %v1554, 0
      %v1574 = vsel %vm708, %v1555, 0
      %v1577 = vsel %vm708, %v1556, 0
      %v1580 = vsel %vm708, %v1557, 0
      %v1583 = vsel %vm708, %v1558, 0
      %v1586 = vsel %vm708, %v1559, 0
      %v1589 = vsel %vm708, %v1560, 0
      %v1592 = vsel %vm708, %v1561, 0
      %v1595 = vsel %vm708, %v1562, 0
      %v1598 = vsel %vm708, %v1563, 0
      %v1601 = vsel %vm708, %v1564, 0
      %v1604 = vsel %vm708, %v1565, 0
      %v1607 = vsel %vm708, %v1566, 0
      %v1610 = vsel %vm708, %v1567, 0
      %v1613 = vsel %vm708, %v1568, 0
      %v1616 = vsel %vm708, %v1569, 0
      %v1619 = vsel %vm757, %v1489, 0
      %1621 = vmatpush.bf16.msra.mxu0 0
      %1622 = vmatpush.bf16.msra.mxu0 0
      %1623 = vmatpush.bf16.msra.mxu0 0
      %1624 = vmatpush.bf16.msra.mxu0 0
      %1625 = vmatpush.bf16.msra.mxu0 0
      %1626 = vmatpush.bf16.msra.mxu0 0
      %1627 = vmatpush.bf16.msra.mxu0 0
      %1628 = vmatpush.bf16.msra.mxu0 %v1619
      %1629 = vmatmul.bf16.gmra.mxu0 %v1571
      %v1630 = vpop.f32.mrf.mxu0
      %v1631 = vadd.f32 0.0, %v1630
      %v1632 = vpop.f32.mrf.mxu0
      %v1633 = vadd.f32 0.0, %v1632
      %1634 = vmatmul.bf16.gmra.mxu0 %v1574
      %v1635 = vpop.f32.mrf.mxu0
      %v1636 = vadd.f32 0.0, %v1635
      %v1637 = vpop.f32.mrf.mxu0
      %v1638 = vadd.f32 0.0, %v1637
      %1639 = vmatmul.bf16.gmra.mxu0 %v1577
      %v1640 = vpop.f32.mrf.mxu0
      %v1641 = vadd.f32 0.0, %v1640
      %v1642 = vpop.f32.mrf.mxu0
      %v1643 = vadd.f32 0.0, %v1642
      %1644 = vmatmul.bf16.gmra.mxu0 %v1580
      %v1645 = vpop.f32.mrf.mxu0
      %v1646 = vadd.f32 0.0, %v1645
      %v1647 = vpop.f32.mrf.mxu0
      %v1648 = vadd.f32 0.0, %v1647
      %1649 = vmatmul.bf16.gmra.mxu0 %v1583
      %v1650 = vpop.f32.mrf.mxu0
      %v1651 = vadd.f32 0.0, %v1650
      %v1652 = vpop.f32.mrf.mxu0
      %v1653 = vadd.f32 0.0, %v1652
      %1654 = vmatmul.bf16.gmra.mxu0 %v1586
      %v1655 = vpop.f32.mrf.mxu0
      %v1656 = vadd.f32 0.0, %v1655
      %v1657 = vpop.f32.mrf.mxu0
      %v1658 = vadd.f32 0.0, %v1657
      %1659 = vmatmul.bf16.gmra.mxu0 %v1589
      %v1660 = vpop.f32.mrf.mxu0
      %v1661 = vadd.f32 0.0, %v1660
      %v1662 = vpop.f32.mrf.mxu0
      %v1663 = vadd.f32 0.0, %v1662
      %1664 = vmatmul.bf16.gmra.mxu0 %v1592
      %v1665 = vpop.f32.mrf.mxu0
      %v1666 = vadd.f32 0.0, %v1665
      %v1667 = vpop.f32.mrf.mxu0
      %v1668 = vadd.f32 0.0, %v1667
      %1669 = vmatmul.bf16.gmra.mxu0 %v1595
      %v1670 = vpop.f32.mrf.mxu0
      %v1671 = vadd.f32 0.0, %v1670
      %v1672 = vpop.f32.mrf.mxu0
      %v1673 = vadd.f32 0.0, %v1672
      %1674 = vmatmul.bf16.gmra.mxu0 %v1598
      %v1675 = vpop.f32.mrf.mxu0
      %v1676 = vadd.f32 0.0, %v1675
      %v1677 = vpop.f32.mrf.mxu0
      %v1678 = vadd.f32 0.0, %v1677
      %1679 = vmatmul.bf16.gmra.mxu0 %v1601
      %v1680 = vpop.f32.mrf.mxu0
      %v1681 = vadd.f32 0.0, %v1680
      %v1682 = vpop.f32.mrf.mxu0
      %v1683 = vadd.f32 0.0, %v1682
      %1684 = vmatmul.bf16.gmra.mxu0 %v1604
      %v1685 = vpop.f32.mrf.mxu0
      %v1686 = vadd.f32 0.0, %v1685
      %v1687 = vpop.f32.mrf.mxu0
      %v1688 = vadd.f32 0.0, %v1687
      %1689 = vmatmul.bf16.gmra.mxu0 %v1607
      %v1690 = vpop.f32.mrf.mxu0
      %v1691 = vadd.f32 0.0, %v1690
      %v1692 = vpop.f32.mrf.mxu0
      %v1693 = vadd.f32 0.0, %v1692
      %1694 = vmatmul.bf16.gmra.mxu0 %v1610
      %v1695 = vpop.f32.mrf.mxu0
      %v1696 = vadd.f32 0.0, %v1695
      %v1697 = vpop.f32.mrf.mxu0
      %v1698 = vadd.f32 0.0, %v1697
      %1699 = vmatmul.bf16.gmra.mxu0 %v1613
      %v1700 = vpop.f32.mrf.mxu0
      %v1701 = vadd.f32 0.0, %v1700
      %v1702 = vpop.f32.mrf.mxu0
      %v1703 = vadd.f32 0.0, %v1702
      %1704 = vmatmul.bf16.gmra.mxu0 %v1616
      %v1705 = vpop.f32.mrf.mxu0
      %v1706 = vadd.f32 0.0, %v1705
      %v1707 = vpop.f32.mrf.mxu0
      %v1708 = vadd.f32 0.0, %v1707
      %1709 = vdwg.mxu0
      %v1710 = vadd.f32 %v1423, %v1631
      %v1711 = vadd.f32 %v1424, %v1633
      %v1712 = vadd.f32 %v1425, %v1636
      %v1713 = vadd.f32 %v1426, %v1638
      %v1714 = vadd.f32 %v1427, %v1641
      %v1715 = vadd.f32 %v1428, %v1643
      %v1716 = vadd.f32 %v1429, %v1646
      %v1717 = vadd.f32 %v1430, %v1648
      %v1718 = vadd.f32 %v1431, %v1651
      %v1719 = vadd.f32 %v1432, %v1653
      %v1720 = vadd.f32 %v1433, %v1656
      %v1721 = vadd.f32 %v1434, %v1658
      %v1722 = vadd.f32 %v1435, %v1661
      %v1723 = vadd.f32 %v1436, %v1663
      %v1724 = vadd.f32 %v1437, %v1666
      %v1725 = vadd.f32 %v1438, %v1668
      %v1726 = vadd.f32 %v1439, %v1671
      %v1727 = vadd.f32 %v1440, %v1673
      %v1728 = vadd.f32 %v1441, %v1676
      %v1729 = vadd.f32 %v1442, %v1678
      %v1730 = vadd.f32 %v1443, %v1681
      %v1731 = vadd.f32 %v1444, %v1683
      %v1732 = vadd.f32 %v1445, %v1686
      %v1733 = vadd.f32 %v1446, %v1688
      %v1734 = vadd.f32 %v1447, %v1691
      %v1735 = vadd.f32 %v1448, %v1693
      %v1736 = vadd.f32 %v1449, %v1696
      %v1737 = vadd.f32 %v1450, %v1698
      %v1738 = vadd.f32 %v1451, %v1701
      %v1739 = vadd.f32 %v1452, %v1703
      %v1740 = vadd.f32 %v1453, %v1706
      %v1741 = vadd.f32 %v1454, %v1708
      %v1742 = vld [vmem:[%s1455] sm:$0xf]
      %v1743 = vld [vmem:[%s1455 + $0x4] sm:$0xf]
      %v1744 = vld [vmem:[%s1455 + $0x8] sm:$0x1]
      %v1745 = vld [vmem:[%s1455 + $0xc] sm:$0xf]
      %v1746 = vld [vmem:[%s1455 + $0x10] sm:$0xf]
      %v1747 = vld [vmem:[%s1455 + $0x14] sm:$0x1]
      %v1748 = vld [vmem:[%s1455 + $0x18] sm:$0xf]
      %v1749 = vld [vmem:[%s1455 + $0x1c] sm:$0xf]
      %v1750 = vld [vmem:[%s1455 + $0x20] sm:$0x1]
      %v1751 = vld [vmem:[%s1455 + $0x24] sm:$0xf]
      %v1752 = vld [vmem:[%s1455 + $0x28] sm:$0xf]
      %v1753 = vld [vmem:[%s1455 + $0x2c] sm:$0x1]
      %v1754 = vld [vmem:[%s1455 + $0x30] sm:$0xf]
      %v1755 = vld [vmem:[%s1455 + $0x34] sm:$0xf]
      %v1756 = vld [vmem:[%s1455 + $0x38] sm:$0x1]
      %v1757 = vld [vmem:[%s1455 + $0x3c] sm:$0xf]
      %v1758 = vld [vmem:[%s1455 + $0x40] sm:$0xf]
      %v1759 = vld [vmem:[%s1455 + $0x44] sm:$0x1]
      %v1760 = vld [vmem:[%s1455 + $0x48] sm:$0xf]
      %v1761 = vld [vmem:[%s1455 + $0x4c] sm:$0xf]
      %v1762 = vld [vmem:[%s1455 + $0x50] sm:$0x1]
      %v1763 = vld [vmem:[%s1455 + $0x54] sm:$0xf]
      %v1764 = vld [vmem:[%s1455 + $0x58] sm:$0xf]
      %v1765 = vld [vmem:[%s1455 + $0x5c] sm:$0x1]
      %v1766 = vld [vmem:[%s1455 + $0x60] sm:$0xf]
      %v1767 = vld [vmem:[%s1455 + $0x64] sm:$0xf]
      %v1768 = vld [vmem:[%s1455 + $0x68] sm:$0x1]
      %v1769 = vld [vmem:[%s1455 + $0x6c] sm:$0xf]
      %v1770 = vld [vmem:[%s1455 + $0x70] sm:$0xf]
      %v1771 = vld [vmem:[%s1455 + $0x74] sm:$0x1]
      %v1772 = vld [vmem:[%s1455 + $0x78] sm:$0xf]
      %v1773 = vld [vmem:[%s1455 + $0x7c] sm:$0xf]
      %v1774 = vld [vmem:[%s1455 + $0x80] sm:$0x1]
      %v1775 = vld [vmem:[%s1455 + $0x84] sm:$0xf]
      %v1776 = vld [vmem:[%s1455 + $0x88] sm:$0xf]
      %v1777 = vld [vmem:[%s1455 + $0x8c] sm:$0x1]
      %v1778 = vld [vmem:[%s1455 + $0x90] sm:$0xf]
      %v1779 = vld [vmem:[%s1455 + $0x94] sm:$0xf]
      %v1780 = vld [vmem:[%s1455 + $0x98] sm:$0x1]
      %v1781 = vld [vmem:[%s1455 + $0x9c] sm:$0xf]
      %v1782 = vld [vmem:[%s1455 + $0xa0] sm:$0xf]
      %v1783 = vld [vmem:[%s1455 + $0xa4] sm:$0x1]
      %v1784 = vld [vmem:[%s1455 + $0xa8] sm:$0xf]
      %v1785 = vld [vmem:[%s1455 + $0xac] sm:$0xf]
      %v1786 = vld [vmem:[%s1455 + $0xb0] sm:$0x1]
      %v1787 = vld [vmem:[%s1455 + $0xb4] sm:$0xf]
      %v1788 = vld [vmem:[%s1455 + $0xb8] sm:$0xf]
      %v1789 = vld [vmem:[%s1455 + $0xbc] sm:$0x1]
      %v1791 = vshrl.u32 %v1742, 16
      %v1793 = vrot.slane %v1791, 4
      %v1794 = vshll.u32 %v1742, 16
      %v1796 = vrot.slane %v1794, 5
      %v1797 = vor.u32 %v1793, %v1796
      %v1798 = vrot.slane %v1797, 4
      %v1800 = vshll.u32 %v1743, 16
      %v1802 = vrot.slane %v1800, 5
      %v1803 = vsel %vm273, %v1798, %v1802
      %v1804 = vshrl.u32 %v1743, 16
      %v1806 = vrot.slane %v1804, 4
      %v1807 = vor.u32 %v1806, %v1802
      %v1808 = vrot.slane %v1807, 4
      %v1810 = vshll.u32 %v1744, 16
      %v1812 = vrot.slane %v1810, 5
      %v1813 = vsel %vm273, %v1808, %v1812
      %v1815 = vshrl.u32 %v1745, 16
      %v1817 = vrot.slane %v1815, 4
      %v1818 = vshll.u32 %v1745, 16
      %v1820 = vrot.slane %v1818, 5
      %v1821 = vor.u32 %v1817, %v1820
      %v1822 = vrot.slane %v1821, 4
      %v1824 = vshll.u32 %v1746, 16
      %v1826 = vrot.slane %v1824, 5
      %v1827 = vsel %vm273, %v1822, %v1826
      %v1828 = vshrl.u32 %v1746, 16
      %v1830 = vrot.slane %v1828, 4
      %v1831 = vor.u32 %v1830, %v1826
      %v1832 = vrot.slane %v1831, 4
      %v1834 = vshll.u32 %v1747, 16
      %v1836 = vrot.slane %v1834, 5
      %v1837 = vsel %vm273, %v1832, %v1836
      %v1839 = vshrl.u32 %v1748, 16
      %v1841 = vrot.slane %v1839, 4
      %v1842 = vshll.u32 %v1748, 16
      %v1844 = vrot.slane %v1842, 5
      %v1845 = vor.u32 %v1841, %v1844
      %v1846 = vrot.slane %v1845, 4
      %v1848 = vshll.u32 %v1749, 16
      %v1850 = vrot.slane %v1848, 5
      %v1851 = vsel %vm273, %v1846, %v1850
      %v1852 = vshrl.u32 %v1749, 16
      %v1854 = vrot.slane %v1852, 4
      %v1855 = vor.u32 %v1854, %v1850
      %v1856 = vrot.slane %v1855, 4
      %v1858 = vshll.u32 %v1750, 16
      %v1860 = vrot.slane %v1858, 5
      %v1861 = vsel %vm273, %v1856, %v1860
      %v1863 = vshrl.u32 %v1751, 16
      %v1865 = vrot.slane %v1863, 4
      %v1866 = vshll.u32 %v1751, 16
      %v1868 = vrot.slane %v1866, 5
      %v1869 = vor.u32 %v1865, %v1868
      %v1870 = vrot.slane %v1869, 4
      %v1872 = vshll.u32 %v1752, 16
      %v1874 = vrot.slane %v1872, 5
      %v1875 = vsel %vm273, %v1870, %v1874
      %v1876 = vshrl.u32 %v1752, 16
      %v1878 = vrot.slane %v1876, 4
      %v1879 = vor.u32 %v1878, %v1874
      %v1880 = vrot.slane %v1879, 4
      %v1882 = vshll.u32 %v1753, 16
      %v1884 = vrot.slane %v1882, 5
      %v1885 = vsel %vm273, %v1880, %v1884
      %v1887 = vshrl.u32 %v1754, 16
      %v1889 = vrot.slane %v1887, 4
      %v1890 = vshll.u32 %v1754, 16
      %v1892 = vrot.slane %v1890, 5
      %v1893 = vor.u32 %v1889, %v1892
      %v1894 = vrot.slane %v1893, 4
      %v1896 = vshll.u32 %v1755, 16
      %v1898 = vrot.slane %v1896, 5
      %v1899 = vsel %vm273, %v1894, %v1898
      %v1900 = vshrl.u32 %v1755, 16
      %v1902 = vrot.slane %v1900, 4
      %v1903 = vor.u32 %v1902, %v1898
      %v1904 = vrot.slane %v1903, 4
      %v1906 = vshll.u32 %v1756, 16
      %v1908 = vrot.slane %v1906, 5
      %v1909 = vsel %vm273, %v1904, %v1908
      %v1911 = vshrl.u32 %v1757, 16
      %v1913 = vrot.slane %v1911, 4
      %v1914 = vshll.u32 %v1757, 16
      %v1916 = vrot.slane %v1914, 5
      %v1917 = vor.u32 %v1913, %v1916
      %v1918 = vrot.slane %v1917, 4
      %v1920 = vshll.u32 %v1758, 16
      %v1922 = vrot.slane %v1920, 5
      %v1923 = vsel %vm273, %v1918, %v1922
      %v1924 = vshrl.u32 %v1758, 16
      %v1926 = vrot.slane %v1924, 4
      %v1927 = vor.u32 %v1926, %v1922
      %v1928 = vrot.slane %v1927, 4
      %v1930 = vshll.u32 %v1759, 16
      %v1932 = vrot.slane %v1930, 5
      %v1933 = vsel %vm273, %v1928, %v1932
      %v1935 = vshrl.u32 %v1760, 16
      %v1937 = vrot.slane %v1935, 4
      %v1938 = vshll.u32 %v1760, 16
      %v1940 = vrot.slane %v1938, 5
      %v1941 = vor.u32 %v1937, %v1940
      %v1942 = vrot.slane %v1941, 4
      %v1944 = vshll.u32 %v1761, 16
      %v1946 = vrot.slane %v1944, 5
      %v1947 = vsel %vm273, %v1942, %v1946
      %v1948 = vshrl.u32 %v1761, 16
      %v1950 = vrot.slane %v1948, 4
      %v1951 = vor.u32 %v1950, %v1946
      %v1952 = vrot.slane %v1951, 4
      %v1954 = vshll.u32 %v1762, 16
      %v1956 = vrot.slane %v1954, 5
      %v1957 = vsel %vm273, %v1952, %v1956
      %v1959 = vshrl.u32 %v1763, 16
      %v1961 = vrot.slane %v1959, 4
      %v1962 = vshll.u32 %v1763, 16
      %v1964 = vrot.slane %v1962, 5
      %v1965 = vor.u32 %v1961, %v1964
      %v1966 = vrot.slane %v1965, 4
      %v1968 = vshll.u32 %v1764, 16
      %v1970 = vrot.slane %v1968, 5
      %v1971 = vsel %vm273, %v1966, %v1970
      %v1972 = vshrl.u32 %v1764, 16
      %v1974 = vrot.slane %v1972, 4
      %v1975 = vor.u32 %v1974, %v1970
      %v1976 = vrot.slane %v1975, 4
      %v1978 = vshll.u32 %v1765, 16
      %v1980 = vrot.slane %v1978, 5
      %v1981 = vsel %vm273, %v1976, %v1980
      %v1983 = vshrl.u32 %v1766, 16
      %v1985 = vrot.slane %v1983, 4
      %v1986 = vshll.u32 %v1766, 16
      %v1988 = vrot.slane %v1986, 5
      %v1989 = vor.u32 %v1985, %v1988
      %v1990 = vrot.slane %v1989, 4
      %v1992 = vshll.u32 %v1767, 16
      %v1994 = vrot.slane %v1992, 5
      %v1995 = vsel %vm273, %v1990, %v1994
      %v1996 = vshrl.u32 %v1767, 16
      %v1998 = vrot.slane %v1996, 4
      %v1999 = vor.u32 %v1998, %v1994
      %v2000 = vrot.slane %v1999, 4
      %v2002 = vshll.u32 %v1768, 16
      %v2004 = vrot.slane %v2002, 5
      %v2005 = vsel %vm273, %v2000, %v2004
      %v2007 = vshrl.u32 %v1769, 16
      %v2009 = vrot.slane %v2007, 4
      %v2010 = vshll.u32 %v1769, 16
      %v2012 = vrot.slane %v2010, 5
      %v2013 = vor.u32 %v2009, %v2012
      %v2014 = vrot.slane %v2013, 4
      %v2016 = vshll.u32 %v1770, 16
      %v2018 = vrot.slane %v2016, 5
      %v2019 = vsel %vm273, %v2014, %v2018
      %v2020 = vshrl.u32 %v1770, 16
      %v2022 = vrot.slane %v2020, 4
      %v2023 = vor.u32 %v2022, %v2018
      %v2024 = vrot.slane %v2023, 4
      %v2026 = vshll.u32 %v1771, 16
      %v2028 = vrot.slane %v2026, 5
      %v2029 = vsel %vm273, %v2024, %v2028
      %v2031 = vshrl.u32 %v1772, 16
      %v2033 = vrot.slane %v2031, 4
      %v2034 = vshll.u32 %v1772, 16
      %v2036 = vrot.slane %v2034, 5
      %v2037 = vor.u32 %v2033, %v2036
      %v2038 = vrot.slane %v2037, 4
      %v2040 = vshll.u32 %v1773, 16
      %v2042 = vrot.slane %v2040, 5
      %v2043 = vsel %vm273, %v2038, %v2042
      %v2044 = vshrl.u32 %v1773, 16
      %v2046 = vrot.slane %v2044, 4
      %v2047 = vor.u32 %v2046, %v2042
      %v2048 = vrot.slane %v2047, 4
      %v2050 = vshll.u32 %v1774, 16
      %v2052 = vrot.slane %v2050, 5
      %v2053 = vsel %vm273, %v2048, %v2052
      %v2055 = vshrl.u32 %v1775, 16
      %v2057 = vrot.slane %v2055, 4
      %v2058 = vshll.u32 %v1775, 16
      %v2060 = vrot.slane %v2058, 5
      %v2061 = vor.u32 %v2057, %v2060
      %v2062 = vrot.slane %v2061, 4
      %v2064 = vshll.u32 %v1776, 16
      %v2066 = vrot.slane %v2064, 5
      %v2067 = vsel %vm273, %v2062, %v2066
      %v2068 = vshrl.u32 %v1776, 16
      %v2070 = vrot.slane %v2068, 4
      %v2071 = vor.u32 %v2070, %v2066
      %v2072 = vrot.slane %v2071, 4
      %v2074 = vshll.u32 %v1777, 16
      %v2076 = vrot.slane %v2074, 5
      %v2077 = vsel %vm273, %v2072, %v2076
      %v2079 = vshrl.u32 %v1778, 16
      %v2081 = vrot.slane %v2079, 4
      %v2082 = vshll.u32 %v1778, 16
      %v2084 = vrot.slane %v2082, 5
      %v2085 = vor.u32 %v2081, %v2084
      %v2086 = vrot.slane %v2085, 4
      %v2088 = vshll.u32 %v1779, 16
      %v2090 = vrot.slane %v2088, 5
      %v2091 = vsel %vm273, %v2086, %v2090
      %v2092 = vshrl.u32 %v1779, 16
      %v2094 = vrot.slane %v2092, 4
      %v2095 = vor.u32 %v2094, %v2090
      %v2096 = vrot.slane %v2095, 4
      %v2098 = vshll.u32 %v1780, 16
      %v2100 = vrot.slane %v2098, 5
      %v2101 = vsel %vm273, %v2096, %v2100
      %v2103 = vshrl.u32 %v1781, 16
      %v2105 = vrot.slane %v2103, 4
      %v2106 = vshll.u32 %v1781, 16
      %v2108 = vrot.slane %v2106, 5
      %v2109 = vor.u32 %v2105, %v2108
      %v2110 = vrot.slane %v2109, 4
      %v2112 = vshll.u32 %v1782, 16
      %v2114 = vrot.slane %v2112, 5
      %v2115 = vsel %vm273, %v2110, %v2114
      %v2116 = vshrl.u32 %v1782, 16
      %v2118 = vrot.slane %v2116, 4
      %v2119 = vor.u32 %v2118, %v2114
      %v2120 = vrot.slane %v2119, 4
      %v2122 = vshll.u32 %v1783, 16
      %v2124 = vrot.slane %v2122, 5
      %v2125 = vsel %vm273, %v2120, %v2124
      %v2127 = vshrl.u32 %v1784, 16
      %v2129 = vrot.slane %v2127, 4
      %v2130 = vshll.u32 %v1784, 16
      %v2132 = vrot.slane %v2130, 5
      %v2133 = vor.u32 %v2129, %v2132
      %v2134 = vrot.slane %v2133, 4
      %v2136 = vshll.u32 %v1785, 16
      %v2138 = vrot.slane %v2136, 5
      %v2139 = vsel %vm273, %v2134, %v2138
      %v2140 = vshrl.u32 %v1785, 16
      %v2142 = vrot.slane %v2140, 4
      %v2143 = vor.u32 %v2142, %v2138
      %v2144 = vrot.slane %v2143, 4
      %v2146 = vshll.u32 %v1786, 16
      %v2148 = vrot.slane %v2146, 5
      %v2149 = vsel %vm273, %v2144, %v2148
      %v2151 = vshrl.u32 %v1787, 16
      %v2153 = vrot.slane %v2151, 4
      %v2154 = vshll.u32 %v1787, 16
      %v2156 = vrot.slane %v2154, 5
      %v2157 = vor.u32 %v2153, %v2156
      %v2158 = vrot.slane %v2157, 4
      %v2160 = vshll.u32 %v1788, 16
      %v2162 = vrot.slane %v2160, 5
      %v2163 = vsel %vm273, %v2158, %v2162
      %v2164 = vshrl.u32 %v1788, 16
      %v2166 = vrot.slane %v2164, 4
      %v2167 = vor.u32 %v2166, %v2162
      %v2168 = vrot.slane %v2167, 4
      %v2170 = vshll.u32 %v1789, 16
      %v2172 = vrot.slane %v2170, 5
      %v2173 = vsel %vm273, %v2168, %v2172
      %s2174 = scalar_lea.vmem %s1, 8
      %v2175 = vld [vmem:[%s2174] sm:$0x3]
      %v2176 = vunpack.c.l.b16 %v1803
      %v2177 = vunpack.c.l.b16 %v1813
      %v2178 = vunpack.c.l.b16 %v1827
      %v2179 = vunpack.c.l.b16 %v1837
      %v2180 = vunpack.c.l.b16 %v1851
      %v2181 = vunpack.c.l.b16 %v1861
      %v2182 = vunpack.c.l.b16 %v1875
      %v2183 = vunpack.c.l.b16 %v1885
      %v2184 = vunpack.c.l.b16 %v1899
      %v2185 = vunpack.c.l.b16 %v1909
      %v2186 = vunpack.c.l.b16 %v1923
      %v2187 = vunpack.c.l.b16 %v1933
      %v2188 = vunpack.c.l.b16 %v1947
      %v2189 = vunpack.c.l.b16 %v1957
      %v2190 = vunpack.c.l.b16 %v1971
      %v2191 = vunpack.c.l.b16 %v1981
      %v2192 = vunpack.c.l.b16 %v1995
      %v2193 = vunpack.c.l.b16 %v2005
      %v2194 = vunpack.c.l.b16 %v2019
      %v2195 = vunpack.c.l.b16 %v2029
      %v2196 = vunpack.c.l.b16 %v2043
      %v2197 = vunpack.c.l.b16 %v2053
      %v2198 = vunpack.c.l.b16 %v2067
      %v2199 = vunpack.c.l.b16 %v2077
      %v2200 = vunpack.c.l.b16 %v2091
      %v2201 = vunpack.c.l.b16 %v2101
      %v2202 = vunpack.c.l.b16 %v2115
      %v2203 = vunpack.c.l.b16 %v2125
      %v2204 = vunpack.c.l.b16 %v2139
      %v2205 = vunpack.c.l.b16 %v2149
      %v2206 = vunpack.c.l.b16 %v2163
      %v2207 = vunpack.c.l.b16 %v2173
      %v2208 = vpack.c.b16 %v2177, %v2176
      %v2209 = vpack.c.b16 %v2179, %v2178
      %v2210 = vpack.c.b16 %v2181, %v2180
      %v2211 = vpack.c.b16 %v2183, %v2182
      %v2212 = vpack.c.b16 %v2185, %v2184
      %v2213 = vpack.c.b16 %v2187, %v2186
      %v2214 = vpack.c.b16 %v2189, %v2188
      %v2215 = vpack.c.b16 %v2191, %v2190
      %v2216 = vpack.c.b16 %v2193, %v2192
      %v2217 = vpack.c.b16 %v2195, %v2194
      %v2218 = vpack.c.b16 %v2197, %v2196
      %v2219 = vpack.c.b16 %v2199, %v2198
      %v2220 = vpack.c.b16 %v2201, %v2200
      %v2221 = vpack.c.b16 %v2203, %v2202
      %v2222 = vpack.c.b16 %v2205, %v2204
      %v2223 = vpack.c.b16 %v2207, %v2206
      %v2225 = vsel %vm708, %v2208, 0
      %v2228 = vsel %vm708, %v2209, 0
      %v2231 = vsel %vm708, %v2210, 0
      %v2234 = vsel %vm708, %v2211, 0
      %v2237 = vsel %vm708, %v2212, 0
      %v2240 = vsel %vm708, %v2213, 0
      %v2243 = vsel %vm708, %v2214, 0
      %v2246 = vsel %vm708, %v2215, 0
      %v2249 = vsel %vm708, %v2216, 0
      %v2252 = vsel %vm708, %v2217, 0
      %v2255 = vsel %vm708, %v2218, 0
      %v2258 = vsel %vm708, %v2219, 0
      %v2261 = vsel %vm708, %v2220, 0
      %v2264 = vsel %vm708, %v2221, 0
      %v2267 = vsel %vm708, %v2222, 0
      %v2270 = vsel %vm708, %v2223, 0
      %v2273 = vsel %vm757, %v2175, 0
      %2275 = vmatpush.bf16.msra.mxu0 0
      %2276 = vmatpush.bf16.msra.mxu0 0
      %2277 = vmatpush.bf16.msra.mxu0 0
      %2278 = vmatpush.bf16.msra.mxu0 0
      %2279 = vmatpush.bf16.msra.mxu0 0
      %2280 = vmatpush.bf16.msra.mxu0 0
      %2281 = vmatpush.bf16.msra.mxu0 0
      %2282 = vmatpush.bf16.msra.mxu0 %v2273
      %2283 = vmatmul.bf16.gmra.mxu0 %v2225
      %v2284 = vpop.f32.mrf.mxu0
      %v2285 = vadd.f32 0.0, %v2284
      %v2286 = vpop.f32.mrf.mxu0
      %v2287 = vadd.f32 0.0, %v2286
      %2288 = vmatmul.bf16.gmra.mxu0 %v2228
      %v2289 = vpop.f32.mrf.mxu0
      %v2290 = vadd.f32 0.0, %v2289
      %v2291 = vpop.f32.mrf.mxu0
      %v2292 = vadd.f32 0.0, %v2291
      %2293 = vmatmul.bf16.gmra.mxu0 %v2231
      %v2294 = vpop.f32.mrf.mxu0
      %v2295 = vadd.f32 0.0, %v2294
      %v2296 = vpop.f32.mrf.mxu0
      %v2297 = vadd.f32 0.0, %v2296
      %2298 = vmatmul.bf16.gmra.mxu0 %v2234
      %v2299 = vpop.f32.mrf.mxu0
      %v2300 = vadd.f32 0.0, %v2299
      %v2301 = vpop.f32.mrf.mxu0
      %v2302 = vadd.f32 0.0, %v2301
      %2303 = vmatmul.bf16.gmra.mxu0 %v2237
      %v2304 = vpop.f32.mrf.mxu0
      %v2305 = vadd.f32 0.0, %v2304
      %v2306 = vpop.f32.mrf.mxu0
      %v2307 = vadd.f32 0.0, %v2306
      %2308 = vmatmul.bf16.gmra.mxu0 %v2240
      %v2309 = vpop.f32.mrf.mxu0
      %v2310 = vadd.f32 0.0, %v2309
      %v2311 = vpop.f32.mrf.mxu0
      %v2312 = vadd.f32 0.0, %v2311
      %2313 = vmatmul.bf16.gmra.mxu0 %v2243
      %v2314 = vpop.f32.mrf.mxu0
      %v2315 = vadd.f32 0.0, %v2314
      %v2316 = vpop.f32.mrf.mxu0
      %v2317 = vadd.f32 0.0, %v2316
      %2318 = vmatmul.bf16.gmra.mxu0 %v2246
      %v2319 = vpop.f32.mrf.mxu0
      %v2320 = vadd.f32 0.0, %v2319
      %v2321 = vpop.f32.mrf.mxu0
      %v2322 = vadd.f32 0.0, %v2321
      %2323 = vmatmul.bf16.gmra.mxu0 %v2249
      %v2324 = vpop.f32.mrf.mxu0
      %v2325 = vadd.f32 0.0, %v2324
      %v2326 = vpop.f32.mrf.mxu0
      %v2327 = vadd.f32 0.0, %v2326
      %2328 = vmatmul.bf16.gmra.mxu0 %v2252
      %v2329 = vpop.f32.mrf.mxu0
      %v2330 = vadd.f32 0.0, %v2329
      %v2331 = vpop.f32.mrf.mxu0
      %v2332 = vadd.f32 0.0, %v2331
      %2333 = vmatmul.bf16.gmra.mxu0 %v2255
      %v2334 = vpop.f32.mrf.mxu0
      %v2335 = vadd.f32 0.0, %v2334
      %v2336 = vpop.f32.mrf.mxu0
      %v2337 = vadd.f32 0.0, %v2336
      %2338 = vmatmul.bf16.gmra.mxu0 %v2258
      %v2339 = vpop.f32.mrf.mxu0
      %v2340 = vadd.f32 0.0, %v2339
      %v2341 = vpop.f32.mrf.mxu0
      %v2342 = vadd.f32 0.0, %v2341
      %2343 = vmatmul.bf16.gmra.mxu0 %v2261
      %v2344 = vpop.f32.mrf.mxu0
      %v2345 = vadd.f32 0.0, %v2344
      %v2346 = vpop.f32.mrf.mxu0
      %v2347 = vadd.f32 0.0, %v2346
      %2348 = vmatmul.bf16.gmra.mxu0 %v2264
      %v2349 = vpop.f32.mrf.mxu0
      %v2350 = vadd.f32 0.0, %v2349
      %v2351 = vpop.f32.mrf.mxu0
      %v2352 = vadd.f32 0.0, %v2351
      %2353 = vmatmul.bf16.gmra.mxu0 %v2267
      %v2354 = vpop.f32.mrf.mxu0
      %v2355 = vadd.f32 0.0, %v2354
      %v2356 = vpop.f32.mrf.mxu0
      %v2357 = vadd.f32 0.0, %v2356
      %2358 = vmatmul.bf16.gmra.mxu0 %v2270
      %v2359 = vpop.f32.mrf.mxu0
      %v2360 = vadd.f32 0.0, %v2359
      %v2361 = vpop.f32.mrf.mxu0
      %v2362 = vadd.f32 0.0, %v2361
      %2363 = vdwg.mxu0
      %v2364 = vadd.f32 %v1710, %v2285
      %v2365 = vadd.f32 %v1711, %v2287
      %v2366 = vadd.f32 %v1712, %v2290
      %v2367 = vadd.f32 %v1713, %v2292
      %v2368 = vadd.f32 %v1714, %v2295
      %v2369 = vadd.f32 %v1715, %v2297
      %v2370 = vadd.f32 %v1716, %v2300
      %v2371 = vadd.f32 %v1717, %v2302
      %v2372 = vadd.f32 %v1718, %v2305
      %v2373 = vadd.f32 %v1719, %v2307
      %v2374 = vadd.f32 %v1720, %v2310
      %v2375 = vadd.f32 %v1721, %v2312
      %v2376 = vadd.f32 %v1722, %v2315
      %v2377 = vadd.f32 %v1723, %v2317
      %v2378 = vadd.f32 %v1724, %v2320
      %v2379 = vadd.f32 %v1725, %v2322
      %v2380 = vadd.f32 %v1726, %v2325
      %v2381 = vadd.f32 %v1727, %v2327
      %v2382 = vadd.f32 %v1728, %v2330
      %v2383 = vadd.f32 %v1729, %v2332
      %v2384 = vadd.f32 %v1730, %v2335
      %v2385 = vadd.f32 %v1731, %v2337
      %v2386 = vadd.f32 %v1732, %v2340
      %v2387 = vadd.f32 %v1733, %v2342
      %v2388 = vadd.f32 %v1734, %v2345
      %v2389 = vadd.f32 %v1735, %v2347
      %v2390 = vadd.f32 %v1736, %v2350
      %v2391 = vadd.f32 %v1737, %v2352
      %v2392 = vadd.f32 %v1738, %v2355
      %v2393 = vadd.f32 %v1739, %v2357
      %v2394 = vadd.f32 %v1740, %v2360
      %v2395 = vadd.f32 %v1741, %v2362
      %v2396 = vld [vmem:[%s1455] sm:$0xe]
      %v2397 = vld [vmem:[%s1455 + $0xc] sm:$0xe]
      %v2398 = vld [vmem:[%s1455 + $0x18] sm:$0xe]
      %v2399 = vld [vmem:[%s1455 + $0x24] sm:$0xe]
      %v2400 = vld [vmem:[%s1455 + $0x30] sm:$0xe]
      %v2401 = vld [vmem:[%s1455 + $0x3c] sm:$0xe]
      %v2402 = vld [vmem:[%s1455 + $0x48] sm:$0xe]
      %v2403 = vld [vmem:[%s1455 + $0x54] sm:$0xe]
      %v2404 = vld [vmem:[%s1455 + $0x60] sm:$0xe]
      %v2405 = vld [vmem:[%s1455 + $0x6c] sm:$0xe]
      %v2406 = vld [vmem:[%s1455 + $0x78] sm:$0xe]
      %v2407 = vld [vmem:[%s1455 + $0x84] sm:$0xe]
      %v2408 = vld [vmem:[%s1455 + $0x90] sm:$0xe]
      %v2409 = vld [vmem:[%s1455 + $0x9c] sm:$0xe]
      %v2410 = vld [vmem:[%s1455 + $0xa8] sm:$0xe]
      %v2411 = vld [vmem:[%s1455 + $0xb4] sm:$0xe]
      %v2460 = vrot.slane %v2396, 5
      %v2461 = vrot.slane %v2460, 4
      %v2462 = vrot.slane %v1743, 5
      %v2463 = vsel %vm1120, %v2461, %v2462
      %v2464 = vrot.slane %v2462, 4
      %v2465 = vrot.slane %v1744, 5
      %v2466 = vsel %vm1120, %v2464, %v2465
      %v2467 = vrot.slane %v2397, 5
      %v2468 = vrot.slane %v2467, 4
      %v2469 = vrot.slane %v1746, 5
      %v2470 = vsel %vm1120, %v2468, %v2469
      %v2471 = vrot.slane %v2469, 4
      %v2472 = vrot.slane %v1747, 5
      %v2473 = vsel %vm1120, %v2471, %v2472
      %v2474 = vrot.slane %v2398, 5
      %v2475 = vrot.slane %v2474, 4
      %v2476 = vrot.slane %v1749, 5
      %v2477 = vsel %vm1120, %v2475, %v2476
      %v2478 = vrot.slane %v2476, 4
      %v2479 = vrot.slane %v1750, 5
      %v2480 = vsel %vm1120, %v2478, %v2479
      %v2481 = vrot.slane %v2399, 5
      %v2482 = vrot.slane %v2481, 4
      %v2483 = vrot.slane %v1752, 5
      %v2484 = vsel %vm1120, %v2482, %v2483
      %v2485 = vrot.slane %v2483, 4
      %v2486 = vrot.slane %v1753, 5
      %v2487 = vsel %vm1120, %v2485, %v2486
      %v2488 = vrot.slane %v2400, 5
      %v2489 = vrot.slane %v2488, 4
      %v2490 = vrot.slane %v1755, 5
      %v2491 = vsel %vm1120, %v2489, %v2490
      %v2492 = vrot.slane %v2490, 4
      %v2493 = vrot.slane %v1756, 5
      %v2494 = vsel %vm1120, %v2492, %v2493
      %v2495 = vrot.slane %v2401, 5
      %v2496 = vrot.slane %v2495, 4
      %v2497 = vrot.slane %v1758, 5
      %v2498 = vsel %vm1120, %v2496, %v2497
      %v2499 = vrot.slane %v2497, 4
      %v2500 = vrot.slane %v1759, 5
      %v2501 = vsel %vm1120, %v2499, %v2500
      %v2502 = vrot.slane %v2402, 5
      %v2503 = vrot.slane %v2502, 4
      %v2504 = vrot.slane %v1761, 5
      %v2505 = vsel %vm1120, %v2503, %v2504
      %v2506 = vrot.slane %v2504, 4
      %v2507 = vrot.slane %v1762, 5
      %v2508 = vsel %vm1120, %v2506, %v2507
      %v2509 = vrot.slane %v2403, 5
      %v2510 = vrot.slane %v2509, 4
      %v2511 = vrot.slane %v1764, 5
      %v2512 = vsel %vm1120, %v2510, %v2511
      %v2513 = vrot.slane %v2511, 4
      %v2514 = vrot.slane %v1765, 5
      %v2515 = vsel %vm1120, %v2513, %v2514
      %v2516 = vrot.slane %v2404, 5
      %v2517 = vrot.slane %v2516, 4
      %v2518 = vrot.slane %v1767, 5
      %v2519 = vsel %vm1120, %v2517, %v2518
      %v2520 = vrot.slane %v2518, 4
      %v2521 = vrot.slane %v1768, 5
      %v2522 = vsel %vm1120, %v2520, %v2521
      %v2523 = vrot.slane %v2405, 5
      %v2524 = vrot.slane %v2523, 4
      %v2525 = vrot.slane %v1770, 5
      %v2526 = vsel %vm1120, %v2524, %v2525
      %v2527 = vrot.slane %v2525, 4
      %v2528 = vrot.slane %v1771, 5
      %v2529 = vsel %vm1120, %v2527, %v2528
      %v2530 = vrot.slane %v2406, 5
      %v2531 = vrot.slane %v2530, 4
      %v2532 = vrot.slane %v1773, 5
      %v2533 = vsel %vm1120, %v2531, %v2532
      %v2534 = vrot.slane %v2532, 4
      %v2535 = vrot.slane %v1774, 5
      %v2536 = vsel %vm1120, %v2534, %v2535
      %v2537 = vrot.slane %v2407, 5
      %v2538 = vrot.slane %v2537, 4
      %v2539 = vrot.slane %v1776, 5
      %v2540 = vsel %vm1120, %v2538, %v2539
      %v2541 = vrot.slane %v2539, 4
      %v2542 = vrot.slane %v1777, 5
      %v2543 = vsel %vm1120, %v2541, %v2542
      %v2544 = vrot.slane %v2408, 5
      %v2545 = vrot.slane %v2544, 4
      %v2546 = vrot.slane %v1779, 5
      %v2547 = vsel %vm1120, %v2545, %v2546
      %v2548 = vrot.slane %v2546, 4
      %v2549 = vrot.slane %v1780, 5
      %v2550 = vsel %vm1120, %v2548, %v2549
      %v2551 = vrot.slane %v2409, 5
      %v2552 = vrot.slane %v2551, 4
      %v2553 = vrot.slane %v1782, 5
      %v2554 = vsel %vm1120, %v2552, %v2553
      %v2555 = vrot.slane %v2553, 4
      %v2556 = vrot.slane %v1783, 5
      %v2557 = vsel %vm1120, %v2555, %v2556
      %v2558 = vrot.slane %v2410, 5
      %v2559 = vrot.slane %v2558, 4
      %v2560 = vrot.slane %v1785, 5
      %v2561 = vsel %vm1120, %v2559, %v2560
      %v2562 = vrot.slane %v2560, 4
      %v2563 = vrot.slane %v1786, 5
      %v2564 = vsel %vm1120, %v2562, %v2563
      %v2565 = vrot.slane %v2411, 5
      %v2566 = vrot.slane %v2565, 4
      %v2567 = vrot.slane %v1788, 5
      %v2568 = vsel %vm1120, %v2566, %v2567
      %v2569 = vrot.slane %v2567, 4
      %v2570 = vrot.slane %v1789, 5
      %v2571 = vsel %vm1120, %v2569, %v2570
      %s2572 = scalar_lea.vmem %s1, 10
      %v2573 = vld [vmem:[%s2572] sm:$0x3]
      %v2574 = vunpack.c.l.b16 %v2463
      %v2575 = vunpack.c.l.b16 %v2466
      %v2576 = vunpack.c.l.b16 %v2470
      %v2577 = vunpack.c.l.b16 %v2473
      %v2578 = vunpack.c.l.b16 %v2477
      %v2579 = vunpack.c.l.b16 %v2480
      %v2580 = vunpack.c.l.b16 %v2484
      %v2581 = vunpack.c.l.b16 %v2487
      %v2582 = vunpack.c.l.b16 %v2491
      %v2583 = vunpack.c.l.b16 %v2494
      %v2584 = vunpack.c.l.b16 %v2498
      %v2585 = vunpack.c.l.b16 %v2501
      %v2586 = vunpack.c.l.b16 %v2505
      %v2587 = vunpack.c.l.b16 %v2508
      %v2588 = vunpack.c.l.b16 %v2512
      %v2589 = vunpack.c.l.b16 %v2515
      %v2590 = vunpack.c.l.b16 %v2519
      %v2591 = vunpack.c.l.b16 %v2522
      %v2592 = vunpack.c.l.b16 %v2526
      %v2593 = vunpack.c.l.b16 %v2529
      %v2594 = vunpack.c.l.b16 %v2533
      %v2595 = vunpack.c.l.b16 %v2536
      %v2596 = vunpack.c.l.b16 %v2540
      %v2597 = vunpack.c.l.b16 %v2543
      %v2598 = vunpack.c.l.b16 %v2547
      %v2599 = vunpack.c.l.b16 %v2550
      %v2600 = vunpack.c.l.b16 %v2554
      %v2601 = vunpack.c.l.b16 %v2557
      %v2602 = vunpack.c.l.b16 %v2561
      %v2603 = vunpack.c.l.b16 %v2564
      %v2604 = vunpack.c.l.b16 %v2568
      %v2605 = vunpack.c.l.b16 %v2571
      %v2606 = vpack.c.b16 %v2575, %v2574
      %v2607 = vpack.c.b16 %v2577, %v2576
      %v2608 = vpack.c.b16 %v2579, %v2578
      %v2609 = vpack.c.b16 %v2581, %v2580
      %v2610 = vpack.c.b16 %v2583, %v2582
      %v2611 = vpack.c.b16 %v2585, %v2584
      %v2612 = vpack.c.b16 %v2587, %v2586
      %v2613 = vpack.c.b16 %v2589, %v2588
      %v2614 = vpack.c.b16 %v2591, %v2590
      %v2615 = vpack.c.b16 %v2593, %v2592
      %v2616 = vpack.c.b16 %v2595, %v2594
      %v2617 = vpack.c.b16 %v2597, %v2596
      %v2618 = vpack.c.b16 %v2599, %v2598
      %v2619 = vpack.c.b16 %v2601, %v2600
      %v2620 = vpack.c.b16 %v2603, %v2602
      %v2621 = vpack.c.b16 %v2605, %v2604
      %v2623 = vsel %vm708, %v2606, 0
      %v2626 = vsel %vm708, %v2607, 0
      %v2629 = vsel %vm708, %v2608, 0
      %v2632 = vsel %vm708, %v2609, 0
      %v2635 = vsel %vm708, %v2610, 0
      %v2638 = vsel %vm708, %v2611, 0
      %v2641 = vsel %vm708, %v2612, 0
      %v2644 = vsel %vm708, %v2613, 0
      %v2647 = vsel %vm708, %v2614, 0
      %v2650 = vsel %vm708, %v2615, 0
      %v2653 = vsel %vm708, %v2616, 0
      %v2656 = vsel %vm708, %v2617, 0
      %v2659 = vsel %vm708, %v2618, 0
      %v2662 = vsel %vm708, %v2619, 0
      %v2665 = vsel %vm708, %v2620, 0
      %v2668 = vsel %vm708, %v2621, 0
      %v2671 = vsel %vm757, %v2573, 0
      %2673 = vmatpush.bf16.msra.mxu0 0
      %2674 = vmatpush.bf16.msra.mxu0 0
      %2675 = vmatpush.bf16.msra.mxu0 0
      %2676 = vmatpush.bf16.msra.mxu0 0
      %2677 = vmatpush.bf16.msra.mxu0 0
      %2678 = vmatpush.bf16.msra.mxu0 0
      %2679 = vmatpush.bf16.msra.mxu0 0
      %2680 = vmatpush.bf16.msra.mxu0 %v2671
      %2681 = vmatmul.bf16.gmra.mxu0 %v2623
      %v2682 = vpop.f32.mrf.mxu0
      %v2683 = vadd.f32 0.0, %v2682
      %v2684 = vpop.f32.mrf.mxu0
      %v2685 = vadd.f32 0.0, %v2684
      %2686 = vmatmul.bf16.gmra.mxu0 %v2626
      %v2687 = vpop.f32.mrf.mxu0
      %v2688 = vadd.f32 0.0, %v2687
      %v2689 = vpop.f32.mrf.mxu0
      %v2690 = vadd.f32 0.0, %v2689
      %2691 = vmatmul.bf16.gmra.mxu0 %v2629
      %v2692 = vpop.f32.mrf.mxu0
      %v2693 = vadd.f32 0.0, %v2692
      %v2694 = vpop.f32.mrf.mxu0
      %v2695 = vadd.f32 0.0, %v2694
      %2696 = vmatmul.bf16.gmra.mxu0 %v2632
      %v2697 = vpop.f32.mrf.mxu0
      %v2698 = vadd.f32 0.0, %v2697
      %v2699 = vpop.f32.mrf.mxu0
      %v2700 = vadd.f32 0.0, %v2699
      %2701 = vmatmul.bf16.gmra.mxu0 %v2635
      %v2702 = vpop.f32.mrf.mxu0
      %v2703 = vadd.f32 0.0, %v2702
      %v2704 = vpop.f32.mrf.mxu0
      %v2705 = vadd.f32 0.0, %v2704
      %2706 = vmatmul.bf16.gmra.mxu0 %v2638
      %v2707 = vpop.f32.mrf.mxu0
      %v2708 = vadd.f32 0.0, %v2707
      %v2709 = vpop.f32.mrf.mxu0
      %v2710 = vadd.f32 0.0, %v2709
      %2711 = vmatmul.bf16.gmra.mxu0 %v2641
      %v2712 = vpop.f32.mrf.mxu0
      %v2713 = vadd.f32 0.0, %v2712
      %v2714 = vpop.f32.mrf.mxu0
      %v2715 = vadd.f32 0.0, %v2714
      %2716 = vmatmul.bf16.gmra.mxu0 %v2644
      %v2717 = vpop.f32.mrf.mxu0
      %v2718 = vadd.f32 0.0, %v2717
      %v2719 = vpop.f32.mrf.mxu0
      %v2720 = vadd.f32 0.0, %v2719
      %2721 = vmatmul.bf16.gmra.mxu0 %v2647
      %v2722 = vpop.f32.mrf.mxu0
      %v2723 = vadd.f32 0.0, %v2722
      %v2724 = vpop.f32.mrf.mxu0
      %v2725 = vadd.f32 0.0, %v2724
      %2726 = vmatmul.bf16.gmra.mxu0 %v2650
      %v2727 = vpop.f32.mrf.mxu0
      %v2728 = vadd.f32 0.0, %v2727
      %v2729 = vpop.f32.mrf.mxu0
      %v2730 = vadd.f32 0.0, %v2729
      %2731 = vmatmul.bf16.gmra.mxu0 %v2653
      %v2732 = vpop.f32.mrf.mxu0
      %v2733 = vadd.f32 0.0, %v2732
      %v2734 = vpop.f32.mrf.mxu0
      %v2735 = vadd.f32 0.0, %v2734
      %2736 = vmatmul.bf16.gmra.mxu0 %v2656
      %v2737 = vpop.f32.mrf.mxu0
      %v2738 = vadd.f32 0.0, %v2737
      %v2739 = vpop.f32.mrf.mxu0
      %v2740 = vadd.f32 0.0, %v2739
      %2741 = vmatmul.bf16.gmra.mxu0 %v2659
      %v2742 = vpop.f32.mrf.mxu0
      %v2743 = vadd.f32 0.0, %v2742
      %v2744 = vpop.f32.mrf.mxu0
      %v2745 = vadd.f32 0.0, %v2744
      %2746 = vmatmul.bf16.gmra.mxu0 %v2662
      %v2747 = vpop.f32.mrf.mxu0
      %v2748 = vadd.f32 0.0, %v2747
      %v2749 = vpop.f32.mrf.mxu0
      %v2750 = vadd.f32 0.0, %v2749
      %2751 = vmatmul.bf16.gmra.mxu0 %v2665
      %v2752 = vpop.f32.mrf.mxu0
      %v2753 = vadd.f32 0.0, %v2752
      %v2754 = vpop.f32.mrf.mxu0
      %v2755 = vadd.f32 0.0, %v2754
      %2756 = vmatmul.bf16.gmra.mxu0 %v2668
      %v2757 = vpop.f32.mrf.mxu0
      %v2758 = vadd.f32 0.0, %v2757
      %v2759 = vpop.f32.mrf.mxu0
      %v2760 = vadd.f32 0.0, %v2759
      %2761 = vdwg.mxu0
      %v2762 = vadd.f32 %v2364, %v2683
      %v2763 = vadd.f32 %v2365, %v2685
      %v2764 = vadd.f32 %v2366, %v2688
      %v2765 = vadd.f32 %v2367, %v2690
      %v2766 = vadd.f32 %v2368, %v2693
      %v2767 = vadd.f32 %v2369, %v2695
      %v2768 = vadd.f32 %v2370, %v2698
      %v2769 = vadd.f32 %v2371, %v2700
      %v2770 = vadd.f32 %v2372, %v2703
      %v2771 = vadd.f32 %v2373, %v2705
      %v2772 = vadd.f32 %v2374, %v2708
      %v2773 = vadd.f32 %v2375, %v2710
      %v2774 = vadd.f32 %v2376, %v2713
      %v2775 = vadd.f32 %v2377, %v2715
      %v2776 = vadd.f32 %v2378, %v2718
      %v2777 = vadd.f32 %v2379, %v2720
      %v2778 = vadd.f32 %v2380, %v2723
      %v2779 = vadd.f32 %v2381, %v2725
      %v2780 = vadd.f32 %v2382, %v2728
      %v2781 = vadd.f32 %v2383, %v2730
      %v2782 = vadd.f32 %v2384, %v2733
      %v2783 = vadd.f32 %v2385, %v2735
      %v2784 = vadd.f32 %v2386, %v2738
      %v2785 = vadd.f32 %v2387, %v2740
      %v2786 = vadd.f32 %v2388, %v2743
      %v2787 = vadd.f32 %v2389, %v2745
      %v2788 = vadd.f32 %v2390, %v2748
      %v2789 = vadd.f32 %v2391, %v2750
      %v2790 = vadd.f32 %v2392, %v2753
      %v2791 = vadd.f32 %v2393, %v2755
      %v2792 = vadd.f32 %v2394, %v2758
      %v2793 = vadd.f32 %v2395, %v2760
      %s2794 = scalar_lea.vmem %s217, 24
      %v2795 = vld [vmem:[%s2794] sm:$0xf]
      %v2796 = vld [vmem:[%s2794 + $0x4] sm:$0xf]
      %v2797 = vld [vmem:[%s2794 + $0xc] sm:$0xf]
      %v2798 = vld [vmem:[%s2794 + $0x10] sm:$0xf]
      %v2799 = vld [vmem:[%s2794 + $0x18] sm:$0xf]
      %v2800 = vld [vmem:[%s2794 + $0x1c] sm:$0xf]
      %v2801 = vld [vmem:[%s2794 + $0x24] sm:$0xf]
      %v2802 = vld [vmem:[%s2794 + $0x28] sm:$0xf]
      %v2803 = vld [vmem:[%s2794 + $0x30] sm:$0xf]
      %v2804 = vld [vmem:[%s2794 + $0x34] sm:$0xf]
      %v2805 = vld [vmem:[%s2794 + $0x3c] sm:$0xf]
      %v2806 = vld [vmem:[%s2794 + $0x40] sm:$0xf]
      %v2807 = vld [vmem:[%s2794 + $0x48] sm:$0xf]
      %v2808 = vld [vmem:[%s2794 + $0x4c] sm:$0xf]
      %v2809 = vld [vmem:[%s2794 + $0x54] sm:$0xf]
      %v2810 = vld [vmem:[%s2794 + $0x58] sm:$0xf]
      %v2811 = vld [vmem:[%s2794 + $0x60] sm:$0xf]
      %v2812 = vld [vmem:[%s2794 + $0x64] sm:$0xf]
      %v2813 = vld [vmem:[%s2794 + $0x6c] sm:$0xf]
      %v2814 = vld [vmem:[%s2794 + $0x70] sm:$0xf]
      %v2815 = vld [vmem:[%s2794 + $0x78] sm:$0xf]
      %v2816 = vld [vmem:[%s2794 + $0x7c] sm:$0xf]
      %v2817 = vld [vmem:[%s2794 + $0x84] sm:$0xf]
      %v2818 = vld [vmem:[%s2794 + $0x88] sm:$0xf]
      %v2819 = vld [vmem:[%s2794 + $0x90] sm:$0xf]
      %v2820 = vld [vmem:[%s2794 + $0x94] sm:$0xf]
      %v2821 = vld [vmem:[%s2794 + $0x9c] sm:$0xf]
      %v2822 = vld [vmem:[%s2794 + $0xa0] sm:$0xf]
      %v2823 = vld [vmem:[%s2794 + $0xa8] sm:$0xf]
      %v2824 = vld [vmem:[%s2794 + $0xac] sm:$0xf]
      %v2825 = vld [vmem:[%s2794 + $0xb4] sm:$0xf]
      %v2826 = vld [vmem:[%s2794 + $0xb8] sm:$0xf]
      %s2827 = scalar_lea.vmem %s1, 12
      %v2828 = vld [vmem:[%s2827] sm:$0x3]
      %v2861 = vunpack.c.l.b16 %v2795
      %v2862 = vunpack.c.l.b16 %v2796
      %v2863 = vunpack.c.l.b16 %v2797
      %v2864 = vunpack.c.l.b16 %v2798
      %v2865 = vunpack.c.l.b16 %v2799
      %v2866 = vunpack.c.l.b16 %v2800
      %v2867 = vunpack.c.l.b16 %v2801
      %v2868 = vunpack.c.l.b16 %v2802
      %v2869 = vunpack.c.l.b16 %v2803
      %v2870 = vunpack.c.l.b16 %v2804
      %v2871 = vunpack.c.l.b16 %v2805
      %v2872 = vunpack.c.l.b16 %v2806
      %v2873 = vunpack.c.l.b16 %v2807
      %v2874 = vunpack.c.l.b16 %v2808
      %v2875 = vunpack.c.l.b16 %v2809
      %v2876 = vunpack.c.l.b16 %v2810
      %v2877 = vunpack.c.l.b16 %v2811
      %v2878 = vunpack.c.l.b16 %v2812
      %v2879 = vunpack.c.l.b16 %v2813
      %v2880 = vunpack.c.l.b16 %v2814
      %v2881 = vunpack.c.l.b16 %v2815
      %v2882 = vunpack.c.l.b16 %v2816
      %v2883 = vunpack.c.l.b16 %v2817
      %v2884 = vunpack.c.l.b16 %v2818
      %v2885 = vunpack.c.l.b16 %v2819
      %v2886 = vunpack.c.l.b16 %v2820
      %v2887 = vunpack.c.l.b16 %v2821
      %v2888 = vunpack.c.l.b16 %v2822
      %v2889 = vunpack.c.l.b16 %v2823
      %v2890 = vunpack.c.l.b16 %v2824
      %v2891 = vunpack.c.l.b16 %v2825
      %v2892 = vunpack.c.l.b16 %v2826
      %v2893 = vpack.c.b16 %v2862, %v2861
      %v2894 = vpack.c.b16 %v2864, %v2863
      %v2895 = vpack.c.b16 %v2866, %v2865
      %v2896 = vpack.c.b16 %v2868, %v2867
      %v2897 = vpack.c.b16 %v2870, %v2869
      %v2898 = vpack.c.b16 %v2872, %v2871
      %v2899 = vpack.c.b16 %v2874, %v2873
      %v2900 = vpack.c.b16 %v2876, %v2875
      %v2901 = vpack.c.b16 %v2878, %v2877
      %v2902 = vpack.c.b16 %v2880, %v2879
      %v2903 = vpack.c.b16 %v2882, %v2881
      %v2904 = vpack.c.b16 %v2884, %v2883
      %v2905 = vpack.c.b16 %v2886, %v2885
      %v2906 = vpack.c.b16 %v2888, %v2887
      %v2907 = vpack.c.b16 %v2890, %v2889
      %v2908 = vpack.c.b16 %v2892, %v2891
      %v2910 = vsel %vm708, %v2893, 0
      %v2913 = vsel %vm708, %v2894, 0
      %v2916 = vsel %vm708, %v2895, 0
      %v2919 = vsel %vm708, %v2896, 0
      %v2922 = vsel %vm708, %v2897, 0
      %v2925 = vsel %vm708, %v2898, 0
      %v2928 = vsel %vm708, %v2899, 0
      %v2931 = vsel %vm708, %v2900, 0
      %v2934 = vsel %vm708, %v2901, 0
      %v2937 = vsel %vm708, %v2902, 0
      %v2940 = vsel %vm708, %v2903, 0
      %v2943 = vsel %vm708, %v2904, 0
      %v2946 = vsel %vm708, %v2905, 0
      %v2949 = vsel %vm708, %v2906, 0
      %v2952 = vsel %vm708, %v2907, 0
      %v2955 = vsel %vm708, %v2908, 0
      %v2958 = vsel %vm757, %v2828, 0
      %2960 = vmatpush.bf16.msra.mxu0 0
      %2961 = vmatpush.bf16.msra.mxu0 0
      %2962 = vmatpush.bf16.msra.mxu0 0
      %2963 = vmatpush.bf16.msra.mxu0 0
      %2964 = vmatpush.bf16.msra.mxu0 0
      %2965 = vmatpush.bf16.msra.mxu0 0
      %2966 = vmatpush.bf16.msra.mxu0 0
      %2967 = vmatpush.bf16.msra.mxu0 %v2958
      %2968 = vmatmul.bf16.gmra.mxu0 %v2910
      %v2969 = vpop.f32.mrf.mxu0
      %v2970 = vadd.f32 0.0, %v2969
      %v2971 = vpop.f32.mrf.mxu0
      %v2972 = vadd.f32 0.0, %v2971
      %2973 = vmatmul.bf16.gmra.mxu0 %v2913
      %v2974 = vpop.f32.mrf.mxu0
      %v2975 = vadd.f32 0.0, %v2974
      %v2976 = vpop.f32.mrf.mxu0
      %v2977 = vadd.f32 0.0, %v2976
      %2978 = vmatmul.bf16.gmra.mxu0 %v2916
      %v2979 = vpop.f32.mrf.mxu0
      %v2980 = vadd.f32 0.0, %v2979
      %v2981 = vpop.f32.mrf.mxu0
      %v2982 = vadd.f32 0.0, %v2981
      %2983 = vmatmul.bf16.gmra.mxu0 %v2919
      %v2984 = vpop.f32.mrf.mxu0
      %v2985 = vadd.f32 0.0, %v2984
      %v2986 = vpop.f32.mrf.mxu0
      %v2987 = vadd.f32 0.0, %v2986
      %2988 = vmatmul.bf16.gmra.mxu0 %v2922
      %v2989 = vpop.f32.mrf.mxu0
      %v2990 = vadd.f32 0.0, %v2989
      %v2991 = vpop.f32.mrf.mxu0
      %v2992 = vadd.f32 0.0, %v2991
      %2993 = vmatmul.bf16.gmra.mxu0 %v2925
      %v2994 = vpop.f32.mrf.mxu0
      %v2995 = vadd.f32 0.0, %v2994
      %v2996 = vpop.f32.mrf.mxu0
      %v2997 = vadd.f32 0.0, %v2996
      %2998 = vmatmul.bf16.gmra.mxu0 %v2928
      %v2999 = vpop.f32.mrf.mxu0
      %v3000 = vadd.f32 0.0, %v2999
      %v3001 = vpop.f32.mrf.mxu0
      %v3002 = vadd.f32 0.0, %v3001
      %3003 = vmatmul.bf16.gmra.mxu0 %v2931
      %v3004 = vpop.f32.mrf.mxu0
      %v3005 = vadd.f32 0.0, %v3004
      %v3006 = vpop.f32.mrf.mxu0
      %v3007 = vadd.f32 0.0, %v3006
      %3008 = vmatmul.bf16.gmra.mxu0 %v2934
      %v3009 = vpop.f32.mrf.mxu0
      %v3010 = vadd.f32 0.0, %v3009
      %v3011 = vpop.f32.mrf.mxu0
      %v3012 = vadd.f32 0.0, %v3011
      %3013 = vmatmul.bf16.gmra.mxu0 %v2937
      %v3014 = vpop.f32.mrf.mxu0
      %v3015 = vadd.f32 0.0, %v3014
      %v3016 = vpop.f32.mrf.mxu0
      %v3017 = vadd.f32 0.0, %v3016
      %3018 = vmatmul.bf16.gmra.mxu0 %v2940
      %v3019 = vpop.f32.mrf.mxu0
      %v3020 = vadd.f32 0.0, %v3019
      %v3021 = vpop.f32.mrf.mxu0
      %v3022 = vadd.f32 0.0, %v3021
      %3023 = vmatmul.bf16.gmra.mxu0 %v2943
      %v3024 = vpop.f32.mrf.mxu0
      %v3025 = vadd.f32 0.0, %v3024
      %v3026 = vpop.f32.mrf.mxu0
      %v3027 = vadd.f32 0.0, %v3026
      %3028 = vmatmul.bf16.gmra.mxu0 %v2946
      %v3029 = vpop.f32.mrf.mxu0
      %v3030 = vadd.f32 0.0, %v3029
      %v3031 = vpop.f32.mrf.mxu0
      %v3032 = vadd.f32 0.0, %v3031
      %3033 = vmatmul.bf16.gmra.mxu0 %v2949
      %v3034 = vpop.f32.mrf.mxu0
      %v3035 = vadd.f32 0.0, %v3034
      %v3036 = vpop.f32.mrf.mxu0
      %v3037 = vadd.f32 0.0, %v3036
      %3038 = vmatmul.bf16.gmra.mxu0 %v2952
      %v3039 = vpop.f32.mrf.mxu0
      %v3040 = vadd.f32 0.0, %v3039
      %v3041 = vpop.f32.mrf.mxu0
      %v3042 = vadd.f32 0.0, %v3041
      %3043 = vmatmul.bf16.gmra.mxu0 %v2955
      %v3044 = vpop.f32.mrf.mxu0
      %v3045 = vadd.f32 0.0, %v3044
      %v3046 = vpop.f32.mrf.mxu0
      %v3047 = vadd.f32 0.0, %v3046
      %3048 = vdwg.mxu0
      %v3049 = vadd.f32 %v2762, %v2970
      %v3050 = vadd.f32 %v2763, %v2972
      %v3051 = vadd.f32 %v2764, %v2975
      %v3052 = vadd.f32 %v2765, %v2977
      %v3053 = vadd.f32 %v2766, %v2980
      %v3054 = vadd.f32 %v2767, %v2982
      %v3055 = vadd.f32 %v2768, %v2985
      %v3056 = vadd.f32 %v2769, %v2987
      %v3057 = vadd.f32 %v2770, %v2990
      %v3058 = vadd.f32 %v2771, %v2992
      %v3059 = vadd.f32 %v2772, %v2995
      %v3060 = vadd.f32 %v2773, %v2997
      %v3061 = vadd.f32 %v2774, %v3000
      %v3062 = vadd.f32 %v2775, %v3002
      %v3063 = vadd.f32 %v2776, %v3005
      %v3064 = vadd.f32 %v2777, %v3007
      %v3065 = vadd.f32 %v2778, %v3010
      %v3066 = vadd.f32 %v2779, %v3012
      %v3067 = vadd.f32 %v2780, %v3015
      %v3068 = vadd.f32 %v2781, %v3017
      %v3069 = vadd.f32 %v2782, %v3020
      %v3070 = vadd.f32 %v2783, %v3022
      %v3071 = vadd.f32 %v2784, %v3025
      %v3072 = vadd.f32 %v2785, %v3027
      %v3073 = vadd.f32 %v2786, %v3030
      %v3074 = vadd.f32 %v2787, %v3032
      %v3075 = vadd.f32 %v2788, %v3035
      %v3076 = vadd.f32 %v2789, %v3037
      %v3077 = vadd.f32 %v2790, %v3040
      %v3078 = vadd.f32 %v2791, %v3042
      %v3079 = vadd.f32 %v2792, %v3045
      %v3080 = vadd.f32 %v2793, %v3047
      %v3081 = vld [vmem:[%s2794] sm:$0xf]
      %v3082 = vld [vmem:[%s2794 + $0x4] sm:$0xf]
      %v3083 = vld [vmem:[%s2794 + $0x8] sm:$0x1]
      %v3084 = vld [vmem:[%s2794 + $0xc] sm:$0xf]
      %v3085 = vld [vmem:[%s2794 + $0x10] sm:$0xf]
      %v3086 = vld [vmem:[%s2794 + $0x14] sm:$0x1]
      %v3087 = vld [vmem:[%s2794 + $0x18] sm:$0xf]
      %v3088 = vld [vmem:[%s2794 + $0x1c] sm:$0xf]
      %v3089 = vld [vmem:[%s2794 + $0x20] sm:$0x1]
      %v3090 = vld [vmem:[%s2794 + $0x24] sm:$0xf]
      %v3091 = vld [vmem:[%s2794 + $0x28] sm:$0xf]
      %v3092 = vld [vmem:[%s2794 + $0x2c] sm:$0x1]
      %v3093 = vld [vmem:[%s2794 + $0x30] sm:$0xf]
      %v3094 = vld [vmem:[%s2794 + $0x34] sm:$0xf]
      %v3095 = vld [vmem:[%s2794 + $0x38] sm:$0x1]
      %v3096 = vld [vmem:[%s2794 + $0x3c] sm:$0xf]
      %v3097 = vld [vmem:[%s2794 + $0x40] sm:$0xf]
      %v3098 = vld [vmem:[%s2794 + $0x44] sm:$0x1]
      %v3099 = vld [vmem:[%s2794 + $0x48] sm:$0xf]
      %v3100 = vld [vmem:[%s2794 + $0x4c] sm:$0xf]
      %v3101 = vld [vmem:[%s2794 + $0x50] sm:$0x1]
      %v3102 = vld [vmem:[%s2794 + $0x54] sm:$0xf]
      %v3103 = vld [vmem:[%s2794 + $0x58] sm:$0xf]
      %v3104 = vld [vmem:[%s2794 + $0x5c] sm:$0x1]
      %v3105 = vld [vmem:[%s2794 + $0x60] sm:$0xf]
      %v3106 = vld [vmem:[%s2794 + $0x64] sm:$0xf]
      %v3107 = vld [vmem:[%s2794 + $0x68] sm:$0x1]
      %v3108 = vld [vmem:[%s2794 + $0x6c] sm:$0xf]
      %v3109 = vld [vmem:[%s2794 + $0x70] sm:$0xf]
      %v3110 = vld [vmem:[%s2794 + $0x74] sm:$0x1]
      %v3111 = vld [vmem:[%s2794 + $0x78] sm:$0xf]
      %v3112 = vld [vmem:[%s2794 + $0x7c] sm:$0xf]
      %v3113 = vld [vmem:[%s2794 + $0x80] sm:$0x1]
      %v3114 = vld [vmem:[%s2794 + $0x84] sm:$0xf]
      %v3115 = vld [vmem:[%s2794 + $0x88] sm:$0xf]
      %v3116 = vld [vmem:[%s2794 + $0x8c] sm:$0x1]
      %v3117 = vld [vmem:[%s2794 + $0x90] sm:$0xf]
      %v3118 = vld [vmem:[%s2794 + $0x94] sm:$0xf]
      %v3119 = vld [vmem:[%s2794 + $0x98] sm:$0x1]
      %v3120 = vld [vmem:[%s2794 + $0x9c] sm:$0xf]
      %v3121 = vld [vmem:[%s2794 + $0xa0] sm:$0xf]
      %v3122 = vld [vmem:[%s2794 + $0xa4] sm:$0x1]
      %v3123 = vld [vmem:[%s2794 + $0xa8] sm:$0xf]
      %v3124 = vld [vmem:[%s2794 + $0xac] sm:$0xf]
      %v3125 = vld [vmem:[%s2794 + $0xb0] sm:$0x1]
      %v3126 = vld [vmem:[%s2794 + $0xb4] sm:$0xf]
      %v3127 = vld [vmem:[%s2794 + $0xb8] sm:$0xf]
      %v3128 = vld [vmem:[%s2794 + $0xbc] sm:$0x1]
      %v3130 = vshrl.u32 %v3081, 16
      %v3132 = vrot.slane %v3130, 4
      %v3133 = vshll.u32 %v3081, 16
      %v3135 = vrot.slane %v3133, 5
      %v3136 = vor.u32 %v3132, %v3135
      %v3137 = vrot.slane %v3136, 4
      %v3139 = vshll.u32 %v3082, 16
      %v3141 = vrot.slane %v3139, 5
      %v3142 = vsel %vm273, %v3137, %v3141
      %v3143 = vshrl.u32 %v3082, 16
      %v3145 = vrot.slane %v3143, 4
      %v3146 = vor.u32 %v3145, %v3141
      %v3147 = vrot.slane %v3146, 4
      %v3149 = vshll.u32 %v3083, 16
      %v3151 = vrot.slane %v3149, 5
      %v3152 = vsel %vm273, %v3147, %v3151
      %v3154 = vshrl.u32 %v3084, 16
      %v3156 = vrot.slane %v3154, 4
      %v3157 = vshll.u32 %v3084, 16
      %v3159 = vrot.slane %v3157, 5
      %v3160 = vor.u32 %v3156, %v3159
      %v3161 = vrot.slane %v3160, 4
      %v3163 = vshll.u32 %v3085, 16
      %v3165 = vrot.slane %v3163, 5
      %v3166 = vsel %vm273, %v3161, %v3165
      %v3167 = vshrl.u32 %v3085, 16
      %v3169 = vrot.slane %v3167, 4
      %v3170 = vor.u32 %v3169, %v3165
      %v3171 = vrot.slane %v3170, 4
      %v3173 = vshll.u32 %v3086, 16
      %v3175 = vrot.slane %v3173, 5
      %v3176 = vsel %vm273, %v3171, %v3175
      %v3178 = vshrl.u32 %v3087, 16
      %v3180 = vrot.slane %v3178, 4
      %v3181 = vshll.u32 %v3087, 16
      %v3183 = vrot.slane %v3181, 5
      %v3184 = vor.u32 %v3180, %v3183
      %v3185 = vrot.slane %v3184, 4
      %v3187 = vshll.u32 %v3088, 16
      %v3189 = vrot.slane %v3187, 5
      %v3190 = vsel %vm273, %v3185, %v3189
      %v3191 = vshrl.u32 %v3088, 16
      %v3193 = vrot.slane %v3191, 4
      %v3194 = vor.u32 %v3193, %v3189
      %v3195 = vrot.slane %v3194, 4
      %v3197 = vshll.u32 %v3089, 16
      %v3199 = vrot.slane %v3197, 5
      %v3200 = vsel %vm273, %v3195, %v3199
      %v3202 = vshrl.u32 %v3090, 16
      %v3204 = vrot.slane %v3202, 4
      %v3205 = vshll.u32 %v3090, 16
      %v3207 = vrot.slane %v3205, 5
      %v3208 = vor.u32 %v3204, %v3207
      %v3209 = vrot.slane %v3208, 4
      %v3211 = vshll.u32 %v3091, 16
      %v3213 = vrot.slane %v3211, 5
      %v3214 = vsel %vm273, %v3209, %v3213
      %v3215 = vshrl.u32 %v3091, 16
      %v3217 = vrot.slane %v3215, 4
      %v3218 = vor.u32 %v3217, %v3213
      %v3219 = vrot.slane %v3218, 4
      %v3221 = vshll.u32 %v3092, 16
      %v3223 = vrot.slane %v3221, 5
      %v3224 = vsel %vm273, %v3219, %v3223
      %v3226 = vshrl.u32 %v3093, 16
      %v3228 = vrot.slane %v3226, 4
      %v3229 = vshll.u32 %v3093, 16
      %v3231 = vrot.slane %v3229, 5
      %v3232 = vor.u32 %v3228, %v3231
      %v3233 = vrot.slane %v3232, 4
      %v3235 = vshll.u32 %v3094, 16
      %v3237 = vrot.slane %v3235, 5
      %v3238 = vsel %vm273, %v3233, %v3237
      %v3239 = vshrl.u32 %v3094, 16
      %v3241 = vrot.slane %v3239, 4
      %v3242 = vor.u32 %v3241, %v3237
      %v3243 = vrot.slane %v3242, 4
      %v3245 = vshll.u32 %v3095, 16
      %v3247 = vrot.slane %v3245, 5
      %v3248 = vsel %vm273, %v3243, %v3247
      %v3250 = vshrl.u32 %v3096, 16
      %v3252 = vrot.slane %v3250, 4
      %v3253 = vshll.u32 %v3096, 16
      %v3255 = vrot.slane %v3253, 5
      %v3256 = vor.u32 %v3252, %v3255
      %v3257 = vrot.slane %v3256, 4
      %v3259 = vshll.u32 %v3097, 16
      %v3261 = vrot.slane %v3259, 5
      %v3262 = vsel %vm273, %v3257, %v3261
      %v3263 = vshrl.u32 %v3097, 16
      %v3265 = vrot.slane %v3263, 4
      %v3266 = vor.u32 %v3265, %v3261
      %v3267 = vrot.slane %v3266, 4
      %v3269 = vshll.u32 %v3098, 16
      %v3271 = vrot.slane %v3269, 5
      %v3272 = vsel %vm273, %v3267, %v3271
      %v3274 = vshrl.u32 %v3099, 16
      %v3276 = vrot.slane %v3274, 4
      %v3277 = vshll.u32 %v3099, 16
      %v3279 = vrot.slane %v3277, 5
      %v3280 = vor.u32 %v3276, %v3279
      %v3281 = vrot.slane %v3280, 4
      %v3283 = vshll.u32 %v3100, 16
      %v3285 = vrot.slane %v3283, 5
      %v3286 = vsel %vm273, %v3281, %v3285
      %v3287 = vshrl.u32 %v3100, 16
      %v3289 = vrot.slane %v3287, 4
      %v3290 = vor.u32 %v3289, %v3285
      %v3291 = vrot.slane %v3290, 4
      %v3293 = vshll.u32 %v3101, 16
      %v3295 = vrot.slane %v3293, 5
      %v3296 = vsel %vm273, %v3291, %v3295
      %v3298 = vshrl.u32 %v3102, 16
      %v3300 = vrot.slane %v3298, 4
      %v3301 = vshll.u32 %v3102, 16
      %v3303 = vrot.slane %v3301, 5
      %v3304 = vor.u32 %v3300, %v3303
      %v3305 = vrot.slane %v3304, 4
      %v3307 = vshll.u32 %v3103, 16
      %v3309 = vrot.slane %v3307, 5
      %v3310 = vsel %vm273, %v3305, %v3309
      %v3311 = vshrl.u32 %v3103, 16
      %v3313 = vrot.slane %v3311, 4
      %v3314 = vor.u32 %v3313, %v3309
      %v3315 = vrot.slane %v3314, 4
      %v3317 = vshll.u32 %v3104, 16
      %v3319 = vrot.slane %v3317, 5
      %v3320 = vsel %vm273, %v3315, %v3319
      %v3322 = vshrl.u32 %v3105, 16
      %v3324 = vrot.slane %v3322, 4
      %v3325 = vshll.u32 %v3105, 16
      %v3327 = vrot.slane %v3325, 5
      %v3328 = vor.u32 %v3324, %v3327
      %v3329 = vrot.slane %v3328, 4
      %v3331 = vshll.u32 %v3106, 16
      %v3333 = vrot.slane %v3331, 5
      %v3334 = vsel %vm273, %v3329, %v3333
      %v3335 = vshrl.u32 %v3106, 16
      %v3337 = vrot.slane %v3335, 4
      %v3338 = vor.u32 %v3337, %v3333
      %v3339 = vrot.slane %v3338, 4
      %v3341 = vshll.u32 %v3107, 16
      %v3343 = vrot.slane %v3341, 5
      %v3344 = vsel %vm273, %v3339, %v3343
      %v3346 = vshrl.u32 %v3108, 16
      %v3348 = vrot.slane %v3346, 4
      %v3349 = vshll.u32 %v3108, 16
      %v3351 = vrot.slane %v3349, 5
      %v3352 = vor.u32 %v3348, %v3351
      %v3353 = vrot.slane %v3352, 4
      %v3355 = vshll.u32 %v3109, 16
      %v3357 = vrot.slane %v3355, 5
      %v3358 = vsel %vm273, %v3353, %v3357
      %v3359 = vshrl.u32 %v3109, 16
      %v3361 = vrot.slane %v3359, 4
      %v3362 = vor.u32 %v3361, %v3357
      %v3363 = vrot.slane %v3362, 4
      %v3365 = vshll.u32 %v3110, 16
      %v3367 = vrot.slane %v3365, 5
      %v3368 = vsel %vm273, %v3363, %v3367
      %v3370 = vshrl.u32 %v3111, 16
      %v3372 = vrot.slane %v3370, 4
      %v3373 = vshll.u32 %v3111, 16
      %v3375 = vrot.slane %v3373, 5
      %v3376 = vor.u32 %v3372, %v3375
      %v3377 = vrot.slane %v3376, 4
      %v3379 = vshll.u32 %v3112, 16
      %v3381 = vrot.slane %v3379, 5
      %v3382 = vsel %vm273, %v3377, %v3381
      %v3383 = vshrl.u32 %v3112, 16
      %v3385 = vrot.slane %v3383, 4
      %v3386 = vor.u32 %v3385, %v3381
      %v3387 = vrot.slane %v3386, 4
      %v3389 = vshll.u32 %v3113, 16
      %v3391 = vrot.slane %v3389, 5
      %v3392 = vsel %vm273, %v3387, %v3391
      %v3394 = vshrl.u32 %v3114, 16
      %v3396 = vrot.slane %v3394, 4
      %v3397 = vshll.u32 %v3114, 16
      %v3399 = vrot.slane %v3397, 5
      %v3400 = vor.u32 %v3396, %v3399
      %v3401 = vrot.slane %v3400, 4
      %v3403 = vshll.u32 %v3115, 16
      %v3405 = vrot.slane %v3403, 5
      %v3406 = vsel %vm273, %v3401, %v3405
      %v3407 = vshrl.u32 %v3115, 16
      %v3409 = vrot.slane %v3407, 4
      %v3410 = vor.u32 %v3409, %v3405
      %v3411 = vrot.slane %v3410, 4
      %v3413 = vshll.u32 %v3116, 16
      %v3415 = vrot.slane %v3413, 5
      %v3416 = vsel %vm273, %v3411, %v3415
      %v3418 = vshrl.u32 %v3117, 16
      %v3420 = vrot.slane %v3418, 4
      %v3421 = vshll.u32 %v3117, 16
      %v3423 = vrot.slane %v3421, 5
      %v3424 = vor.u32 %v3420, %v3423
      %v3425 = vrot.slane %v3424, 4
      %v3427 = vshll.u32 %v3118, 16
      %v3429 = vrot.slane %v3427, 5
      %v3430 = vsel %vm273, %v3425, %v3429
      %v3431 = vshrl.u32 %v3118, 16
      %v3433 = vrot.slane %v3431, 4
      %v3434 = vor.u32 %v3433, %v3429
      %v3435 = vrot.slane %v3434, 4
      %v3437 = vshll.u32 %v3119, 16
      %v3439 = vrot.slane %v3437, 5
      %v3440 = vsel %vm273, %v3435, %v3439
      %v3442 = vshrl.u32 %v3120, 16
      %v3444 = vrot.slane %v3442, 4
      %v3445 = vshll.u32 %v3120, 16
      %v3447 = vrot.slane %v3445, 5
      %v3448 = vor.u32 %v3444, %v3447
      %v3449 = vrot.slane %v3448, 4
      %v3451 = vshll.u32 %v3121, 16
      %v3453 = vrot.slane %v3451, 5
      %v3454 = vsel %vm273, %v3449, %v3453
      %v3455 = vshrl.u32 %v3121, 16
      %v3457 = vrot.slane %v3455, 4
      %v3458 = vor.u32 %v3457, %v3453
      %v3459 = vrot.slane %v3458, 4
      %v3461 = vshll.u32 %v3122, 16
      %v3463 = vrot.slane %v3461, 5
      %v3464 = vsel %vm273, %v3459, %v3463
      %v3466 = vshrl.u32 %v3123, 16
      %v3468 = vrot.slane %v3466, 4
      %v3469 = vshll.u32 %v3123, 16
      %v3471 = vrot.slane %v3469, 5
      %v3472 = vor.u32 %v3468, %v3471
      %v3473 = vrot.slane %v3472, 4
      %v3475 = vshll.u32 %v3124, 16
      %v3477 = vrot.slane %v3475, 5
      %v3478 = vsel %vm273, %v3473, %v3477
      %v3479 = vshrl.u32 %v3124, 16
      %v3481 = vrot.slane %v3479, 4
      %v3482 = vor.u32 %v3481, %v3477
      %v3483 = vrot.slane %v3482, 4
      %v3485 = vshll.u32 %v3125, 16
      %v3487 = vrot.slane %v3485, 5
      %v3488 = vsel %vm273, %v3483, %v3487
      %v3490 = vshrl.u32 %v3126, 16
      %v3492 = vrot.slane %v3490, 4
      %v3493 = vshll.u32 %v3126, 16
      %v3495 = vrot.slane %v3493, 5
      %v3496 = vor.u32 %v3492, %v3495
      %v3497 = vrot.slane %v3496, 4
      %v3499 = vshll.u32 %v3127, 16
      %v3501 = vrot.slane %v3499, 5
      %v3502 = vsel %vm273, %v3497, %v3501
      %v3503 = vshrl.u32 %v3127, 16
      %v3505 = vrot.slane %v3503, 4
      %v3506 = vor.u32 %v3505, %v3501
      %v3507 = vrot.slane %v3506, 4
      %v3509 = vshll.u32 %v3128, 16
      %v3511 = vrot.slane %v3509, 5
      %v3512 = vsel %vm273, %v3507, %v3511
      %s3513 = scalar_lea.vmem %s1, 14
      %v3514 = vld [vmem:[%s3513] sm:$0x3]
      %v3515 = vunpack.c.l.b16 %v3142
      %v3516 = vunpack.c.l.b16 %v3152
      %v3517 = vunpack.c.l.b16 %v3166
      %v3518 = vunpack.c.l.b16 %v3176
      %v3519 = vunpack.c.l.b16 %v3190
      %v3520 = vunpack.c.l.b16 %v3200
      %v3521 = vunpack.c.l.b16 %v3214
      %v3522 = vunpack.c.l.b16 %v3224
      %v3523 = vunpack.c.l.b16 %v3238
      %v3524 = vunpack.c.l.b16 %v3248
      %v3525 = vunpack.c.l.b16 %v3262
      %v3526 = vunpack.c.l.b16 %v3272
      %v3527 = vunpack.c.l.b16 %v3286
      %v3528 = vunpack.c.l.b16 %v3296
      %v3529 = vunpack.c.l.b16 %v3310
      %v3530 = vunpack.c.l.b16 %v3320
      %v3531 = vunpack.c.l.b16 %v3334
      %v3532 = vunpack.c.l.b16 %v3344
      %v3533 = vunpack.c.l.b16 %v3358
      %v3534 = vunpack.c.l.b16 %v3368
      %v3535 = vunpack.c.l.b16 %v3382
      %v3536 = vunpack.c.l.b16 %v3392
      %v3537 = vunpack.c.l.b16 %v3406
      %v3538 = vunpack.c.l.b16 %v3416
      %v3539 = vunpack.c.l.b16 %v3430
      %v3540 = vunpack.c.l.b16 %v3440
      %v3541 = vunpack.c.l.b16 %v3454
      %v3542 = vunpack.c.l.b16 %v3464
      %v3543 = vunpack.c.l.b16 %v3478
      %v3544 = vunpack.c.l.b16 %v3488
      %v3545 = vunpack.c.l.b16 %v3502
      %v3546 = vunpack.c.l.b16 %v3512
      %v3547 = vpack.c.b16 %v3516, %v3515
      %v3548 = vpack.c.b16 %v3518, %v3517
      %v3549 = vpack.c.b16 %v3520, %v3519
      %v3550 = vpack.c.b16 %v3522, %v3521
      %v3551 = vpack.c.b16 %v3524, %v3523
      %v3552 = vpack.c.b16 %v3526, %v3525
      %v3553 = vpack.c.b16 %v3528, %v3527
      %v3554 = vpack.c.b16 %v3530, %v3529
      %v3555 = vpack.c.b16 %v3532, %v3531
      %v3556 = vpack.c.b16 %v3534, %v3533
      %v3557 = vpack.c.b16 %v3536, %v3535
      %v3558 = vpack.c.b16 %v3538, %v3537
      %v3559 = vpack.c.b16 %v3540, %v3539
      %v3560 = vpack.c.b16 %v3542, %v3541
      %v3561 = vpack.c.b16 %v3544, %v3543
      %v3562 = vpack.c.b16 %v3546, %v3545
      %v3564 = vsel %vm708, %v3547, 0
      %v3567 = vsel %vm708, %v3548, 0
      %v3570 = vsel %vm708, %v3549, 0
      %v3573 = vsel %vm708, %v3550, 0
      %v3576 = vsel %vm708, %v3551, 0
      %v3579 = vsel %vm708, %v3552, 0
      %v3582 = vsel %vm708, %v3553, 0
      %v3585 = vsel %vm708, %v3554, 0
      %v3588 = vsel %vm708, %v3555, 0
      %v3591 = vsel %vm708, %v3556, 0
      %v3594 = vsel %vm708, %v3557, 0
      %v3597 = vsel %vm708, %v3558, 0
      %v3600 = vsel %vm708, %v3559, 0
      %v3603 = vsel %vm708, %v3560, 0
      %v3606 = vsel %vm708, %v3561, 0
      %v3609 = vsel %vm708, %v3562, 0
      %v3612 = vsel %vm757, %v3514, 0
      %3614 = vmatpush.bf16.msra.mxu0 0
      %3615 = vmatpush.bf16.msra.mxu0 0
      %3616 = vmatpush.bf16.msra.mxu0 0
      %3617 = vmatpush.bf16.msra.mxu0 0
      %3618 = vmatpush.bf16.msra.mxu0 0
      %3619 = vmatpush.bf16.msra.mxu0 0
      %3620 = vmatpush.bf16.msra.mxu0 0
      %3621 = vmatpush.bf16.msra.mxu0 %v3612
      %3622 = vmatmul.bf16.gmra.mxu0 %v3564
      %v3623 = vpop.f32.mrf.mxu0
      %v3624 = vadd.f32 0.0, %v3623
      %v3625 = vpop.f32.mrf.mxu0
      %v3626 = vadd.f32 0.0, %v3625
      %3627 = vmatmul.bf16.gmra.mxu0 %v3567
      %v3628 = vpop.f32.mrf.mxu0
      %v3629 = vadd.f32 0.0, %v3628
      %v3630 = vpop.f32.mrf.mxu0
      %v3631 = vadd.f32 0.0, %v3630
      %3632 = vmatmul.bf16.gmra.mxu0 %v3570
      %v3633 = vpop.f32.mrf.mxu0
      %v3634 = vadd.f32 0.0, %v3633
      %v3635 = vpop.f32.mrf.mxu0
      %v3636 = vadd.f32 0.0, %v3635
      %3637 = vmatmul.bf16.gmra.mxu0 %v3573
      %v3638 = vpop.f32.mrf.mxu0
      %v3639 = vadd.f32 0.0, %v3638
      %v3640 = vpop.f32.mrf.mxu0
      %v3641 = vadd.f32 0.0, %v3640
      %3642 = vmatmul.bf16.gmra.mxu0 %v3576
      %v3643 = vpop.f32.mrf.mxu0
      %v3644 = vadd.f32 0.0, %v3643
      %v3645 = vpop.f32.mrf.mxu0
      %v3646 = vadd.f32 0.0, %v3645
      %3647 = vmatmul.bf16.gmra.mxu0 %v3579
      %v3648 = vpop.f32.mrf.mxu0
      %v3649 = vadd.f32 0.0, %v3648
      %v3650 = vpop.f32.mrf.mxu0
      %v3651 = vadd.f32 0.0, %v3650
      %3652 = vmatmul.bf16.gmra.mxu0 %v3582
      %v3653 = vpop.f32.mrf.mxu0
      %v3654 = vadd.f32 0.0, %v3653
      %v3655 = vpop.f32.mrf.mxu0
      %v3656 = vadd.f32 0.0, %v3655
      %3657 = vmatmul.bf16.gmra.mxu0 %v3585
      %v3658 = vpop.f32.mrf.mxu0
      %v3659 = vadd.f32 0.0, %v3658
      %v3660 = vpop.f32.mrf.mxu0
      %v3661 = vadd.f32 0.0, %v3660
      %3662 = vmatmul.bf16.gmra.mxu0 %v3588
      %v3663 = vpop.f32.mrf.mxu0
      %v3664 = vadd.f32 0.0, %v3663
      %v3665 = vpop.f32.mrf.mxu0
      %v3666 = vadd.f32 0.0, %v3665
      %3667 = vmatmul.bf16.gmra.mxu0 %v3591
      %v3668 = vpop.f32.mrf.mxu0
      %v3669 = vadd.f32 0.0, %v3668
      %v3670 = vpop.f32.mrf.mxu0
      %v3671 = vadd.f32 0.0, %v3670
      %3672 = vmatmul.bf16.gmra.mxu0 %v3594
      %v3673 = vpop.f32.mrf.mxu0
      %v3674 = vadd.f32 0.0, %v3673
      %v3675 = vpop.f32.mrf.mxu0
      %v3676 = vadd.f32 0.0, %v3675
      %3677 = vmatmul.bf16.gmra.mxu0 %v3597
      %v3678 = vpop.f32.mrf.mxu0
      %v3679 = vadd.f32 0.0, %v3678
      %v3680 = vpop.f32.mrf.mxu0
      %v3681 = vadd.f32 0.0, %v3680
      %3682 = vmatmul.bf16.gmra.mxu0 %v3600
      %v3683 = vpop.f32.mrf.mxu0
      %v3684 = vadd.f32 0.0, %v3683
      %v3685 = vpop.f32.mrf.mxu0
      %v3686 = vadd.f32 0.0, %v3685
      %3687 = vmatmul.bf16.gmra.mxu0 %v3603
      %v3688 = vpop.f32.mrf.mxu0
      %v3689 = vadd.f32 0.0, %v3688
      %v3690 = vpop.f32.mrf.mxu0
      %v3691 = vadd.f32 0.0, %v3690
      %3692 = vmatmul.bf16.gmra.mxu0 %v3606
      %v3693 = vpop.f32.mrf.mxu0
      %v3694 = vadd.f32 0.0, %v3693
      %v3695 = vpop.f32.mrf.mxu0
      %v3696 = vadd.f32 0.0, %v3695
      %3697 = vmatmul.bf16.gmra.mxu0 %v3609
      %v3698 = vpop.f32.mrf.mxu0
      %v3699 = vadd.f32 0.0, %v3698
      %v3700 = vpop.f32.mrf.mxu0
      %v3701 = vadd.f32 0.0, %v3700
      %3702 = vdwg.mxu0
      %v3703 = vadd.f32 %v3049, %v3624
      %v3704 = vadd.f32 %v3050, %v3626
      %v3705 = vadd.f32 %v3051, %v3629
      %v3706 = vadd.f32 %v3052, %v3631
      %v3707 = vadd.f32 %v3053, %v3634
      %v3708 = vadd.f32 %v3054, %v3636
      %v3709 = vadd.f32 %v3055, %v3639
      %v3710 = vadd.f32 %v3056, %v3641
      %v3711 = vadd.f32 %v3057, %v3644
      %v3712 = vadd.f32 %v3058, %v3646
      %v3713 = vadd.f32 %v3059, %v3649
      %v3714 = vadd.f32 %v3060, %v3651
      %v3715 = vadd.f32 %v3061, %v3654
      %v3716 = vadd.f32 %v3062, %v3656
      %v3717 = vadd.f32 %v3063, %v3659
      %v3718 = vadd.f32 %v3064, %v3661
      %v3719 = vadd.f32 %v3065, %v3664
      %v3720 = vadd.f32 %v3066, %v3666
      %v3721 = vadd.f32 %v3067, %v3669
      %v3722 = vadd.f32 %v3068, %v3671
      %v3723 = vadd.f32 %v3069, %v3674
      %v3724 = vadd.f32 %v3070, %v3676
      %v3725 = vadd.f32 %v3071, %v3679
      %v3726 = vadd.f32 %v3072, %v3681
      %v3727 = vadd.f32 %v3073, %v3684
      %v3728 = vadd.f32 %v3074, %v3686
      %v3729 = vadd.f32 %v3075, %v3689
      %v3730 = vadd.f32 %v3076, %v3691
      %v3731 = vadd.f32 %v3077, %v3694
      %v3732 = vadd.f32 %v3078, %v3696
      %v3733 = vadd.f32 %v3079, %v3699
      %v3734 = vadd.f32 %v3080, %v3701
      %v3735 = vld [vmem:[%s2794] sm:$0xe]
      %v3736 = vld [vmem:[%s2794 + $0xc] sm:$0xe]
      %v3737 = vld [vmem:[%s2794 + $0x18] sm:$0xe]
      %v3738 = vld [vmem:[%s2794 + $0x24] sm:$0xe]
      %v3739 = vld [vmem:[%s2794 + $0x30] sm:$0xe]
      %v3740 = vld [vmem:[%s2794 + $0x3c] sm:$0xe]
      %v3741 = vld [vmem:[%s2794 + $0x48] sm:$0xe]
      %v3742 = vld [vmem:[%s2794 + $0x54] sm:$0xe]
      %v3743 = vld [vmem:[%s2794 + $0x60] sm:$0xe]
      %v3744 = vld [vmem:[%s2794 + $0x6c] sm:$0xe]
      %v3745 = vld [vmem:[%s2794 + $0x78] sm:$0xe]
      %v3746 = vld [vmem:[%s2794 + $0x84] sm:$0xe]
      %v3747 = vld [vmem:[%s2794 + $0x90] sm:$0xe]
      %v3748 = vld [vmem:[%s2794 + $0x9c] sm:$0xe]
      %v3749 = vld [vmem:[%s2794 + $0xa8] sm:$0xe]
      %v3750 = vld [vmem:[%s2794 + $0xb4] sm:$0xe]
      %v3799 = vrot.slane %v3735, 5
      %v3800 = vrot.slane %v3799, 4
      %v3801 = vrot.slane %v3082, 5
      %v3802 = vsel %vm1120, %v3800, %v3801
      %v3803 = vrot.slane %v3801, 4
      %v3804 = vrot.slane %v3083, 5
      %v3805 = vsel %vm1120, %v3803, %v3804
      %v3806 = vrot.slane %v3736, 5
      %v3807 = vrot.slane %v3806, 4
      %v3808 = vrot.slane %v3085, 5
      %v3809 = vsel %vm1120, %v3807, %v3808
      %v3810 = vrot.slane %v3808, 4
      %v3811 = vrot.slane %v3086, 5
      %v3812 = vsel %vm1120, %v3810, %v3811
      %v3813 = vrot.slane %v3737, 5
      %v3814 = vrot.slane %v3813, 4
      %v3815 = vrot.slane %v3088, 5
      %v3816 = vsel %vm1120, %v3814, %v3815
      %v3817 = vrot.slane %v3815, 4
      %v3818 = vrot.slane %v3089, 5
      %v3819 = vsel %vm1120, %v3817, %v3818
      %v3820 = vrot.slane %v3738, 5
      %v3821 = vrot.slane %v3820, 4
      %v3822 = vrot.slane %v3091, 5
      %v3823 = vsel %vm1120, %v3821, %v3822
      %v3824 = vrot.slane %v3822, 4
      %v3825 = vrot.slane %v3092, 5
      %v3826 = vsel %vm1120, %v3824, %v3825
      %v3827 = vrot.slane %v3739, 5
      %v3828 = vrot.slane %v3827, 4
      %v3829 = vrot.slane %v3094, 5
      %v3830 = vsel %vm1120, %v3828, %v3829
      %v3831 = vrot.slane %v3829, 4
      %v3832 = vrot.slane %v3095, 5
      %v3833 = vsel %vm1120, %v3831, %v3832
      %v3834 = vrot.slane %v3740, 5
      %v3835 = vrot.slane %v3834, 4
      %v3836 = vrot.slane %v3097, 5
      %v3837 = vsel %vm1120, %v3835, %v3836
      %v3838 = vrot.slane %v3836, 4
      %v3839 = vrot.slane %v3098, 5
      %v3840 = vsel %vm1120, %v3838, %v3839
      %v3841 = vrot.slane %v3741, 5
      %v3842 = vrot.slane %v3841, 4
      %v3843 = vrot.slane %v3100, 5
      %v3844 = vsel %vm1120, %v3842, %v3843
      %v3845 = vrot.slane %v3843, 4
      %v3846 = vrot.slane %v3101, 5
      %v3847 = vsel %vm1120, %v3845, %v3846
      %v3848 = vrot.slane %v3742, 5
      %v3849 = vrot.slane %v3848, 4
      %v3850 = vrot.slane %v3103, 5
      %v3851 = vsel %vm1120, %v3849, %v3850
      %v3852 = vrot.slane %v3850, 4
      %v3853 = vrot.slane %v3104, 5
      %v3854 = vsel %vm1120, %v3852, %v3853
      %v3855 = vrot.slane %v3743, 5
      %v3856 = vrot.slane %v3855, 4
      %v3857 = vrot.slane %v3106, 5
      %v3858 = vsel %vm1120, %v3856, %v3857
      %v3859 = vrot.slane %v3857, 4
      %v3860 = vrot.slane %v3107, 5
      %v3861 = vsel %vm1120, %v3859, %v3860
      %v3862 = vrot.slane %v3744, 5
      %v3863 = vrot.slane %v3862, 4
      %v3864 = vrot.slane %v3109, 5
      %v3865 = vsel %vm1120, %v3863, %v3864
      %v3866 = vrot.slane %v3864, 4
      %v3867 = vrot.slane %v3110, 5
      %v3868 = vsel %vm1120, %v3866, %v3867
      %v3869 = vrot.slane %v3745, 5
      %v3870 = vrot.slane %v3869, 4
      %v3871 = vrot.slane %v3112, 5
      %v3872 = vsel %vm1120, %v3870, %v3871
      %v3873 = vrot.slane %v3871, 4
      %v3874 = vrot.slane %v3113, 5
      %v3875 = vsel %vm1120, %v3873, %v3874
      %v3876 = vrot.slane %v3746, 5
      %v3877 = vrot.slane %v3876, 4
      %v3878 = vrot.slane %v3115, 5
      %v3879 = vsel %vm1120, %v3877, %v3878
      %v3880 = vrot.slane %v3878, 4
      %v3881 = vrot.slane %v3116, 5
      %v3882 = vsel %vm1120, %v3880, %v3881
      %v3883 = vrot.slane %v3747, 5
      %v3884 = vrot.slane %v3883, 4
      %v3885 = vrot.slane %v3118, 5
      %v3886 = vsel %vm1120, %v3884, %v3885
      %v3887 = vrot.slane %v3885, 4
      %v3888 = vrot.slane %v3119, 5
      %v3889 = vsel %vm1120, %v3887, %v3888
      %v3890 = vrot.slane %v3748, 5
      %v3891 = vrot.slane %v3890, 4
      %v3892 = vrot.slane %v3121, 5
      %v3893 = vsel %vm1120, %v3891, %v3892
      %v3894 = vrot.slane %v3892, 4
      %v3895 = vrot.slane %v3122, 5
      %v3896 = vsel %vm1120, %v3894, %v3895
      %v3897 = vrot.slane %v3749, 5
      %v3898 = vrot.slane %v3897, 4
      %v3899 = vrot.slane %v3124, 5
      %v3900 = vsel %vm1120, %v3898, %v3899
      %v3901 = vrot.slane %v3899, 4
      %v3902 = vrot.slane %v3125, 5
      %v3903 = vsel %vm1120, %v3901, %v3902
      %v3904 = vrot.slane %v3750, 5
      %v3905 = vrot.slane %v3904, 4
      %v3906 = vrot.slane %v3127, 5
      %v3907 = vsel %vm1120, %v3905, %v3906
      %v3908 = vrot.slane %v3906, 4
      %v3909 = vrot.slane %v3128, 5
      %v3910 = vsel %vm1120, %v3908, %v3909
      %s3911 = scalar_lea.vmem %s1, 16
      %v3912 = vld [vmem:[%s3911] sm:$0x3]
      %v3913 = vunpack.c.l.b16 %v3802
      %v3914 = vunpack.c.l.b16 %v3805
      %v3915 = vunpack.c.l.b16 %v3809
      %v3916 = vunpack.c.l.b16 %v3812
      %v3917 = vunpack.c.l.b16 %v3816
      %v3918 = vunpack.c.l.b16 %v3819
      %v3919 = vunpack.c.l.b16 %v3823
      %v3920 = vunpack.c.l.b16 %v3826
      %v3921 = vunpack.c.l.b16 %v3830
      %v3922 = vunpack.c.l.b16 %v3833
      %v3923 = vunpack.c.l.b16 %v3837
      %v3924 = vunpack.c.l.b16 %v3840
      %v3925 = vunpack.c.l.b16 %v3844
      %v3926 = vunpack.c.l.b16 %v3847
      %v3927 = vunpack.c.l.b16 %v3851
      %v3928 = vunpack.c.l.b16 %v3854
      %v3929 = vunpack.c.l.b16 %v3858
      %v3930 = vunpack.c.l.b16 %v3861
      %v3931 = vunpack.c.l.b16 %v3865
      %v3932 = vunpack.c.l.b16 %v3868
      %v3933 = vunpack.c.l.b16 %v3872
      %v3934 = vunpack.c.l.b16 %v3875
      %v3935 = vunpack.c.l.b16 %v3879
      %v3936 = vunpack.c.l.b16 %v3882
      %v3937 = vunpack.c.l.b16 %v3886
      %v3938 = vunpack.c.l.b16 %v3889
      %v3939 = vunpack.c.l.b16 %v3893
      %v3940 = vunpack.c.l.b16 %v3896
      %v3941 = vunpack.c.l.b16 %v3900
      %v3942 = vunpack.c.l.b16 %v3903
      %v3943 = vunpack.c.l.b16 %v3907
      %v3944 = vunpack.c.l.b16 %v3910
      %v3945 = vpack.c.b16 %v3914, %v3913
      %v3946 = vpack.c.b16 %v3916, %v3915
      %v3947 = vpack.c.b16 %v3918, %v3917
      %v3948 = vpack.c.b16 %v3920, %v3919
      %v3949 = vpack.c.b16 %v3922, %v3921
      %v3950 = vpack.c.b16 %v3924, %v3923
      %v3951 = vpack.c.b16 %v3926, %v3925
      %v3952 = vpack.c.b16 %v3928, %v3927
      %v3953 = vpack.c.b16 %v3930, %v3929
      %v3954 = vpack.c.b16 %v3932, %v3931
      %v3955 = vpack.c.b16 %v3934, %v3933
      %v3956 = vpack.c.b16 %v3936, %v3935
      %v3957 = vpack.c.b16 %v3938, %v3937
      %v3958 = vpack.c.b16 %v3940, %v3939
      %v3959 = vpack.c.b16 %v3942, %v3941
      %v3960 = vpack.c.b16 %v3944, %v3943
      %v3962 = vsel %vm708, %v3945, 0
      %v3965 = vsel %vm708, %v3946, 0
      %v3968 = vsel %vm708, %v3947, 0
      %v3971 = vsel %vm708, %v3948, 0
      %v3974 = vsel %vm708, %v3949, 0
      %v3977 = vsel %vm708, %v3950, 0
      %v3980 = vsel %vm708, %v3951, 0
      %v3983 = vsel %vm708, %v3952, 0
      %v3986 = vsel %vm708, %v3953, 0
      %v3989 = vsel %vm708, %v3954, 0
      %v3992 = vsel %vm708, %v3955, 0
      %v3995 = vsel %vm708, %v3956, 0
      %v3998 = vsel %vm708, %v3957, 0
      %v4001 = vsel %vm708, %v3958, 0
      %v4004 = vsel %vm708, %v3959, 0
      %v4007 = vsel %vm708, %v3960, 0
      %v4010 = vsel %vm757, %v3912, 0
      %4012 = vmatpush.bf16.msra.mxu0 0
      %4013 = vmatpush.bf16.msra.mxu0 0
      %4014 = vmatpush.bf16.msra.mxu0 0
      %4015 = vmatpush.bf16.msra.mxu0 0
      %4016 = vmatpush.bf16.msra.mxu0 0
      %4017 = vmatpush.bf16.msra.mxu0 0
      %4018 = vmatpush.bf16.msra.mxu0 0
      %4019 = vmatpush.bf16.msra.mxu0 %v4010
      %4020 = vmatmul.bf16.gmra.mxu0 %v3962
      %v4021 = vpop.f32.mrf.mxu0
      %v4022 = vadd.f32 0.0, %v4021
      %v4023 = vpop.f32.mrf.mxu0
      %v4024 = vadd.f32 0.0, %v4023
      %4025 = vmatmul.bf16.gmra.mxu0 %v3965
      %v4026 = vpop.f32.mrf.mxu0
      %v4027 = vadd.f32 0.0, %v4026
      %v4028 = vpop.f32.mrf.mxu0
      %v4029 = vadd.f32 0.0, %v4028
      %4030 = vmatmul.bf16.gmra.mxu0 %v3968
      %v4031 = vpop.f32.mrf.mxu0
      %v4032 = vadd.f32 0.0, %v4031
      %v4033 = vpop.f32.mrf.mxu0
      %v4034 = vadd.f32 0.0, %v4033
      %4035 = vmatmul.bf16.gmra.mxu0 %v3971
      %v4036 = vpop.f32.mrf.mxu0
      %v4037 = vadd.f32 0.0, %v4036
      %v4038 = vpop.f32.mrf.mxu0
      %v4039 = vadd.f32 0.0, %v4038
      %4040 = vmatmul.bf16.gmra.mxu0 %v3974
      %v4041 = vpop.f32.mrf.mxu0
      %v4042 = vadd.f32 0.0, %v4041
      %v4043 = vpop.f32.mrf.mxu0
      %v4044 = vadd.f32 0.0, %v4043
      %4045 = vmatmul.bf16.gmra.mxu0 %v3977
      %v4046 = vpop.f32.mrf.mxu0
      %v4047 = vadd.f32 0.0, %v4046
      %v4048 = vpop.f32.mrf.mxu0
      %v4049 = vadd.f32 0.0, %v4048
      %4050 = vmatmul.bf16.gmra.mxu0 %v3980
      %v4051 = vpop.f32.mrf.mxu0
      %v4052 = vadd.f32 0.0, %v4051
      %v4053 = vpop.f32.mrf.mxu0
      %v4054 = vadd.f32 0.0, %v4053
      %4055 = vmatmul.bf16.gmra.mxu0 %v3983
      %v4056 = vpop.f32.mrf.mxu0
      %v4057 = vadd.f32 0.0, %v4056
      %v4058 = vpop.f32.mrf.mxu0
      %v4059 = vadd.f32 0.0, %v4058
      %4060 = vmatmul.bf16.gmra.mxu0 %v3986
      %v4061 = vpop.f32.mrf.mxu0
      %v4062 = vadd.f32 0.0, %v4061
      %v4063 = vpop.f32.mrf.mxu0
      %v4064 = vadd.f32 0.0, %v4063
      %4065 = vmatmul.bf16.gmra.mxu0 %v3989
      %v4066 = vpop.f32.mrf.mxu0
      %v4067 = vadd.f32 0.0, %v4066
      %v4068 = vpop.f32.mrf.mxu0
      %v4069 = vadd.f32 0.0, %v4068
      %4070 = vmatmul.bf16.gmra.mxu0 %v3992
      %v4071 = vpop.f32.mrf.mxu0
      %v4072 = vadd.f32 0.0, %v4071
      %v4073 = vpop.f32.mrf.mxu0
      %v4074 = vadd.f32 0.0, %v4073
      %4075 = vmatmul.bf16.gmra.mxu0 %v3995
      %v4076 = vpop.f32.mrf.mxu0
      %v4077 = vadd.f32 0.0, %v4076
      %v4078 = vpop.f32.mrf.mxu0
      %v4079 = vadd.f32 0.0, %v4078
      %4080 = vmatmul.bf16.gmra.mxu0 %v3998
      %v4081 = vpop.f32.mrf.mxu0
      %v4082 = vadd.f32 0.0, %v4081
      %v4083 = vpop.f32.mrf.mxu0
      %v4084 = vadd.f32 0.0, %v4083
      %4085 = vmatmul.bf16.gmra.mxu0 %v4001
      %v4086 = vpop.f32.mrf.mxu0
      %v4087 = vadd.f32 0.0, %v4086
      %v4088 = vpop.f32.mrf.mxu0
      %v4089 = vadd.f32 0.0, %v4088
      %4090 = vmatmul.bf16.gmra.mxu0 %v4004
      %v4091 = vpop.f32.mrf.mxu0
      %v4092 = vadd.f32 0.0, %v4091
      %v4093 = vpop.f32.mrf.mxu0
      %v4094 = vadd.f32 0.0, %v4093
      %4095 = vmatmul.bf16.gmra.mxu0 %v4007
      %v4096 = vpop.f32.mrf.mxu0
      %v4097 = vadd.f32 0.0, %v4096
      %v4098 = vpop.f32.mrf.mxu0
      %v4099 = vadd.f32 0.0, %v4098
      %4100 = vdwg.mxu0
      %v4101 = vadd.f32 %v3703, %v4022
      %v4102 = vadd.f32 %v3704, %v4024
      %v4103 = vadd.f32 %v3705, %v4027
      %v4104 = vadd.f32 %v3706, %v4029
      %v4105 = vadd.f32 %v3707, %v4032
      %v4106 = vadd.f32 %v3708, %v4034
      %v4107 = vadd.f32 %v3709, %v4037
      %v4108 = vadd.f32 %v3710, %v4039
      %v4109 = vadd.f32 %v3711, %v4042
      %v4110 = vadd.f32 %v3712, %v4044
      %v4111 = vadd.f32 %v3713, %v4047
      %v4112 = vadd.f32 %v3714, %v4049
      %v4113 = vadd.f32 %v3715, %v4052
      %v4114 = vadd.f32 %v3716, %v4054
      %v4115 = vadd.f32 %v3717, %v4057
      %v4116 = vadd.f32 %v3718, %v4059
      %v4117 = vadd.f32 %v3719, %v4062
      %v4118 = vadd.f32 %v3720, %v4064
      %v4119 = vadd.f32 %v3721, %v4067
      %v4120 = vadd.f32 %v3722, %v4069
      %v4121 = vadd.f32 %v3723, %v4072
      %v4122 = vadd.f32 %v3724, %v4074
      %v4123 = vadd.f32 %v3725, %v4077
      %v4124 = vadd.f32 %v3726, %v4079
      %v4125 = vadd.f32 %v3727, %v4082
      %v4126 = vadd.f32 %v3728, %v4084
      %v4127 = vadd.f32 %v3729, %v4087
      %v4128 = vadd.f32 %v3730, %v4089
      %v4129 = vadd.f32 %v3731, %v4092
      %v4130 = vadd.f32 %v3732, %v4094
      %v4131 = vadd.f32 %v3733, %v4097
      %v4132 = vadd.f32 %v3734, %v4099
      %v4133 = vld [vmem:[%s2] sm:$0x1]
      %v4135 = vperm.slane %v4133, 0
      %v4137 = vadd.f32 %v4101, %v4135
      %v4138 = vadd.f32 %v4102, %v4135
      %v4139 = vadd.f32 %v4103, %v4135
      %v4140 = vadd.f32 %v4104, %v4135
      %v4141 = vadd.f32 %v4105, %v4135
      %v4142 = vadd.f32 %v4106, %v4135
      %v4143 = vadd.f32 %v4107, %v4135
      %v4144 = vadd.f32 %v4108, %v4135
      %v4145 = vadd.f32 %v4109, %v4135
      %v4146 = vadd.f32 %v4110, %v4135
      %v4147 = vadd.f32 %v4111, %v4135
      %v4148 = vadd.f32 %v4112, %v4135
      %v4149 = vadd.f32 %v4113, %v4135
      %v4150 = vadd.f32 %v4114, %v4135
      %v4151 = vadd.f32 %v4115, %v4135
      %v4152 = vadd.f32 %v4116, %v4135
      %v4153 = vadd.f32 %v4117, %v4135
      %v4154 = vadd.f32 %v4118, %v4135
      %v4155 = vadd.f32 %v4119, %v4135
      %v4156 = vadd.f32 %v4120, %v4135
      %v4157 = vadd.f32 %v4121, %v4135
      %v4158 = vadd.f32 %v4122, %v4135
      %v4159 = vadd.f32 %v4123, %v4135
      %v4160 = vadd.f32 %v4124, %v4135
      %v4161 = vadd.f32 %v4125, %v4135
      %v4162 = vadd.f32 %v4126, %v4135
      %v4163 = vadd.f32 %v4127, %v4135
      %v4164 = vadd.f32 %v4128, %v4135
      %v4165 = vadd.f32 %v4129, %v4135
      %v4166 = vadd.f32 %v4130, %v4135
      %v4167 = vadd.f32 %v4131, %v4135
      %v4168 = vadd.f32 %v4132, %v4135
      %v4169 = vmax.f32 %v4137, 0.0
      %v4170 = vmax.f32 %v4138, 0.0
      %v4171 = vmax.f32 %v4139, 0.0
      %v4172 = vmax.f32 %v4140, 0.0
      %v4173 = vmax.f32 %v4141, 0.0
      %v4174 = vmax.f32 %v4142, 0.0
      %v4175 = vmax.f32 %v4143, 0.0
      %v4176 = vmax.f32 %v4144, 0.0
      %v4177 = vmax.f32 %v4145, 0.0
      %v4178 = vmax.f32 %v4146, 0.0
      %v4179 = vmax.f32 %v4147, 0.0
      %v4180 = vmax.f32 %v4148, 0.0
      %v4181 = vmax.f32 %v4149, 0.0
      %v4182 = vmax.f32 %v4150, 0.0
      %v4183 = vmax.f32 %v4151, 0.0
      %v4184 = vmax.f32 %v4152, 0.0
      %v4185 = vmax.f32 %v4153, 0.0
      %v4186 = vmax.f32 %v4154, 0.0
      %v4187 = vmax.f32 %v4155, 0.0
      %v4188 = vmax.f32 %v4156, 0.0
      %v4189 = vmax.f32 %v4157, 0.0
      %v4190 = vmax.f32 %v4158, 0.0
      %v4191 = vmax.f32 %v4159, 0.0
      %v4192 = vmax.f32 %v4160, 0.0
      %v4193 = vmax.f32 %v4161, 0.0
      %v4194 = vmax.f32 %v4162, 0.0
      %v4195 = vmax.f32 %v4163, 0.0
      %v4196 = vmax.f32 %v4164, 0.0
      %v4197 = vmax.f32 %v4165, 0.0
      %v4198 = vmax.f32 %v4166, 0.0
      %v4199 = vmax.f32 %v4167, 0.0
      %v4200 = vmax.f32 %v4168, 0.0
      %v4201 = vadd.f32 %v4169, %v4170
      %v4202 = vadd.f32 %v4201, %v4171
      %v4203 = vadd.f32 %v4202, %v4172
      %v4204 = vadd.f32 %v4203, %v4173
      %v4205 = vadd.f32 %v4204, %v4174
      %v4206 = vadd.f32 %v4205, %v4175
      %v4207 = vadd.f32 %v4206, %v4176
      %v4208 = vadd.f32 %v4207, %v4177
      %v4209 = vadd.f32 %v4208, %v4178
      %v4210 = vadd.f32 %v4209, %v4179
      %v4211 = vadd.f32 %v4210, %v4180
      %v4212 = vadd.f32 %v4211, %v4181
      %v4213 = vadd.f32 %v4212, %v4182
      %v4214 = vadd.f32 %v4213, %v4183
      %v4215 = vadd.f32 %v4214, %v4184
      %v4216 = vadd.f32 %v4215, %v4185
      %v4217 = vadd.f32 %v4216, %v4186
      %v4218 = vadd.f32 %v4217, %v4187
      %v4219 = vadd.f32 %v4218, %v4188
      %v4220 = vadd.f32 %v4219, %v4189
      %v4221 = vadd.f32 %v4220, %v4190
      %v4222 = vadd.f32 %v4221, %v4191
      %v4223 = vadd.f32 %v4222, %v4192
      %v4224 = vadd.f32 %v4223, %v4193
      %v4225 = vadd.f32 %v4224, %v4194
      %v4226 = vadd.f32 %v4225, %v4195
      %v4227 = vadd.f32 %v4226, %v4196
      %v4228 = vadd.f32 %v4227, %v4197
      %v4229 = vadd.f32 %v4228, %v4198
      %v4230 = vadd.f32 %v4229, %v4199
      %v4231 = vadd.f32 %v4230, %v4200
      %v4232 = vrot.slane %v4231, 4
      %v4233 = vadd.f32 %v4231, %v4232
      %v4234 = vrot.slane %v4233, 2
      %v4235 = vadd.f32 %v4233, %v4234
      %v4236 = vrot.slane %v4235, 1
      %v4237 = vadd.f32 %v4235, %v4236
      %v4238 = vmul.f32 %v4237, 0.00390625
      %v4239 = vld [vmem:[%s3] sm:$0xff]
      %v4240 = vld [vmem:[%s3 + $0x8] sm:$0xff]
      %v4241 = vld [vmem:[%s3 + $0x10] sm:$0xff]
      %v4242 = vld [vmem:[%s3 + $0x18] sm:$0xff]
      %v4243 = vld [vmem:[%s3 + $0x20] sm:$0xff]
      %v4244 = vld [vmem:[%s3 + $0x28] sm:$0xff]
      %v4245 = vld [vmem:[%s3 + $0x30] sm:$0xff]
      %v4246 = vld [vmem:[%s3 + $0x38] sm:$0xff]
      %v4247 = vld [vmem:[%s3 + $0x40] sm:$0xff]
      %v4248 = vld [vmem:[%s3 + $0x48] sm:$0xff]
      %v4249 = vld [vmem:[%s3 + $0x50] sm:$0xff]
      %v4250 = vld [vmem:[%s3 + $0x58] sm:$0xff]
      %v4251 = vld [vmem:[%s3 + $0x60] sm:$0xff]
      %v4252 = vld [vmem:[%s3 + $0x68] sm:$0xff]
      %v4253 = vld [vmem:[%s3 + $0x70] sm:$0xff]
      %v4254 = vld [vmem:[%s3 + $0x78] sm:$0xff]
      %v4255 = vld [vmem:[%s4] sm:$0x1]
      %4256 = vmatpush.msra.mxu0 %v4254
      %4257 = vmatpush.msra.mxu0 %v4253
      %4258 = vmatpush.msra.mxu0 %v4252
      %4259 = vmatpush.msra.mxu0 %v4251
      %4260 = vmatpush.msra.mxu0 %v4250
      %4261 = vmatpush.msra.mxu0 %v4249
      %4262 = vmatpush.msra.mxu0 %v4248
      %4263 = vmatpush.msra.mxu0 %v4247
      %4264 = vmatpush.msra.mxu0 %v4246
      %4265 = vmatpush.msra.mxu0 %v4245
      %4266 = vmatpush.msra.mxu0 %v4244
      %4267 = vmatpush.msra.mxu0 %v4243
      %4268 = vmatpush.msra.mxu0 %v4242
      %4269 = vmatpush.msra.mxu0 %v4241
      %4270 = vmatpush.msra.mxu0 %v4240
      %4271 = vmatpush.msra.mxu0 %v4239
      %4272 = vmatmul.f32.gmra.mxu0 %v4238
      %v4273 = vpop.f32.mrf.mxu0
      %v4274 = vadd.f32 %v4255, %v4273
      %4275 = vdwg.mxu0
      %v4276 = vlaneseq
      %v4277 = vand.u32 %v4276, 127
      %v4278 = vxor.u32 %v4274, 2147483648
      %v4279 = vmul.f32 %v4278, 1.442695
      %v4280 = vpow.pop %v4279
      %v4281 = vadd.f32 %v4280, 1.0
      %v4282 = vrcp.pop %v4281
      %v4283 = vmul.f32 %v4281, %v4282
      %v4284 = vsub.f32 1.0, %v4283
      %v4285 = vmul.f32 %v4282, %v4284
      %v4286 = vadd.f32 %v4282, %v4285
      %vm4287 = vweird.f32 %v4281
      %vm4288 = vweird.f32 %v4282
      %vm4289 = vmor %vm4287, %vm4288
      %v4290 = vsel %vm4289, %v4282, %v4286
      %v4291 = vand.u32 2147483647, %v4281
      %vm4292 = vcmp.eq.f32.partialorder %v4291, 8.507059e+37
      %v4293 = vand.u32 %v4281, 2147483648
      %v4294 = vor.u32 1.1754944e-38, %v4293
      %v4295 = vsel %vm4292, %v4294, %v4290
      %v4296 = vmul.f32 1.0, %v4295
      %vm4297 = vcmp.ge.s32.totalorder %v4277, 6
      %vm4298 = vcmp.lt.s32.totalorder %v4277, 9
      %vm4299 = vmand %vm4297, %vm4298
      %v4300 = vsel %vm4299, %v4296, 0.0
      %vm4301 = vcmask 1040384
      %v4302 = vsel %vm4301, %v4300, 0.0
      %4303 = vadd.xlane.f32.xlu0 %v4302
      %v4304 = vpop.xlane.xlu0 %4303
      %v4305 = vmul.f32 %v4304, 0.33333334
      %vm4306 = vcmp.lt.s32.totalorder %v4277, 6
      %v4307 = vsel %vm4306, %v4274, 0.0
      %vm4308 = vcmp.eq.s32.totalorder %v4277, 6
      %v4309 = vsel %vm4308, %v4305, 0.0
      %v4310 = vadd.f32 %v4307, %v4309
      %4311 = vst [vmem:[%s220] sm:$0x1] %v4310
      %p4312 = scmp.lt.s32.totalorder %s16, 1
      %s4313 = scalar_select %p4312, %s16, 1
      %s4314 = scalar_lea.vmem %s5, %s4313
      // Predicated region
      $region41: #{ensemble_forward.1} parent=39 // pred_check
        %p4315 = pneg %p144
      $region42: #{ensemble_forward.1} parent=39 // pred_check_branch
        %4317 = sbr.rel (%p4315) target = $region44
      $region43: #{ensemble_forward.1} parent=39 // pred_region
        _
      $region44: #{ensemble_forward.1} parent=39 // pred_fallthru
        _
    $region40: #{ensemble_forward.1} parent=5 // pred_fallthru
      _
    %p4318 = scmp.le.s32.totalorder 2, %s11
    // Predicated region
    $region45: #{ensemble_forward.1} parent=5 // pred_check
      %p4319 = pneg %p4318
    $region46: #{ensemble_forward.1} parent=5 // pred_check_branch
      %4321 = sbr.rel (%p4319) target = $region48
    $region47: #{ensemble_forward.1} parent=5 // pred_region
      %s4322 = ssub.s32 %s11, 2
      // Predicated region
      $region49: #{ensemble_forward.1} parent=47 // pred_check
        %p4323 = pneg %p150
      $region50: #{ensemble_forward.1} parent=47 // pred_check_branch
        %4325 = sbr.rel (%p4323) target = $region52
      $region51: #{ensemble_forward.1} parent=47 // pred_region
        %p4326 = scmp.lt.s32.totalorder %s17, 1
        %s4327 = scalar_select %p4326, %s17, 1
        %s4328 = scalar_lea.vmem %s5, %s4327
      $region52: #{ensemble_forward.1} parent=47 // pred_fallthru
        _
    $region48: #{ensemble_forward.1} parent=5 // pred_fallthru
      _
  $region6: #{ensemble_forward.1} parent=0 // loop_footer
    %s15 = sadd.s32 1, %s11
  $region7: #{ensemble_forward.1} parent=0 // loop_footer_branch
    %10 = sbr.rel target = $region3
  $region8: #{ensemble_forward.1} parent=0 // loop_exit
    _

</llo_original>
